<compile_context>
chip_gen: v6e
topology: v6e:2x2x1
jax: 0.10.0
libtpu: 0.0.40
codegen_flags: <defaults>
</compile_context>

<pallas_src>
import jax
import jax.numpy as jnp
import numpy as np
from jax import lax
from jax.experimental import pallas as pl
from jax.experimental.pallas import tpu as pltpu

# ---- model hyperparameters (module defaults, small synthetic batch) ----
B, S = 2, 8                 # batch, sequence length
D = 128                     # embed_dim (module default)
H = 4                       # num_heads (module default)
HD = D // H                 # head dim = 32
FF = 2048                   # dim_feedforward (TransformerEncoderLayer default)
NUM_LAYERS = 3              # num_layers (module default)
V = 256                     # vocab_size (small, lane-aligned)
EPS = 1e-5                  # layer_norm_eps default
BS = B * S                  # 16 tokens total
HB = H * BS                 # 64 = rows of the head-expanded K/V

# all powers of two -> use shifts/bit-ands instead of vector int division
LOG2_S = S.bit_length() - 1     # 3
LOG2_BS = BS.bit_length() - 1   # 4
LOG2_HD = HD.bit_length() - 1   # 5


# ---------------------------------------------------------------------------
# Fused Pallas kernel: grid axis = layer index; fc_out on the last iteration.
# ---------------------------------------------------------------------------
def fused_transformer_kernel(ids_ref, emb_ref,
                             wqkv_ref, wo_ref, w1_ref, w2_ref,
                             smallp_ref, b1_ref,
                             wout_ref, bout_ref,
                             out_ref,
                             act_ref):
    l = pl.program_id(0)

    # ---- fused embedding gather (one-hot matmul) at the first grid step ----
    @pl.when(l == 0)
    def _():
        ids = ids_ref[...]                                        # (BS, 1) i32
        col = lax.broadcasted_iota(jnp.int32, (BS, V), 1)
        onehot = (col == ids).astype(jnp.float32)                 # (BS, V)
        act_ref[...] = jnp.dot(onehot, emb_ref[...],
                               preferred_element_type=jnp.float32)  # (BS, D)

    x = act_ref[...]                                              # (BS, D) f32
    xb = x.astype(jnp.bfloat16)
    small = smallp_ref[0]          # (9, D): bq,bk,bv,bo,ln1w,ln1b,b2,ln2w,ln2b

    # ---- fused QKV projection (bf16 weights/operands, f32 accumulation) ----
    qkv = jnp.dot(xb, wqkv_ref[0],
                  preferred_element_type=jnp.float32)             # (BS, 3D)
    q = qkv[:, 0 * D:1 * D] + small[0:1, :]                       # aligned slices
    k = qkv[:, 1 * D:2 * D] + small[1:2, :]
    v = qkv[:, 2 * D:3 * D] + small[2:3, :]

    # ---- single-pass multi-head self-attention ----
    # Head-expanded K/V: row r of kexp/vexp is a copy of K/V row (r mod BS),
    # masked so only head (r >> LOG2_BS)'s 32 columns survive.  Built with a
    # sublane concat + iota masks (cheap VPU/iota work, no lane reshapes).
    row_head = lax.broadcasted_iota(jnp.int32, (HB, D), 0) >> LOG2_BS   # r // BS
    col_head = lax.broadcasted_iota(jnp.int32, (HB, D), 1) >> LOG2_HD   # c // HD
    headmask = row_head == col_head                               # (HB, D) bool

    k_rep = jnp.concatenate([k] * H, axis=0)                      # (HB, D)
    v_rep = jnp.concatenate([v] * H, axis=0)
    kexp = jnp.where(headmask, k_rep, 0.0).astype(jnp.bfloat16)
    vexp = jnp.where(headmask, v_rep, 0.0).astype(jnp.bfloat16)

    # scores[i, h*BS + j] = <q_i(head h), k_j(head h)>  (one matmul, trans_b)
    scale = 1.0 / (HD ** 0.5)
    s = lax.dot_general(q.astype(jnp.bfloat16), kexp,
                        (((1,), (1,)), ((), ())),
                        preferred_element_type=jnp.float32) * scale      # (BS, HB)

    # mask out cross-batch (query batch != key batch) entries
    q_batch = lax.broadcasted_iota(jnp.int32, (BS, HB), 0) >> LOG2_S
    k_batch = (lax.broadcasted_iota(jnp.int32, (BS, HB), 1) & (BS - 1)) >> LOG2_S
    s = jnp.where(q_batch == k_batch, s, -1e30)

    # one softmax pass.  The global row max upper-bounds every head's segment
    # max; per-segment softmax is shift-invariant, so this is exact (and safe:
    # exponents <= 0, heads' score ranges are far from differing by ~88).
    m = jnp.max(s, axis=-1, keepdims=True)                        # (BS, 1)
    p = jnp.exp(s - m)                                            # masked -> 0.0

    # Per-(token, head) denominators, broadcast straight into the concatenated
    # head-column layout via a block-ones matmul (the head mask itself).
    denom = jnp.dot(p, headmask.astype(jnp.float32),
                    preferred_element_type=jnp.float32)           # (BS, D)
    o_un = jnp.dot(p.astype(jnp.bfloat16), vexp,
                   preferred_element_type=jnp.float32)            # (BS, D)
    attn = o_un * pl.reciprocal(denom, approx=True)               # normalized

    attn = jnp.dot(attn.astype(jnp.bfloat16), wo_ref[0],
                   preferred_element_type=jnp.float32) + small[3:4, :]

    # ---- residual + LayerNorm 1 (post-norm) ----
    h1 = x + attn
    mu = jnp.mean(h1, axis=-1, keepdims=True)
    var = jnp.mean((h1 - mu) ** 2, axis=-1, keepdims=True)
    h1 = (h1 - mu) * lax.rsqrt(var + EPS) * small[4:5, :] + small[5:6, :]

    # ---- feed-forward (relu), bf16 matmul operands, f32 elementwise ----
    f = jnp.dot(h1.astype(jnp.bfloat16), w1_ref[0],
                preferred_element_type=jnp.float32) + b1_ref[0]   # (BS, FF)
    f = jnp.maximum(f, 0.0)
    f = jnp.dot(f.astype(jnp.bfloat16), w2_ref[0],
                preferred_element_type=jnp.float32) + small[6:7, :]  # (BS, D)

    # ---- residual + LayerNorm 2 ----
    h2 = h1 + f
    mu2 = jnp.mean(h2, axis=-1, keepdims=True)
    var2 = jnp.mean((h2 - mu2) ** 2, axis=-1, keepdims=True)
    y = (h2 - mu2) * lax.rsqrt(var2 + EPS) * small[7:8, :] + small[8:9, :]

    act_ref[...] = y

    # ---- final vocabulary projection, only after the last layer ----
    @pl.when(l == NUM_LAYERS - 1)
    def _():
        out_ref[...] = jnp.dot(y.astype(jnp.bfloat16), wout_ref[...],
                               preferred_element_type=jnp.float32) + bout_ref[...]


# ---------------------------------------------------------------------------
# Wrapper
# ---------------------------------------------------------------------------
def forward(ids, params):
    ids_col = ids.reshape(BS, 1).astype(jnp.int32)

    grid_spec = pltpu.PrefetchScalarGridSpec(
        num_scalar_prefetch=0,
        grid=(NUM_LAYERS,),
        in_specs=[
            pl.BlockSpec((BS, 1), lambda l: (0, 0)),              # ids   (once)
            pl.BlockSpec((V, D), lambda l: (0, 0)),               # emb   (once)
            pl.BlockSpec((1, D, 3 * D), lambda l: (l, 0, 0)),     # wqkv  (bf16)
            pl.BlockSpec((1, D, D), lambda l: (l, 0, 0)),         # wo    (bf16)
            pl.BlockSpec((1, D, FF), lambda l: (l, 0, 0)),        # w1    (bf16)
            pl.BlockSpec((1, FF, D), lambda l: (l, 0, 0)),        # w2    (bf16)
            pl.BlockSpec((1, 9, D), lambda l: (l, 0, 0)),         # coalesced small params
            pl.BlockSpec((1, 1, FF), lambda l: (l, 0, 0)),        # b1
            pl.BlockSpec((D, V), lambda l: (0, 0)),               # wout  (once, bf16)
            pl.BlockSpec((1, V), lambda l: (0, 0)),               # bout  (once)
        ],
        out_specs=pl.BlockSpec((BS, V), lambda l: (0, 0)),
        scratch_shapes=[pltpu.VMEM((BS, D), jnp.float32)],        # activation carry
    )

    logits = pl.pallas_call(
        fused_transformer_kernel,
        out_shape=jax.ShapeDtypeStruct((BS, V), jnp.float32),
        grid_spec=grid_spec,
        compiler_params=pltpu.CompilerParams(
            dimension_semantics=("arbitrary",),   # layer axis carries a dependency
            vmem_limit_bytes=32 * 1024 * 1024,    # footprint ~2.6 MB; ample headroom
        ),
    )(ids_col, params["emb"],
      params["wqkv"], params["wo"], params["w1"], params["w2"],
      params["smallp"], params["b1"], params["wout"], params["bout"])
    return logits.reshape(B, S, V)


# ---------------------------------------------------------------------------
# Pure-JAX reference (f32 math, bf16 weights upcast) for correctness.
# ---------------------------------------------------------------------------
def _layernorm(x, w, b):
    mu = jnp.mean(x, axis=-1, keepdims=True)
    var = jnp.mean((x - mu) ** 2, axis=-1, keepdims=True)
    return (x - mu) / jnp.sqrt(var + EPS) * w + b


def forward_ref(ids, params):
    x = params["emb"][ids.reshape(-1)]                            # (BS, D) f32
    for l in range(NUM_LAYERS):
        Wqkv = params["wqkv"][l].astype(jnp.float32)
        Wo = params["wo"][l].astype(jnp.float32)
        W1 = params["w1"][l].astype(jnp.float32)
        W2 = params["w2"][l].astype(jnp.float32)
        sp = params["smallp"][l]
        bq, bk, bv, bo = sp[0], sp[1], sp[2], sp[3]
        ln1w, ln1b, b2, ln2w, ln2b = sp[4], sp[5], sp[6], sp[7], sp[8]
        b1 = params["b1"][l][0]

        qkv = x @ Wqkv
        q = qkv[:, :D] + bq
        k = qkv[:, D:2 * D] + bk
        v = qkv[:, 2 * D:] + bv
        outs = []
        for b in range(B):
            rows = slice(b * S, (b + 1) * S)
            heads = []
            for h in range(H):
                cols = slice(h * HD, (h + 1) * HD)
                s = (q[rows, cols] @ k[rows, cols].T) / np.sqrt(HD)
                a = jax.nn.softmax(s, axis=-1)
                heads.append(a @ v[rows, cols])
            outs.append(jnp.concatenate(heads, axis=-1))
        attn = jnp.concatenate(outs, axis=0) @ Wo + bo
        h1 = _layernorm(x + attn, ln1w, ln1b)
        f = jax.nn.relu(h1 @ W1 + b1) @ W2 + b2
        x = _layernorm(h1 + f, ln2w, ln2b)
    logits = x @ params["wout"].astype(jnp.float32) + params["bout"][0]
    return logits.reshape(B, S, V)


# ---------------------------------------------------------------------------
# Deterministic parameter initialization.
# Weight matrices stored pre-transposed (x @ W layout); large matrices bf16.
# ---------------------------------------------------------------------------
def init_model(key):
    keys = iter(jax.random.split(key, 8 * NUM_LAYERS + 8))

    def nrm(shape, scale=0.02):
        return (scale * jax.random.normal(next(keys), shape)).astype(jnp.float32)

    emb = nrm((V, D), scale=1.0)
    emb = emb.at[0].set(0.0)                     # padding_idx=0 row is zero

    wqkv_l, wo_l, w1_l, w2_l, small_l, b1_l = [], [], [], [], [], []
    for _ in range(NUM_LAYERS):
        wqkv_l.append(nrm((D, 3 * D)))           # in_proj weight (transposed)
        wo_l.append(nrm((D, D)))                 # out_proj weight (transposed)
        w1_l.append(nrm((D, FF)))                # linear1 weight (transposed)
        w2_l.append(nrm((FF, D)))                # linear2 weight (transposed)
        bqkv = nrm((3, D))                       # rows: bq, bk, bv
        bo = nrm((1, D))
        b2 = nrm((1, D))
        ln1w = jnp.ones((1, D), jnp.float32)
        ln1b = jnp.zeros((1, D), jnp.float32)
        ln2w = jnp.ones((1, D), jnp.float32)
        ln2b = jnp.zeros((1, D), jnp.float32)
        # coalesced small params: [bq, bk, bv, bo, ln1w, ln1b, b2, ln2w, ln2b]
        small_l.append(jnp.concatenate([bqkv, bo, ln1w, ln1b, b2, ln2w, ln2b],
                                       axis=0))  # (9, D)
        b1_l.append(nrm((1, FF)))

    params = {
        "emb": emb,                                            # (V, D) f32
        "wqkv": jnp.stack(wqkv_l).astype(jnp.bfloat16),        # (L, D, 3D)
        "wo": jnp.stack(wo_l).astype(jnp.bfloat16),            # (L, D, D)
        "w1": jnp.stack(w1_l).astype(jnp.bfloat16),            # (L, D, FF)
        "w2": jnp.stack(w2_l).astype(jnp.bfloat16),            # (L, FF, D)
        "smallp": jnp.stack(small_l),                          # (L, 9, D) f32
        "b1": jnp.stack(b1_l),                                 # (L, 1, FF) f32
        "wout": nrm((D, V)).astype(jnp.bfloat16),              # (D, V)
        "bout": nrm((1, V)),                                   # (1, V) f32
    }
    return params


if __name__ == "__main__":
    key = jax.random.PRNGKey(0)
    k_ids, k_params = jax.random.split(key)

    ids = jax.random.randint(k_ids, (B, S), 0, V, dtype=jnp.int32)
    ids = ids.at[:, -1].set(0)                   # exercise the padding token

    params = init_model(k_params)

    out = forward(ids, params)
    out = jax.block_until_ready(out)

    ref = forward_ref(ids, params)
    # Tolerance is deliberately loose: kernel matmuls consume bf16 operands
    # and the softmax denominator uses the approximate EUP reciprocal.
    np.testing.assert_allclose(np.asarray(out), np.asarray(ref),
                               rtol=2e-2, atol=2e-2)
    assert out.shape == (B, S, V)
    assert bool(jnp.all(jnp.isfinite(out)))
    print("KERNEL_OK")
</pallas_src>

<mosaic_0001>
module attributes {stable_mosaic.version = 11 : i64} {
  func.func @fused_transformer_kernel(%arg0: i32, %arg1: memref<16x1xi32, #tpu.memory_space<vmem>>, %arg2: memref<256x128xf32, #tpu.memory_space<vmem>>, %arg3: memref<1x128x384xbf16, #tpu.memory_space<vmem>>, %arg4: memref<1x128x128xbf16, #tpu.memory_space<vmem>>, %arg5: memref<1x128x2048xbf16, #tpu.memory_space<vmem>>, %arg6: memref<1x2048x128xbf16, #tpu.memory_space<vmem>>, %arg7: memref<1x9x128xf32, #tpu.memory_space<vmem>>, %arg8: memref<1x1x2048xf32, #tpu.memory_space<vmem>>, %arg9: memref<128x256xbf16, #tpu.memory_space<vmem>>, %arg10: memref<1x256xf32, #tpu.memory_space<vmem>>, %arg11: memref<16x256xf32, #tpu.memory_space<vmem>>, %arg12: memref<16x128xf32, #tpu.memory_space<vmem>>) attributes {dimension_semantics = [#tpu.dimension_semantics<arbitrary>], iteration_bounds = array<i64: 3>, scalar_prefetch = 0 : i64, scratch_operands = 1 : i64, tpu.core_type = #tpu.core_type<tc>, window_params = [{pipeline_mode = #tpu.pipeline_mode<synchronous>, transform_indices = @transform_0, window_bounds = array<i64: 16, 1>}, {pipeline_mode = #tpu.pipeline_mode<synchronous>, transform_indices = @transform_1, window_bounds = array<i64: 256, 128>}, {transform_indices = @transform_2, window_bounds = array<i64: 1, 128, 384>}, {transform_indices = @transform_3, window_bounds = array<i64: 1, 128, 128>}, {transform_indices = @transform_4, window_bounds = array<i64: 1, 128, 2048>}, {transform_indices = @transform_5, window_bounds = array<i64: 1, 2048, 128>}, {transform_indices = @transform_6, window_bounds = array<i64: 1, 9, 128>}, {transform_indices = @transform_7, window_bounds = array<i64: 1, 1, 2048>}, {pipeline_mode = #tpu.pipeline_mode<synchronous>, transform_indices = @transform_8, window_bounds = array<i64: 128, 256>}, {pipeline_mode = #tpu.pipeline_mode<synchronous>, transform_indices = @transform_9, window_bounds = array<i64: 1, 256>}, {pipeline_mode = #tpu.pipeline_mode<synchronous>, transform_indices = @transform_10, window_bounds = array<i64: 16, 256>}]} {
    %c0_i32 = arith.constant 0 : i32
    %0 = arith.cmpi eq, %arg0, %c0_i32 : i32
    %1 = arith.extui %0 : i1 to i32
    %c0_i32_0 = arith.constant 0 : i32
    %2 = arith.cmpi ne, %1, %c0_i32_0 : i32
    scf.if %2 {
      %c0_46 = arith.constant 0 : index
      %c0_47 = arith.constant 0 : index
      %142 = vector.load %arg1[%c0_46, %c0_47] : memref<16x1xi32, #tpu.memory_space<vmem>>, vector<16x1xi32>
      %143 = tpu.iota {dimensions = array<i32: 1>} : vector<16x256xi32>
      %144 = vector.broadcast %142 : vector<16x1xi32> to vector<16x256xi32>
      %145 = arith.cmpi eq, %143, %144 : vector<16x256xi32>
      %146 = arith.extui %145 : vector<16x256xi1> to vector<16x256xi32>
      %147 = arith.sitofp %146 : vector<16x256xi32> to vector<16x256xf32>
      %c0_48 = arith.constant 0 : index
      %c0_49 = arith.constant 0 : index
      %148 = vector.load %arg2[%c0_48, %c0_49] : memref<256x128xf32, #tpu.memory_space<vmem>>, vector<256x128xf32>
      %cst_50 = arith.constant dense<0.000000e+00> : vector<16x128xf32>
      %149 = tpu.matmul %147, %148, %cst_50 {dimension_numbers = #tpu.dot_dimension_numbers<[1], [0], [0], [1], [0, 0, 1, 1], [], []>} : vector<16x256xf32>, vector<256x128xf32>, vector<16x128xf32> -> vector<16x128xf32>
      %c0_51 = arith.constant 0 : index
      %c0_52 = arith.constant 0 : index
      %150 = vector.load %arg12[%c0_51, %c0_52] : memref<16x128xf32, #tpu.memory_space<vmem>>, vector<16x128xf32>
      tpu.vector_store %arg12[%c0_51, %c0_52], %149 {strides = array<i32>} : memref<16x128xf32, #tpu.memory_space<vmem>>, vector<16x128xf32>,
    } else {
    }
    %c0 = arith.constant 0 : index
    %c0_1 = arith.constant 0 : index
    %3 = vector.load %arg12[%c0, %c0_1] : memref<16x128xf32, #tpu.memory_space<vmem>>, vector<16x128xf32>
    %4 = arith.truncf %3 : vector<16x128xf32> to vector<16x128xbf16>
    %c0_2 = arith.constant 0 : index
    %c0_3 = arith.constant 0 : index
    %c0_4 = arith.constant 0 : index
    %5 = vector.load %arg7[%c0_2, %c0_3, %c0_4] : memref<1x9x128xf32, #tpu.memory_space<vmem>>, vector<1x9x128xf32>
    %6 = vector.shape_cast %5 : vector<1x9x128xf32> to vector<9x128xf32>
    %c0_5 = arith.constant 0 : index
    %c0_6 = arith.constant 0 : index
    %c0_7 = arith.constant 0 : index
    %7 = vector.load %arg3[%c0_5, %c0_6, %c0_7] : memref<1x128x384xbf16, #tpu.memory_space<vmem>>, vector<1x128x384xbf16>
    %8 = vector.shape_cast %7 : vector<1x128x384xbf16> to vector<128x384xbf16>
    %cst = arith.constant dense<0.000000e+00> : vector<16x384xf32>
    %9 = tpu.matmul %4, %8, %cst {dimension_numbers = #tpu.dot_dimension_numbers<[1], [0], [0], [1], [0, 0, 1, 1], [], []>} : vector<16x128xbf16>, vector<128x384xbf16>, vector<16x384xf32> -> vector<16x384xf32>
    %10 = vector.extract_strided_slice %9 {offsets = [0, 0], sizes = [16, 128], strides = [1, 1]} : vector<16x384xf32> to vector<16x128xf32>
    %11 = vector.extract_strided_slice %6 {offsets = [0, 0], sizes = [1, 128], strides = [1, 1]} : vector<9x128xf32> to vector<1x128xf32>
    %12 = vector.broadcast %11 : vector<1x128xf32> to vector<16x128xf32>
    %13 = arith.addf %10, %12 : vector<16x128xf32>
    %14 = vector.extract_strided_slice %9 {offsets = [0, 128], sizes = [16, 128], strides = [1, 1]} : vector<16x384xf32> to vector<16x128xf32>
    %15 = vector.extract_strided_slice %6 {offsets = [1, 0], sizes = [1, 128], strides = [1, 1]} : vector<9x128xf32> to vector<1x128xf32>
    %16 = vector.broadcast %15 : vector<1x128xf32> to vector<16x128xf32>
    %17 = arith.addf %14, %16 : vector<16x128xf32>
    %18 = vector.extract_strided_slice %9 {offsets = [0, 256], sizes = [16, 128], strides = [1, 1]} : vector<16x384xf32> to vector<16x128xf32>
    %19 = vector.extract_strided_slice %6 {offsets = [2, 0], sizes = [1, 128], strides = [1, 1]} : vector<9x128xf32> to vector<1x128xf32>
    %20 = vector.broadcast %19 : vector<1x128xf32> to vector<16x128xf32>
    %21 = arith.addf %18, %20 : vector<16x128xf32>
    %22 = tpu.iota {dimensions = array<i32: 0>} : vector<64x128xi32>
    %c4_i32 = arith.constant 4 : i32
    %23 = vector.broadcast %c4_i32 : i32 to vector<64x128xi32>
    %24 = arith.shrsi %22, %23 : vector<64x128xi32>
    %25 = tpu.iota {dimensions = array<i32: 1>} : vector<64x128xi32>
    %c5_i32 = arith.constant 5 : i32
    %26 = vector.broadcast %c5_i32 : i32 to vector<64x128xi32>
    %27 = arith.shrsi %25, %26 : vector<64x128xi32>
    %28 = arith.cmpi eq, %24, %27 : vector<64x128xi32>
    %29 = tpu.concatenate %17, %17, %17, %17 in 0 : vector<16x128xf32>, vector<16x128xf32>, vector<16x128xf32>, vector<16x128xf32> -> vector<64x128xf32>
    %30 = tpu.concatenate %21, %21, %21, %21 in 0 : vector<16x128xf32>, vector<16x128xf32>, vector<16x128xf32>, vector<16x128xf32> -> vector<64x128xf32>
    %cst_8 = arith.constant 0.000000e+00 : f32
    %31 = vector.broadcast %cst_8 : f32 to vector<64x128xf32>
    %32 = arith.select %28, %29, %31 : vector<64x128xi1>, vector<64x128xf32>
    %33 = arith.truncf %32 : vector<64x128xf32> to vector<64x128xbf16>
    %cst_9 = arith.constant 0.000000e+00 : f32
    %34 = vector.broadcast %cst_9 : f32 to vector<64x128xf32>
    %35 = arith.select %28, %30, %34 : vector<64x128xi1>, vector<64x128xf32>
    %36 = arith.truncf %35 : vector<64x128xf32> to vector<64x128xbf16>
    %37 = arith.truncf %13 : vector<16x128xf32> to vector<16x128xbf16>
    %cst_10 = arith.constant dense<0.000000e+00> : vector<16x64xf32>
    %38 = tpu.matmul %37, %33, %cst_10 {dimension_numbers = #tpu.dot_dimension_numbers<[1], [1], [0], [0], [0, 0, 1, 0], [], []>} : vector<16x128xbf16>, vector<64x128xbf16>, vector<16x64xf32> -> vector<16x64xf32>
    %cst_11 = arith.constant 0.176776692 : f32
    %39 = vector.broadcast %cst_11 : f32 to vector<16x64xf32>
    %40 = arith.mulf %38, %39 : vector<16x64xf32>
    %41 = tpu.iota {dimensions = array<i32: 0>} : vector<16x64xi32>
    %c3_i32 = arith.constant 3 : i32
    %42 = vector.broadcast %c3_i32 : i32 to vector<16x64xi32>
    %43 = arith.shrsi %41, %42 : vector<16x64xi32>
    %44 = tpu.iota {dimensions = array<i32: 1>} : vector<16x64xi32>
    %c15_i32 = arith.constant 15 : i32
    %45 = vector.broadcast %c15_i32 : i32 to vector<16x64xi32>
    %46 = arith.andi %44, %45 : vector<16x64xi32>
    %c3_i32_12 = arith.constant 3 : i32
    %47 = vector.broadcast %c3_i32_12 : i32 to vector<16x64xi32>
    %48 = arith.shrsi %46, %47 : vector<16x64xi32>
    %49 = arith.cmpi eq, %43, %48 : vector<16x64xi32>
    %cst_13 = arith.constant -1.000000e+30 : f32
    %50 = vector.broadcast %cst_13 : f32 to vector<16x64xf32>
    %51 = arith.select %49, %40, %50 : vector<16x64xi1>, vector<16x64xf32>
    %cst_14 = arith.constant dense<0xFF800000> : vector<16xf32>
    %52 = vector.multi_reduction <maximumf>, %51, %cst_14 [1] : vector<16x64xf32> to vector<16xf32>
    %53 = vector.shape_cast %52 : vector<16xf32> to vector<16x1xf32>
    %54 = vector.broadcast %53 : vector<16x1xf32> to vector<16x64xf32>
    %55 = arith.subf %51, %54 : vector<16x64xf32>
    %56 = math.exp %55 : vector<16x64xf32>
    %57 = arith.extui %28 : vector<64x128xi1> to vector<64x128xi32>
    %58 = arith.sitofp %57 : vector<64x128xi32> to vector<64x128xf32>
    %cst_15 = arith.constant dense<0.000000e+00> : vector<16x128xf32>
    %59 = tpu.matmul %56, %58, %cst_15 {dimension_numbers = #tpu.dot_dimension_numbers<[1], [0], [0], [1], [0, 0, 1, 1], [], []>} : vector<16x64xf32>, vector<64x128xf32>, vector<16x128xf32> -> vector<16x128xf32>
    %60 = arith.truncf %56 : vector<16x64xf32> to vector<16x64xbf16>
    %cst_16 = arith.constant dense<0.000000e+00> : vector<16x128xf32>
    %61 = tpu.matmul %60, %36, %cst_16 {dimension_numbers = #tpu.dot_dimension_numbers<[1], [0], [0], [1], [0, 0, 1, 1], [], []>} : vector<16x64xbf16>, vector<64x128xbf16>, vector<16x128xf32> -> vector<16x128xf32>
    %62 = tpu.reciprocal %59 {approx = true} : vector<16x128xf32> -> vector<16x128xf32>
    %63 = arith.mulf %61, %62 : vector<16x128xf32>
    %64 = arith.truncf %63 : vector<16x128xf32> to vector<16x128xbf16>
    %c0_17 = arith.constant 0 : index
    %c0_18 = arith.constant 0 : index
    %c0_19 = arith.constant 0 : index
    %65 = vector.load %arg4[%c0_17, %c0_18, %c0_19] : memref<1x128x128xbf16, #tpu.memory_space<vmem>>, vector<1x128x128xbf16>
    %66 = vector.shape_cast %65 : vector<1x128x128xbf16> to vector<128x128xbf16>
    %cst_20 = arith.constant dense<0.000000e+00> : vector<16x128xf32>
    %67 = tpu.matmul %64, %66, %cst_20 {dimension_numbers = #tpu.dot_dimension_numbers<[1], [0], [0], [1], [0, 0, 1, 1], [], []>} : vector<16x128xbf16>, vector<128x128xbf16>, vector<16x128xf32> -> vector<16x128xf32>
    %68 = vector.extract_strided_slice %6 {offsets = [3, 0], sizes = [1, 128], strides = [1, 1]} : vector<9x128xf32> to vector<1x128xf32>
    %69 = vector.broadcast %68 : vector<1x128xf32> to vector<16x128xf32>
    %70 = arith.addf %67, %69 : vector<16x128xf32>
    %71 = arith.addf %3, %70 : vector<16x128xf32>
    %cst_21 = arith.constant dense<0.000000e+00> : vector<16xf32>
    %72 = vector.multi_reduction <add>, %71, %cst_21 [1] : vector<16x128xf32> to vector<16xf32>
    %73 = vector.shape_cast %72 : vector<16xf32> to vector<16x1xf32>
    %cst_22 = arith.constant 1.280000e+02 : f32
    %74 = vector.broadcast %cst_22 : f32 to vector<16x1xf32>
    %75 = arith.divf %73, %74 : vector<16x1xf32>
    %76 = vector.broadcast %75 : vector<16x1xf32> to vector<16x128xf32>
    %77 = arith.subf %71, %76 : vector<16x128xf32>
    %78 = arith.mulf %77, %77 : vector<16x128xf32>
    %cst_23 = arith.constant dense<0.000000e+00> : vector<16xf32>
    %79 = vector.multi_reduction <add>, %78, %cst_23 [1] : vector<16x128xf32> to vector<16xf32>
    %80 = vector.shape_cast %79 : vector<16xf32> to vector<16x1xf32>
    %cst_24 = arith.constant 1.280000e+02 : f32
    %81 = vector.broadcast %cst_24 : f32 to vector<16x1xf32>
    %82 = arith.divf %80, %81 : vector<16x1xf32>
    %83 = vector.broadcast %75 : vector<16x1xf32> to vector<16x128xf32>
    %84 = arith.subf %71, %83 : vector<16x128xf32>
    %cst_25 = arith.constant 9.99999974E-6 : f32
    %85 = vector.broadcast %cst_25 : f32 to vector<16x1xf32>
    %86 = arith.addf %82, %85 : vector<16x1xf32>
    %87 = math.rsqrt %86 : vector<16x1xf32>
    %88 = vector.broadcast %87 : vector<16x1xf32> to vector<16x128xf32>
    %89 = arith.mulf %84, %88 : vector<16x128xf32>
    %90 = vector.extract_strided_slice %6 {offsets = [4, 0], sizes = [1, 128], strides = [1, 1]} : vector<9x128xf32> to vector<1x128xf32>
    %91 = vector.broadcast %90 : vector<1x128xf32> to vector<16x128xf32>
    %92 = arith.mulf %89, %91 : vector<16x128xf32>
    %93 = vector.extract_strided_slice %6 {offsets = [5, 0], sizes = [1, 128], strides = [1, 1]} : vector<9x128xf32> to vector<1x128xf32>
    %94 = vector.broadcast %93 : vector<1x128xf32> to vector<16x128xf32>
    %95 = arith.addf %92, %94 : vector<16x128xf32>
    %96 = arith.truncf %95 : vector<16x128xf32> to vector<16x128xbf16>
    %c0_26 = arith.constant 0 : index
    %c0_27 = arith.constant 0 : index
    %c0_28 = arith.constant 0 : index
    %97 = vector.load %arg5[%c0_26, %c0_27, %c0_28] : memref<1x128x2048xbf16, #tpu.memory_space<vmem>>, vector<1x128x2048xbf16>
    %98 = vector.shape_cast %97 : vector<1x128x2048xbf16> to vector<128x2048xbf16>
    %cst_29 = arith.constant dense<0.000000e+00> : vector<16x2048xf32>
    %99 = tpu.matmul %96, %98, %cst_29 {dimension_numbers = #tpu.dot_dimension_numbers<[1], [0], [0], [1], [0, 0, 1, 1], [], []>} : vector<16x128xbf16>, vector<128x2048xbf16>, vector<16x2048xf32> -> vector<16x2048xf32>
    %c0_30 = arith.constant 0 : index
    %c0_31 = arith.constant 0 : index
    %c0_32 = arith.constant 0 : index
    %100 = vector.load %arg8[%c0_30, %c0_31, %c0_32] : memref<1x1x2048xf32, #tpu.memory_space<vmem>>, vector<1x1x2048xf32>
    %101 = vector.shape_cast %100 : vector<1x1x2048xf32> to vector<1x2048xf32>
    %102 = vector.broadcast %101 : vector<1x2048xf32> to vector<16x2048xf32>
    %103 = arith.addf %99, %102 : vector<16x2048xf32>
    %cst_33 = arith.constant 0.000000e+00 : f32
    %104 = vector.broadcast %cst_33 : f32 to vector<16x2048xf32>
    %105 = arith.maximumf %103, %104 : vector<16x2048xf32>
    %106 = arith.truncf %105 : vector<16x2048xf32> to vector<16x2048xbf16>
    %c0_34 = arith.constant 0 : index
    %c0_35 = arith.constant 0 : index
    %c0_36 = arith.constant 0 : index
    %107 = vector.load %arg6[%c0_34, %c0_35, %c0_36] : memref<1x2048x128xbf16, #tpu.memory_space<vmem>>, vector<1x2048x128xbf16>
    %108 = vector.shape_cast %107 : vector<1x2048x128xbf16> to vector<2048x128xbf16>
    %cst_37 = arith.constant dense<0.000000e+00> : vector<16x128xf32>
    %109 = tpu.matmul %106, %108, %cst_37 {dimension_numbers = #tpu.dot_dimension_numbers<[1], [0], [0], [1], [0, 0, 1, 1], [], []>} : vector<16x2048xbf16>, vector<2048x128xbf16>, vector<16x128xf32> -> vector<16x128xf32>
    %110 = vector.extract_strided_slice %6 {offsets = [6, 0], sizes = [1, 128], strides = [1, 1]} : vector<9x128xf32> to vector<1x128xf32>
    %111 = vector.broadcast %110 : vector<1x128xf32> to vector<16x128xf32>
    %112 = arith.addf %109, %111 : vector<16x128xf32>
    %113 = arith.addf %95, %112 : vector<16x128xf32>
    %cst_38 = arith.constant dense<0.000000e+00> : vector<16xf32>
    %114 = vector.multi_reduction <add>, %113, %cst_38 [1] : vector<16x128xf32> to vector<16xf32>
    %115 = vector.shape_cast %114 : vector<16xf32> to vector<16x1xf32>
    %cst_39 = arith.constant 1.280000e+02 : f32
    %116 = vector.broadcast %cst_39 : f32 to vector<16x1xf32>
    %117 = arith.divf %115, %116 : vector<16x1xf32>
    %118 = vector.broadcast %117 : vector<16x1xf32> to vector<16x128xf32>
    %119 = arith.subf %113, %118 : vector<16x128xf32>
    %120 = arith.mulf %119, %119 : vector<16x128xf32>
    %cst_40 = arith.constant dense<0.000000e+00> : vector<16xf32>
    %121 = vector.multi_reduction <add>, %120, %cst_40 [1] : vector<16x128xf32> to vector<16xf32>
    %122 = vector.shape_cast %121 : vector<16xf32> to vector<16x1xf32>
    %cst_41 = arith.constant 1.280000e+02 : f32
    %123 = vector.broadcast %cst_41 : f32 to vector<16x1xf32>
    %124 = arith.divf %122, %123 : vector<16x1xf32>
    %125 = vector.broadcast %117 : vector<16x1xf32> to vector<16x128xf32>
    %126 = arith.subf %113, %125 : vector<16x128xf32>
    %cst_42 = arith.constant 9.99999974E-6 : f32
    %127 = vector.broadcast %cst_42 : f32 to vector<16x1xf32>
    %128 = arith.addf %124, %127 : vector<16x1xf32>
    %129 = math.rsqrt %128 : vector<16x1xf32>
    %130 = vector.broadcast %129 : vector<16x1xf32> to vector<16x128xf32>
    %131 = arith.mulf %126, %130 : vector<16x128xf32>
    %132 = vector.extract_strided_slice %6 {offsets = [7, 0], sizes = [1, 128], strides = [1, 1]} : vector<9x128xf32> to vector<1x128xf32>
    %133 = vector.broadcast %132 : vector<1x128xf32> to vector<16x128xf32>
    %134 = arith.mulf %131, %133 : vector<16x128xf32>
    %135 = vector.extract_strided_slice %6 {offsets = [8, 0], sizes = [1, 128], strides = [1, 1]} : vector<9x128xf32> to vector<1x128xf32>
    %136 = vector.broadcast %135 : vector<1x128xf32> to vector<16x128xf32>
    %137 = arith.addf %134, %136 : vector<16x128xf32>
    %c0_43 = arith.constant 0 : index
    %c0_44 = arith.constant 0 : index
    %138 = vector.load %arg12[%c0_43, %c0_44] : memref<16x128xf32, #tpu.memory_space<vmem>>, vector<16x128xf32>
    tpu.vector_store %arg12[%c0_43, %c0_44], %137 {strides = array<i32>} : memref<16x128xf32, #tpu.memory_space<vmem>>, vector<16x128xf32>,
    %c2_i32 = arith.constant 2 : i32
    %139 = arith.cmpi eq, %arg0, %c2_i32 : i32
    %140 = arith.extui %139 : i1 to i32
    %c0_i32_45 = arith.constant 0 : i32
    %141 = arith.cmpi ne, %140, %c0_i32_45 : i32
    scf.if %141 {
      %142 = arith.truncf %137 : vector<16x128xf32> to vector<16x128xbf16>
      %c0_46 = arith.constant 0 : index
      %c0_47 = arith.constant 0 : index
      %143 = vector.load %arg9[%c0_46, %c0_47] : memref<128x256xbf16, #tpu.memory_space<vmem>>, vector<128x256xbf16>
      %cst_48 = arith.constant dense<0.000000e+00> : vector<16x256xf32>
      %144 = tpu.matmul %142, %143, %cst_48 {dimension_numbers = #tpu.dot_dimension_numbers<[1], [0], [0], [1], [0, 0, 1, 1], [], []>} : vector<16x128xbf16>, vector<128x256xbf16>, vector<16x256xf32> -> vector<16x256xf32>
      %c0_49 = arith.constant 0 : index
      %c0_50 = arith.constant 0 : index
      %145 = vector.load %arg10[%c0_49, %c0_50] : memref<1x256xf32, #tpu.memory_space<vmem>>, vector<1x256xf32>
      %146 = vector.broadcast %145 : vector<1x256xf32> to vector<16x256xf32>
      %147 = arith.addf %144, %146 : vector<16x256xf32>
      %c0_51 = arith.constant 0 : index
      %c0_52 = arith.constant 0 : index
      %148 = vector.load %arg11[%c0_51, %c0_52] : memref<16x256xf32, #tpu.memory_space<vmem>>, vector<16x256xf32>
      tpu.vector_store %arg11[%c0_51, %c0_52], %147 {strides = array<i32>} : memref<16x256xf32, #tpu.memory_space<vmem>>, vector<16x256xf32>,
    } else {
    }
    return
  }
  func.func @transform_0(%arg0: i32) -> (i32, i32) {
    %c0_i32 = arith.constant 0 : i32
    %c0_i32_0 = arith.constant 0 : i32
    %c0_i32_1 = arith.constant 0 : i32
    return %c0_i32, %c0_i32_0 : i32, i32
  }
  func.func @transform_1(%arg0: i32) -> (i32, i32) {
    %c0_i32 = arith.constant 0 : i32
    %c0_i32_0 = arith.constant 0 : i32
    %c0_i32_1 = arith.constant 0 : i32
    return %c0_i32, %c0_i32_0 : i32, i32
  }
  func.func @transform_2(%arg0: i32) -> (i32, i32, i32) {
    %c0_i32 = arith.constant 0 : i32
    %c0_i32_0 = arith.constant 0 : i32
    %c0_i32_1 = arith.constant 0 : i32
    return %arg0, %c0_i32, %c0_i32_0 : i32, i32, i32
  }
  func.func @transform_3(%arg0: i32) -> (i32, i32, i32) {
    %c0_i32 = arith.constant 0 : i32
    %c0_i32_0 = arith.constant 0 : i32
    %c0_i32_1 = arith.constant 0 : i32
    return %arg0, %c0_i32, %c0_i32_0 : i32, i32, i32
  }
  func.func @transform_4(%arg0: i32) -> (i32, i32, i32) {
    %c0_i32 = arith.constant 0 : i32
    %c0_i32_0 = arith.constant 0 : i32
    %c0_i32_1 = arith.constant 0 : i32
    return %arg0, %c0_i32, %c0_i32_0 : i32, i32, i32
  }
  func.func @transform_5(%arg0: i32) -> (i32, i32, i32) {
    %c0_i32 = arith.constant 0 : i32
    %c0_i32_0 = arith.constant 0 : i32
    %c0_i32_1 = arith.constant 0 : i32
    return %arg0, %c0_i32, %c0_i32_0 : i32, i32, i32
  }
  func.func @transform_6(%arg0: i32) -> (i32, i32, i32) {
    %c0_i32 = arith.constant 0 : i32
    %c0_i32_0 = arith.constant 0 : i32
    %c0_i32_1 = arith.constant 0 : i32
    return %arg0, %c0_i32, %c0_i32_0 : i32, i32, i32
  }
  func.func @transform_7(%arg0: i32) -> (i32, i32, i32) {
    %c0_i32 = arith.constant 0 : i32
    %c0_i32_0 = arith.constant 0 : i32
    %c0_i32_1 = arith.constant 0 : i32
    return %arg0, %c0_i32, %c0_i32_0 : i32, i32, i32
  }
  func.func @transform_8(%arg0: i32) -> (i32, i32) {
    %c0_i32 = arith.constant 0 : i32
    %c0_i32_0 = arith.constant 0 : i32
    %c0_i32_1 = arith.constant 0 : i32
    return %c0_i32, %c0_i32_0 : i32, i32
  }
  func.func @transform_9(%arg0: i32) -> (i32, i32) {
    %c0_i32 = arith.constant 0 : i32
    %c0_i32_0 = arith.constant 0 : i32
    %c0_i32_1 = arith.constant 0 : i32
    return %c0_i32, %c0_i32_0 : i32, i32
  }
  func.func @transform_10(%arg0: i32) -> (i32, i32) {
    %c0_i32 = arith.constant 0 : i32
    %c0_i32_0 = arith.constant 0 : i32
    %c0_i32_1 = arith.constant 0 : i32
    return %c0_i32, %c0_i32_0 : i32, i32
  }
}

</mosaic_0001>

<llo_original>
// kernel: tpu_custom_call.1
$region0: #{tpu_custom_call.1}
  #allocation0 [shape = 'u32[]', space=smem, size = 0x4, offset = 0x4, fixed_abs, tag = 'smem constant byte address 0x4 - core index']
  #allocation1 [shape = 'u32[144,128]{1,0:T(1,128)}', space=vmem, size = 0x12000, scoped, tag = 'internal scratch']
  #allocation2 [shape = 'f32[16,128]{1,0:T(8,128)}', space=vmem, size = 0x2000, scoped, tag = 'scratch operand']
  %s0 = inlined_call_operand.vmem [shape: s32[16,1], index: 0, kind: input, shape index: {}]
  %s1 = inlined_call_operand.hbm [shape: f32[256,128], index: 1, kind: input, shape index: {}]
  %s2 = inlined_call_operand.hbm [shape: bf16[3,128,384], index: 2, kind: input, shape index: {}]
  %s3 = inlined_call_operand.hbm [shape: bf16[3,128,128], index: 3, kind: input, shape index: {}]
  %s4 = inlined_call_operand.hbm [shape: bf16[3,128,2048], index: 4, kind: input, shape index: {}]
  %s5 = inlined_call_operand.hbm [shape: bf16[3,2048,128], index: 5, kind: input, shape index: {}]
  %s6 = inlined_call_operand.vmem [shape: f32[3,9,128], index: 6, kind: input, shape index: {}]
  %s7 = inlined_call_operand.hbm [shape: f32[3,1,2048], index: 7, kind: input, shape index: {}]
  %s8 = inlined_call_operand.hbm [shape: bf16[128,256], index: 8, kind: input, shape index: {}]
  %s9 = inlined_call_operand.hbm [shape: f32[1,256], index: 9, kind: input, shape index: {}]
  %s10 = inlined_call_operand.hbm [shape: f32[16,256], index: 10, kind: output, shape index: {}]
  %s11 = sld [smem:[#allocation0]]
  $region113: #{tpu_custom_call.1} parent=0
    _
  %s13 = ssub.s32 1, %s11
  %s14 = scalar_select 0, %s13, %s11
  $region1: #{tpu_custom_call.1} parent=0
    #allocation3 [shape = 'u8[131072]{0}', space=vmem, size = 0x20000, scoped, tag = 'input window, operand 1, single buffered']
    #allocation4 [shape = 's32[2]{0}', space=sflag, size = 0x8, scoped, tag = 'scoped memory for tpu_custom_call.1']
    #allocation5 [shape = 's32[2]{0}', space=sflag, size = 0x8, scoped, tag = 'scoped memory for tpu_custom_call.1']
    #allocation6 [shape = 'u8[196608]{0}', space=vmem, size = 0x30000, scoped, tag = 'input window, operand 2']
    #allocation7 [shape = 's32[2]{0}', space=sflag, size = 0x8, scoped, tag = 'scoped memory for tpu_custom_call.1']
    #allocation8 [shape = 'u8[65536]{0}', space=vmem, size = 0x10000, scoped, tag = 'input window, operand 3']
    #allocation9 [shape = 'u8[1048576]{0}', space=vmem, size = 0x100000, scoped, tag = 'input window, operand 4']
    #allocation10 [shape = 's32[2]{0}', space=sflag, size = 0x8, scoped, tag = 'scoped memory for tpu_custom_call.1']
    #allocation11 [shape = 'u8[1048576]{0}', space=vmem, size = 0x100000, scoped, tag = 'input window, operand 5']
    #allocation12 [shape = 'u8[16384]{0}', space=vmem, size = 0x4000, scoped, tag = 'input window, operand 7']
    #allocation13 [shape = 's32[2]{0}', space=sflag, size = 0x8, scoped, tag = 'scoped memory for tpu_custom_call.1']
    #allocation14 [shape = 'u8[65536]{0}', space=vmem, size = 0x10000, scoped, tag = 'input window, operand 8, single buffered']
    #allocation15 [shape = 'u8[1024]{0}', space=vmem, size = 0x400, scoped, tag = 'input window, operand 9, single buffered']
    #allocation16 [shape = 's32[1]{0}', space=sflag, size = 0x4, scoped, tag = 'scoped memory for tpu_custom_call.1']
    #allocation17 [shape = 'u8[16384]{0}', space=vmem, size = 0x4000, scoped, tag = 'output window, operand 0, single buffered']
    %15 = vsyncpa [#allocation4], 0
    %16 = vsyncpa [#allocation7], 0
    %s17 = scalar_lea.sflag [#allocation7], 1
    %18 = vsyncpa %s17, 0
    %19 = vsyncpa [#allocation10], 0
    %s20 = scalar_lea.sflag [#allocation10], 1
    %21 = vsyncpa %s20, 0
    %22 = vsyncpa [#allocation13], 0
    %s23 = scalar_lea.sflag [#allocation13], 1
    %24 = vsyncpa %s23, 0
    %25 = vsyncpa [#allocation16], 0
    %26 = vsyncpa [#allocation5], 0
    loop: start=0, step=1, limit=5
    $region2: #{tpu_custom_call.1} parent=1 // loop_pre_header
      _
    $region3: #{tpu_custom_call.1} parent=1 // loop_header
      %s28 = sphi 0, %s32
      %p29 = scmp.ge.s32.totalorder %s28, 5
      %s36 = sphi 0, %s36
      %s38 = sphi 0, %s36
      %s39 = sphi 0, %s38
      %s53 = sphi 0, %s39
      %s57 = sphi 0, %s57
      %s59 = sphi 0, %s57
      %s60 = sphi 0, %s59
      %s74 = sphi 0, %s60
      %s80 = sphi 0, %s82
      %s83 = sphi 0, %s80
      %s84 = sphi 0, %s83
      %s100 = sphi 0, %s84
      %s106 = sphi 0, %s108
      %s109 = sphi 0, %s106
      %s110 = sphi 0, %s109
      %s126 = sphi 0, %s110
      %s132 = sphi 0, %s134
      %s135 = sphi 0, %s132
      %s136 = sphi 0, %s135
      %s152 = sphi 0, %s136
      %s158 = sphi 0, %s160
      %s161 = sphi 0, %s158
      %s162 = sphi 0, %s161
      %s178 = sphi 0, %s162
      %s184 = sphi 0, %s186
      %s187 = sphi 0, %s184
      %s188 = sphi 0, %s187
      %s204 = sphi 0, %s188
      %s210 = sphi 0, %s212
      %s213 = sphi 0, %s210
      %s214 = sphi 0, %s213
      %s230 = sphi 0, %s214
      %s234 = sphi 0, %s234
      %s236 = sphi 0, %s234
      %s237 = sphi 0, %s236
      %s251 = sphi 0, %s237
      %s255 = sphi 0, %s255
      %s257 = sphi 0, %s255
      %s258 = sphi 0, %s257
      %s272 = sphi 0, %s258
      %s276 = sphi 0, %s276
      %s278 = sphi 0, %s276
      %s279 = sphi 0, %s278
      %s293 = sphi 0, %s279
    $region4: #{tpu_custom_call.1} parent=1 // loop_header_branch
      %31 = sbr.rel (%p29) target = $region8
    $region5: #{tpu_custom_call.1} parent=1 // loop_body
      %s33 = ssub.s32 %s28, 1
      %s34 = ssub.s32 %s28, 2
      %s35 = sadd.s32 %s28, 1
      %s37 = sadd.s32 %s36, 1
      %p40 = scmp.eq.s32.totalorder %s28, 2
      %p41 = scmp.ne.s32.totalorder %s36, %s38
      %p42 = scmp.eq.s32.totalorder %s28, 0
      %p43 = por %p41, %p42
      %p44 = scmp.ne.s32.totalorder %s36, %s38
      %p45 = scmp.eq.s32.totalorder %s33, 2
      %p46 = por %p44, %p45
      %p47 = scmp.ne.s32.totalorder %s38, %s39
      %p48 = scmp.eq.s32.totalorder %s33, 0
      %p49 = por %p47, %p48
      %p50 = scmp.ne.s32.totalorder %s38, %s39
      %p51 = scmp.eq.s32.totalorder %s34, 2
      %p52 = por %p50, %p51
      %p54 = scmp.ne.s32.totalorder %s39, %s53
      %p55 = scmp.eq.s32.totalorder %s34, 0
      %p56 = por %p54, %p55
      %s58 = sadd.s32 %s57, 1
      %p61 = scmp.eq.s32.totalorder %s28, 2
      %p62 = scmp.ne.s32.totalorder %s57, %s59
      %p63 = scmp.eq.s32.totalorder %s28, 0
      %p64 = por %p62, %p63
      %p65 = scmp.ne.s32.totalorder %s57, %s59
      %p66 = scmp.eq.s32.totalorder %s33, 2
      %p67 = por %p65, %p66
      %p68 = scmp.ne.s32.totalorder %s59, %s60
      %p69 = scmp.eq.s32.totalorder %s33, 0
      %p70 = por %p68, %p69
      %p71 = scmp.ne.s32.totalorder %s59, %s60
      %p72 = scmp.eq.s32.totalorder %s34, 2
      %p73 = por %p71, %p72
      %p75 = scmp.ne.s32.totalorder %s60, %s74
      %p76 = scmp.eq.s32.totalorder %s34, 0
      %p77 = por %p75, %p76
      %s78 = ssub.s32 %s28, %s35
      %p79 = scmp.eq.s32.totalorder %s78, 0
      %s81 = sadd.s32 %s80, 1
      %s82 = scalar_select %p79, %s80, %s81
      %p85 = pneg %p79
      %p86 = scmp.eq.s32.totalorder %s28, 2
      %p87 = por %p85, %p86
      %p88 = scmp.ne.s32.totalorder %s80, %s83
      %p89 = scmp.eq.s32.totalorder %s28, 0
      %p90 = por %p88, %p89
      %p91 = scmp.ne.s32.totalorder %s80, %s83
      %p92 = scmp.eq.s32.totalorder %s33, 2
      %p93 = por %p91, %p92
      %p94 = scmp.ne.s32.totalorder %s83, %s84
      %p95 = scmp.eq.s32.totalorder %s33, 0
      %p96 = por %p94, %p95
      %p97 = scmp.ne.s32.totalorder %s83, %s84
      %p98 = scmp.eq.s32.totalorder %s34, 2
      %p99 = por %p97, %p98
      %p101 = scmp.ne.s32.totalorder %s84, %s100
      %p102 = scmp.eq.s32.totalorder %s34, 0
      %p103 = por %p101, %p102
      %s104 = ssub.s32 %s28, %s35
      %p105 = scmp.eq.s32.totalorder %s104, 0
      %s107 = sadd.s32 %s106, 1
      %s108 = scalar_select %p105, %s106, %s107
      %p111 = pneg %p105
      %p112 = scmp.eq.s32.totalorder %s28, 2
      %p113 = por %p111, %p112
      %p114 = scmp.ne.s32.totalorder %s106, %s109
      %p115 = scmp.eq.s32.totalorder %s28, 0
      %p116 = por %p114, %p115
      %p117 = scmp.ne.s32.totalorder %s106, %s109
      %p118 = scmp.eq.s32.totalorder %s33, 2
      %p119 = por %p117, %p118
      %p120 = scmp.ne.s32.totalorder %s109, %s110
      %p121 = scmp.eq.s32.totalorder %s33, 0
      %p122 = por %p120, %p121
      %p123 = scmp.ne.s32.totalorder %s109, %s110
      %p124 = scmp.eq.s32.totalorder %s34, 2
      %p125 = por %p123, %p124
      %p127 = scmp.ne.s32.totalorder %s110, %s126
      %p128 = scmp.eq.s32.totalorder %s34, 0
      %p129 = por %p127, %p128
      %s130 = ssub.s32 %s28, %s35
      %p131 = scmp.eq.s32.totalorder %s130, 0
      %s133 = sadd.s32 %s132, 1
      %s134 = scalar_select %p131, %s132, %s133
      %p137 = pneg %p131
      %p138 = scmp.eq.s32.totalorder %s28, 2
      %p139 = por %p137, %p138
      %p140 = scmp.ne.s32.totalorder %s132, %s135
      %p141 = scmp.eq.s32.totalorder %s28, 0
      %p142 = por %p140, %p141
      %p143 = scmp.ne.s32.totalorder %s132, %s135
      %p144 = scmp.eq.s32.totalorder %s33, 2
      %p145 = por %p143, %p144
      %p146 = scmp.ne.s32.totalorder %s135, %s136
      %p147 = scmp.eq.s32.totalorder %s33, 0
      %p148 = por %p146, %p147
      %p149 = scmp.ne.s32.totalorder %s135, %s136
      %p150 = scmp.eq.s32.totalorder %s34, 2
      %p151 = por %p149, %p150
      %p153 = scmp.ne.s32.totalorder %s136, %s152
      %p154 = scmp.eq.s32.totalorder %s34, 0
      %p155 = por %p153, %p154
      %s156 = ssub.s32 %s28, %s35
      %p157 = scmp.eq.s32.totalorder %s156, 0
      %s159 = sadd.s32 %s158, 1
      %s160 = scalar_select %p157, %s158, %s159
      %p163 = pneg %p157
      %p164 = scmp.eq.s32.totalorder %s28, 2
      %p165 = por %p163, %p164
      %p166 = scmp.ne.s32.totalorder %s158, %s161
      %p167 = scmp.eq.s32.totalorder %s28, 0
      %p168 = por %p166, %p167
      %p169 = scmp.ne.s32.totalorder %s158, %s161
      %p170 = scmp.eq.s32.totalorder %s33, 2
      %p171 = por %p169, %p170
      %p172 = scmp.ne.s32.totalorder %s161, %s162
      %p173 = scmp.eq.s32.totalorder %s33, 0
      %p174 = por %p172, %p173
      %p175 = scmp.ne.s32.totalorder %s161, %s162
      %p176 = scmp.eq.s32.totalorder %s34, 2
      %p177 = por %p175, %p176
      %p179 = scmp.ne.s32.totalorder %s162, %s178
      %p180 = scmp.eq.s32.totalorder %s34, 0
      %p181 = por %p179, %p180
      %s182 = ssub.s32 %s28, %s35
      %p183 = scmp.eq.s32.totalorder %s182, 0
      %s185 = sadd.s32 %s184, 1
      %s186 = scalar_select %p183, %s184, %s185
      %p189 = pneg %p183
      %p190 = scmp.eq.s32.totalorder %s28, 2
      %p191 = por %p189, %p190
      %p192 = scmp.ne.s32.totalorder %s184, %s187
      %p193 = scmp.eq.s32.totalorder %s28, 0
      %p194 = por %p192, %p193
      %p195 = scmp.ne.s32.totalorder %s184, %s187
      %p196 = scmp.eq.s32.totalorder %s33, 2
      %p197 = por %p195, %p196
      %p198 = scmp.ne.s32.totalorder %s187, %s188
      %p199 = scmp.eq.s32.totalorder %s33, 0
      %p200 = por %p198, %p199
      %p201 = scmp.ne.s32.totalorder %s187, %s188
      %p202 = scmp.eq.s32.totalorder %s34, 2
      %p203 = por %p201, %p202
      %p205 = scmp.ne.s32.totalorder %s188, %s204
      %p206 = scmp.eq.s32.totalorder %s34, 0
      %p207 = por %p205, %p206
      %s208 = ssub.s32 %s28, %s35
      %p209 = scmp.eq.s32.totalorder %s208, 0
      %s211 = sadd.s32 %s210, 1
      %s212 = scalar_select %p209, %s210, %s211
      %p215 = pneg %p209
      %p216 = scmp.eq.s32.totalorder %s28, 2
      %p217 = por %p215, %p216
      %p218 = scmp.ne.s32.totalorder %s210, %s213
      %p219 = scmp.eq.s32.totalorder %s28, 0
      %p220 = por %p218, %p219
      %p221 = scmp.ne.s32.totalorder %s210, %s213
      %p222 = scmp.eq.s32.totalorder %s33, 2
      %p223 = por %p221, %p222
      %p224 = scmp.ne.s32.totalorder %s213, %s214
      %p225 = scmp.eq.s32.totalorder %s33, 0
      %p226 = por %p224, %p225
      %p227 = scmp.ne.s32.totalorder %s213, %s214
      %p228 = scmp.eq.s32.totalorder %s34, 2
      %p229 = por %p227, %p228
      %p231 = scmp.ne.s32.totalorder %s214, %s230
      %p232 = scmp.eq.s32.totalorder %s34, 0
      %p233 = por %p231, %p232
      %s235 = sadd.s32 %s234, 1
      %p238 = scmp.eq.s32.totalorder %s28, 2
      %p239 = scmp.ne.s32.totalorder %s234, %s236
      %p240 = scmp.eq.s32.totalorder %s28, 0
      %p241 = por %p239, %p240
      %p242 = scmp.ne.s32.totalorder %s234, %s236
      %p243 = scmp.eq.s32.totalorder %s33, 2
      %p244 = por %p242, %p243
      %p245 = scmp.ne.s32.totalorder %s236, %s237
      %p246 = scmp.eq.s32.totalorder %s33, 0
      %p247 = por %p245, %p246
      %p248 = scmp.ne.s32.totalorder %s236, %s237
      %p249 = scmp.eq.s32.totalorder %s34, 2
      %p250 = por %p248, %p249
      %p252 = scmp.ne.s32.totalorder %s237, %s251
      %p253 = scmp.eq.s32.totalorder %s34, 0
      %p254 = por %p252, %p253
      %s256 = sadd.s32 %s255, 1
      %p259 = scmp.eq.s32.totalorder %s28, 2
      %p260 = scmp.ne.s32.totalorder %s255, %s257
      %p261 = scmp.eq.s32.totalorder %s28, 0
      %p262 = por %p260, %p261
      %p263 = scmp.ne.s32.totalorder %s255, %s257
      %p264 = scmp.eq.s32.totalorder %s33, 2
      %p265 = por %p263, %p264
      %p266 = scmp.ne.s32.totalorder %s257, %s258
      %p267 = scmp.eq.s32.totalorder %s33, 0
      %p268 = por %p266, %p267
      %p269 = scmp.ne.s32.totalorder %s257, %s258
      %p270 = scmp.eq.s32.totalorder %s34, 2
      %p271 = por %p269, %p270
      %p273 = scmp.ne.s32.totalorder %s258, %s272
      %p274 = scmp.eq.s32.totalorder %s34, 0
      %p275 = por %p273, %p274
      %s277 = sadd.s32 %s276, 1
      %p280 = scmp.eq.s32.totalorder %s28, 2
      %p281 = scmp.ne.s32.totalorder %s276, %s278
      %p282 = scmp.eq.s32.totalorder %s28, 0
      %p283 = por %p281, %p282
      %p284 = scmp.ne.s32.totalorder %s276, %s278
      %p285 = scmp.eq.s32.totalorder %s33, 2
      %p286 = por %p284, %p285
      %p287 = scmp.ne.s32.totalorder %s278, %s279
      %p288 = scmp.eq.s32.totalorder %s33, 0
      %p289 = por %p287, %p288
      %p290 = scmp.ne.s32.totalorder %s278, %s279
      %p291 = scmp.eq.s32.totalorder %s34, 2
      %p292 = por %p290, %p291
      %p294 = scmp.ne.s32.totalorder %s279, %s293
      %p295 = scmp.eq.s32.totalorder %s34, 0
      %p296 = por %p294, %p295
      %p297 = scmp.le.s32.totalorder 1, %s28
      %p298 = scmp.lt.s32.totalorder %s28, 4
      %p299 = pnand %p297, %p298
      %p300 = pneg %p299
      // Predicated region
      $region9: #{tpu_custom_call.1} parent=5 // pred_check
        _
      $region10: #{tpu_custom_call.1} parent=5 // pred_check_branch
        %302 = sbr.rel (%p299) target = $region12
      $region11: #{tpu_custom_call.1} parent=5 // pred_region
        %s303 = ssub.s32 %s28, 1
        // Predicated region
        $region13: #{tpu_custom_call.1} parent=11 // pred_check
          %p304 = pneg %p49
        $region14: #{tpu_custom_call.1} parent=11 // pred_check_branch
          %306 = sbr.rel (%p304) target = $region16
        $region15: #{tpu_custom_call.1} parent=11 // pred_region
          _
        $region16: #{tpu_custom_call.1} parent=11 // pred_fallthru
          _
        // Predicated region
        $region17: #{tpu_custom_call.1} parent=11 // pred_check
          %p307 = pneg %p70
        $region18: #{tpu_custom_call.1} parent=11 // pred_check_branch
          %309 = sbr.rel (%p307) target = $region20
        $region19: #{tpu_custom_call.1} parent=11 // pred_region
          %s311 = ssub.s32 4096, 4096
          %312 = vsyncadd [#allocation4], %s311
          %s313 = sshll.u32 [#allocation3], 4
          %s314 = int_to_ptr.vmem [resolvable:$true] %s313
          %319 = dma.hbm_to_vmem [thread:$0]  %s1, 4096, %s314, [#allocation4], 128, 128, 8
        $region20: #{tpu_custom_call.1} parent=11 // pred_fallthru
          _
        // Predicated region
        $region21: #{tpu_custom_call.1} parent=11 // pred_check
          %p320 = pneg %p247
        $region22: #{tpu_custom_call.1} parent=11 // pred_check_branch
          %322 = sbr.rel (%p320) target = $region24
        $region23: #{tpu_custom_call.1} parent=11 // pred_region
          %s324 = ssub.s32 2048, 2048
          %325 = vsyncadd [#allocation13], %s324
          %s326 = sshll.u32 [#allocation14], 4
          %s327 = int_to_ptr.vmem [resolvable:$true] %s326
          %332 = dma.hbm_to_vmem [thread:$0]  %s8, 2048, %s327, [#allocation13], 128, 128, 8
        $region24: #{tpu_custom_call.1} parent=11 // pred_fallthru
          _
        // Predicated region
        $region25: #{tpu_custom_call.1} parent=11 // pred_check
          %p333 = pneg %p268
        $region26: #{tpu_custom_call.1} parent=11 // pred_check_branch
          %335 = sbr.rel (%p333) target = $region28
        $region27: #{tpu_custom_call.1} parent=11 // pred_region
          %s337 = ssub.s32 32, 32
          %338 = vsyncadd [#allocation16], %s337
          %s340 = sshll.u32 [#allocation15], 4
          %s341 = int_to_ptr.vmem [resolvable:$true] %s340
          %343 = dma.hbm_to_vmem [thread:$0]  %s9, 32, %s341, [#allocation16]
        $region28: #{tpu_custom_call.1} parent=11 // pred_fallthru
          _
      $region12: #{tpu_custom_call.1} parent=5 // pred_fallthru
        _
      %p344 = scmp.lt.s32.totalorder %s28, 3
      // Predicated region
      $region29: #{tpu_custom_call.1} parent=5 // pred_check
        %p345 = pneg %p344
      $region30: #{tpu_custom_call.1} parent=5 // pred_check_branch
        %347 = sbr.rel (%p345) target = $region32
      $region31: #{tpu_custom_call.1} parent=5 // pred_region
        // Predicated region
        $region33: #{tpu_custom_call.1} parent=31 // pred_check
          %p348 = pneg %p90
        $region34: #{tpu_custom_call.1} parent=31 // pred_check_branch
          %350 = sbr.rel (%p348) target = $region36
        $region35: #{tpu_custom_call.1} parent=31 // pred_region
          %s351 = sand.u32 %s28, 1
          %s352 = scalar_lea.sflag [#allocation7], %s351
          %s353 = sand.u32 %s80, 1
          %s354 = smul.addr %s353, 192
          %s355 = scalar_lea.vmem [#allocation6], %s354
          %s357 = ssub.s32 3072, 3072
          %358 = vsyncadd %s352, %s357
          %s359 = smul.addr %s28, 48
          %s360 = smul.addr %s359, 64
          %s361 = scalar_lea.hbm %s2, %s360
          %s362 = sshll.u32 %s355, 4
          %s363 = int_to_ptr.vmem [resolvable:$true] %s362
          %368 = dma.hbm_to_vmem [thread:$0]  %s361, 3072, %s363, %s352, 192, 192, 12
        $region36: #{tpu_custom_call.1} parent=31 // pred_fallthru
          _
        // Predicated region
        $region37: #{tpu_custom_call.1} parent=31 // pred_check
          %p369 = pneg %p116
        $region38: #{tpu_custom_call.1} parent=31 // pred_check_branch
          %371 = sbr.rel (%p369) target = $region40
        $region39: #{tpu_custom_call.1} parent=31 // pred_region
          %s372 = sand.u32 %s28, 1
          %s373 = scalar_lea.sflag [#allocation7], %s372
          %s374 = sand.u32 %s106, 1
          %s375 = smul.addr %s374, 64
          %s376 = scalar_lea.vmem [#allocation8], %s375
          %s378 = ssub.s32 1024, 1024
          %379 = vsyncadd %s373, %s378
          %s380 = smul.addr %s28, 16
          %s381 = smul.addr %s380, 64
          %s382 = scalar_lea.hbm %s3, %s381
          %s383 = sshll.u32 %s376, 4
          %s384 = int_to_ptr.vmem [resolvable:$true] %s383
          %389 = dma.hbm_to_vmem [thread:$0]  %s382, 1024, %s384, %s373, 64, 64, 4
        $region40: #{tpu_custom_call.1} parent=31 // pred_fallthru
          _
        // Predicated region
        $region41: #{tpu_custom_call.1} parent=31 // pred_check
          %p390 = pneg %p142
        $region42: #{tpu_custom_call.1} parent=31 // pred_check_branch
          %392 = sbr.rel (%p390) target = $region44
        $region43: #{tpu_custom_call.1} parent=31 // pred_region
          %s393 = sand.u32 %s28, 1
          %s394 = scalar_lea.sflag [#allocation10], %s393
          %s395 = sand.u32 %s132, 1
          %s396 = smul.addr %s395, 1024
          %s397 = scalar_lea.vmem [#allocation9], %s396
          %s399 = ssub.s32 16384, 16384
          %400 = vsyncadd %s394, %s399
          %s401 = smul.addr %s28, 256
          %s402 = smul.addr %s401, 64
          %s403 = scalar_lea.hbm %s4, %s402
          %s404 = sshll.u32 %s397, 4
          %s405 = int_to_ptr.vmem [resolvable:$true] %s404
          %410 = dma.hbm_to_vmem [thread:$0]  %s403, 16384, %s405, %s394, 1024, 1024, 64
        $region44: #{tpu_custom_call.1} parent=31 // pred_fallthru
          _
        // Predicated region
        $region45: #{tpu_custom_call.1} parent=31 // pred_check
          %p411 = pneg %p168
        $region46: #{tpu_custom_call.1} parent=31 // pred_check_branch
          %413 = sbr.rel (%p411) target = $region48
        $region47: #{tpu_custom_call.1} parent=31 // pred_region
          %s414 = sand.u32 %s28, 1
          %s415 = scalar_lea.sflag [#allocation10], %s414
          %s416 = sand.u32 %s158, 1
          %s417 = smul.addr %s416, 1024
          %s418 = scalar_lea.vmem [#allocation11], %s417
          %s420 = ssub.s32 16384, 16384
          %421 = vsyncadd %s415, %s420
          %s422 = smul.addr %s28, 256
          %s423 = smul.addr %s422, 64
          %s424 = scalar_lea.hbm %s5, %s423
          %s425 = sshll.u32 %s418, 4
          %s426 = int_to_ptr.vmem [resolvable:$true] %s425
          %431 = dma.hbm_to_vmem [thread:$0]  %s424, 16384, %s426, %s415, 64, 64, 4
        $region48: #{tpu_custom_call.1} parent=31 // pred_fallthru
          _
        // Predicated region
        $region49: #{tpu_custom_call.1} parent=31 // pred_check
          %p432 = pneg %p194
        $region50: #{tpu_custom_call.1} parent=31 // pred_check_branch
          %434 = sbr.rel (%p432) target = $region52
        $region51: #{tpu_custom_call.1} parent=31 // pred_region
          %p435 = scmp.lt.s32.totalorder %s28, 2
          %s436 = scalar_select %p435, %s28, 2
          %s437 = smul.addr %s436, 2
          %s438 = smul.addr %s437, 8
          %s439 = scalar_lea.vmem %s6, %s438
        $region52: #{tpu_custom_call.1} parent=31 // pred_fallthru
          _
        // Predicated region
        $region53: #{tpu_custom_call.1} parent=31 // pred_check
          %p440 = pneg %p220
        $region54: #{tpu_custom_call.1} parent=31 // pred_check_branch
          %442 = sbr.rel (%p440) target = $region56
        $region55: #{tpu_custom_call.1} parent=31 // pred_region
          %s443 = sand.u32 %s28, 1
          %s444 = scalar_lea.sflag [#allocation13], %s443
          %s445 = sand.u32 %s210, 1
          %s446 = smul.addr %s445, 16
          %s447 = scalar_lea.vmem [#allocation12], %s446
          %s449 = ssub.s32 256, 256
          %450 = vsyncadd %s444, %s449
          %s451 = smul.addr %s28, 16
          %s452 = smul.addr %s451, 16
          %s453 = scalar_lea.hbm %s7, %s452
          %s455 = sshll.u32 %s447, 4
          %s456 = int_to_ptr.vmem [resolvable:$true] %s455
          %458 = dma.hbm_to_vmem [thread:$0]  %s453, 256, %s456, %s444
        $region56: #{tpu_custom_call.1} parent=31 // pred_fallthru
          _
      $region32: #{tpu_custom_call.1} parent=5 // pred_fallthru
        _
      %p459 = scmp.le.s32.totalorder 1, %s28
      %p460 = scmp.lt.s32.totalorder %s28, 4
      %p461 = pnand %p459, %p460
      %p462 = pneg %p461
      // Predicated region
      $region57: #{tpu_custom_call.1} parent=5 // pred_check
        _
      $region58: #{tpu_custom_call.1} parent=5 // pred_check_branch
        %464 = sbr.rel (%p461) target = $region60
      $region59: #{tpu_custom_call.1} parent=5 // pred_region
        %s465 = ssub.s32 %s28, 1
        // Predicated region
        $region61: #{tpu_custom_call.1} parent=59 // pred_check
          %p466 = pneg %p70
        $region62: #{tpu_custom_call.1} parent=59 // pred_check_branch
          %468 = sbr.rel (%p466) target = $region64
        $region63: #{tpu_custom_call.1} parent=59 // pred_region
          %469 = dma.done [#allocation4], 4096
        $region64: #{tpu_custom_call.1} parent=59 // pred_fallthru
          _
        %s470 = sand.u32 %s33, 1
        %s471 = scalar_lea.sflag [#allocation7], %s470
        %s472 = sand.u32 %s83, 1
        %s473 = smul.addr %s472, 192
        %s474 = scalar_lea.vmem [#allocation6], %s473
        // Predicated region
        $region65: #{tpu_custom_call.1} parent=59 // pred_check
          %p475 = pneg %p96
        $region66: #{tpu_custom_call.1} parent=59 // pred_check_branch
          %477 = sbr.rel (%p475) target = $region68
        $region67: #{tpu_custom_call.1} parent=59 // pred_region
          %478 = dma.done %s471, 3072
        $region68: #{tpu_custom_call.1} parent=59 // pred_fallthru
          _
        %s479 = sand.u32 %s33, 1
        %s480 = scalar_lea.sflag [#allocation7], %s479
        %s481 = sand.u32 %s109, 1
        %s482 = smul.addr %s481, 64
        %s483 = scalar_lea.vmem [#allocation8], %s482
        // Predicated region
        $region69: #{tpu_custom_call.1} parent=59 // pred_check
          %p484 = pneg %p122
        $region70: #{tpu_custom_call.1} parent=59 // pred_check_branch
          %486 = sbr.rel (%p484) target = $region72
        $region71: #{tpu_custom_call.1} parent=59 // pred_region
          %487 = dma.done %s480, 1024
        $region72: #{tpu_custom_call.1} parent=59 // pred_fallthru
          _
        %s488 = sand.u32 %s33, 1
        %s489 = scalar_lea.sflag [#allocation10], %s488
        %s490 = sand.u32 %s135, 1
        %s491 = smul.addr %s490, 1024
        %s492 = scalar_lea.vmem [#allocation9], %s491
        // Predicated region
        $region73: #{tpu_custom_call.1} parent=59 // pred_check
          %p493 = pneg %p148
        $region74: #{tpu_custom_call.1} parent=59 // pred_check_branch
          %495 = sbr.rel (%p493) target = $region76
        $region75: #{tpu_custom_call.1} parent=59 // pred_region
          %496 = dma.done %s489, 16384
        $region76: #{tpu_custom_call.1} parent=59 // pred_fallthru
          _
        %s497 = sand.u32 %s33, 1
        %s498 = scalar_lea.sflag [#allocation10], %s497
        %s499 = sand.u32 %s161, 1
        %s500 = smul.addr %s499, 1024
        %s501 = scalar_lea.vmem [#allocation11], %s500
        // Predicated region
        $region77: #{tpu_custom_call.1} parent=59 // pred_check
          %p502 = pneg %p174
        $region78: #{tpu_custom_call.1} parent=59 // pred_check_branch
          %504 = sbr.rel (%p502) target = $region80
        $region79: #{tpu_custom_call.1} parent=59 // pred_region
          %505 = dma.done %s498, 16384
        $region80: #{tpu_custom_call.1} parent=59 // pred_fallthru
          _
        %s506 = sand.u32 %s33, 1
        %s507 = scalar_lea.sflag [#allocation13], %s506
        %s508 = sand.u32 %s213, 1
        %s509 = smul.addr %s508, 16
        %s510 = scalar_lea.vmem [#allocation12], %s509
        // Predicated region
        $region81: #{tpu_custom_call.1} parent=59 // pred_check
          %p511 = pneg %p226
        $region82: #{tpu_custom_call.1} parent=59 // pred_check_branch
          %513 = sbr.rel (%p511) target = $region84
        $region83: #{tpu_custom_call.1} parent=59 // pred_region
          %514 = dma.done %s507, 256
        $region84: #{tpu_custom_call.1} parent=59 // pred_fallthru
          _
        // Predicated region
        $region85: #{tpu_custom_call.1} parent=59 // pred_check
          %p515 = pneg %p247
        $region86: #{tpu_custom_call.1} parent=59 // pred_check_branch
          %517 = sbr.rel (%p515) target = $region88
        $region87: #{tpu_custom_call.1} parent=59 // pred_region
          %518 = dma.done [#allocation13], 2048
        $region88: #{tpu_custom_call.1} parent=59 // pred_fallthru
          _
        // Predicated region
        $region89: #{tpu_custom_call.1} parent=59 // pred_check
          %p519 = pneg %p268
        $region90: #{tpu_custom_call.1} parent=59 // pred_check_branch
          %521 = sbr.rel (%p519) target = $region92
        $region91: #{tpu_custom_call.1} parent=59 // pred_region
          %522 = dma.done [#allocation16], 32
        $region92: #{tpu_custom_call.1} parent=59 // pred_fallthru
          _
        %p523 = pneg %p49
        %p524 = pneg %p46
        %p525 = pneg %p70
        %p526 = pneg %p67
        %s527 = sand.u32 %s33, 1
        %s528 = scalar_lea.sflag [#allocation7], %s527
        %s529 = sand.u32 %s83, 1
        %s530 = smul.addr %s529, 192
        %s531 = scalar_lea.vmem [#allocation6], %s530
        %p532 = pneg %p96
        %p533 = pneg %p93
        %s534 = sand.u32 %s33, 1
        %s535 = scalar_lea.sflag [#allocation7], %s534
        %s536 = sand.u32 %s109, 1
        %s537 = smul.addr %s536, 64
        %s538 = scalar_lea.vmem [#allocation8], %s537
        %p539 = pneg %p122
        %p540 = pneg %p119
        %s541 = sand.u32 %s33, 1
        %s542 = scalar_lea.sflag [#allocation10], %s541
        %s543 = sand.u32 %s135, 1
        %s544 = smul.addr %s543, 1024
        %s545 = scalar_lea.vmem [#allocation9], %s544
        %p546 = pneg %p148
        %p547 = pneg %p145
        %s548 = sand.u32 %s33, 1
        %s549 = scalar_lea.sflag [#allocation10], %s548
        %s550 = sand.u32 %s161, 1
        %s551 = smul.addr %s550, 1024
        %s552 = scalar_lea.vmem [#allocation11], %s551
        %p553 = pneg %p174
        %p554 = pneg %p171
        %p555 = scmp.lt.s32.totalorder %s33, 2
        %s556 = scalar_select %p555, %s33, 2
        %s557 = smul.addr %s556, 2
        %s558 = smul.addr %s557, 8
        %s559 = scalar_lea.vmem %s6, %s558
        %p560 = pneg %p200
        %p561 = pneg %p197
        %s562 = sand.u32 %s33, 1
        %s563 = scalar_lea.sflag [#allocation13], %s562
        %s564 = sand.u32 %s213, 1
        %s565 = smul.addr %s564, 16
        %s566 = scalar_lea.vmem [#allocation12], %s565
        %p567 = pneg %p226
        %p568 = pneg %p223
        %p569 = pneg %p247
        %p570 = pneg %p244
        %p571 = pneg %p268
        %p572 = pneg %p265
        %p573 = pneg %p289
        %p574 = pneg %p286
        %p575 = scmp.lt.s32.totalorder %s33, 2
        %s576 = scalar_select %p575, %s33, 2
        %s577 = smul.addr %s576, 2
        %s578 = smul.addr %s577, 8
        %s579 = scalar_lea.vmem %s6, %s578
        %p581 = scmp.eq.s32.totalorder %s33, 0
        // Predicated region
        $region93: #{tpu_custom_call.1} parent=59 // pred_check
          %p582 = pneg %p581
        $region94: #{tpu_custom_call.1} parent=59 // pred_check_branch
          %584 = sbr.rel (%p582) target = $region96
        $region95: #{tpu_custom_call.1} parent=59 // pred_region
          %v585 = vld [vmem:[%s0] sm:$0xff]
          %v586 = vld [vmem:[%s0 + $0x8] sm:$0xff]
          %v587 = vlaneseq
          %v588 = vand.u32 %v587, 127
          %v589 = vadd.s32 %v588, 128
          %590 = vset.pattern.permute.xlu0 0
          %591 = vperm.xlu0 %590, %v585
          %v592 = vpop.permute.xlu0 %591
          %593 = vset.pattern.permute.xlu0 0
          %594 = vperm.xlu0 %593, %v586
          %v595 = vpop.permute.xlu0 %594
          %vm596 = vcmp.eq.s32.totalorder %v588, %v592
          %vm597 = vcmp.eq.s32.totalorder %v589, %v592
          %vm598 = vcmp.eq.s32.totalorder %v588, %v595
          %vm599 = vcmp.eq.s32.totalorder %v589, %v595
          %v600 = vsel %vm596, 1, 0
          %v601 = vsel %vm597, 1, 0
          %v602 = vsel %vm598, 1, 0
          %v603 = vsel %vm599, 1, 0
          %v604 = vcvt.s32.f32 %v600
          %v605 = vcvt.s32.f32 %v601
          %v606 = vcvt.s32.f32 %v602
          %v607 = vcvt.s32.f32 %v603
          %v608 = vld [vmem:[#allocation3] sm:$0xff]
          %v609 = vld [vmem:[#allocation3 + $0x8] sm:$0xff]
          %v610 = vld [vmem:[#allocation3 + $0x10] sm:$0xff]
          %v611 = vld [vmem:[#allocation3 + $0x18] sm:$0xff]
          %v612 = vld [vmem:[#allocation3 + $0x20] sm:$0xff]
          %v613 = vld [vmem:[#allocation3 + $0x28] sm:$0xff]
          %v614 = vld [vmem:[#allocation3 + $0x30] sm:$0xff]
          %v615 = vld [vmem:[#allocation3 + $0x38] sm:$0xff]
          %v616 = vld [vmem:[#allocation3 + $0x40] sm:$0xff]
          %v617 = vld [vmem:[#allocation3 + $0x48] sm:$0xff]
          %v618 = vld [vmem:[#allocation3 + $0x50] sm:$0xff]
          %v619 = vld [vmem:[#allocation3 + $0x58] sm:$0xff]
          %v620 = vld [vmem:[#allocation3 + $0x60] sm:$0xff]
          %v621 = vld [vmem:[#allocation3 + $0x68] sm:$0xff]
          %v622 = vld [vmem:[#allocation3 + $0x70] sm:$0xff]
          %v623 = vld [vmem:[#allocation3 + $0x78] sm:$0xff]
          %v624 = vld [vmem:[#allocation3 + $0x80] sm:$0xff]
          %v625 = vld [vmem:[#allocation3 + $0x88] sm:$0xff]
          %v626 = vld [vmem:[#allocation3 + $0x90] sm:$0xff]
          %v627 = vld [vmem:[#allocation3 + $0x98] sm:$0xff]
          %v628 = vld [vmem:[#allocation3 + $0xa0] sm:$0xff]
          %v629 = vld [vmem:[#allocation3 + $0xa8] sm:$0xff]
          %v630 = vld [vmem:[#allocation3 + $0xb0] sm:$0xff]
          %v631 = vld [vmem:[#allocation3 + $0xb8] sm:$0xff]
          %v632 = vld [vmem:[#allocation3 + $0xc0] sm:$0xff]
          %v633 = vld [vmem:[#allocation3 + $0xc8] sm:$0xff]
          %v634 = vld [vmem:[#allocation3 + $0xd0] sm:$0xff]
          %v635 = vld [vmem:[#allocation3 + $0xd8] sm:$0xff]
          %v636 = vld [vmem:[#allocation3 + $0xe0] sm:$0xff]
          %v637 = vld [vmem:[#allocation3 + $0xe8] sm:$0xff]
          %v638 = vld [vmem:[#allocation3 + $0xf0] sm:$0xff]
          %v639 = vld [vmem:[#allocation3 + $0xf8] sm:$0xff]
          %640 = vmatprep.subr.mxu0 0.0
          %641 = vmatpush1.msra.mxu0 %v623
          %642 = vmatprep.subr.mxu0 0.0
          %643 = vmatpush1.msra.mxu0 %v622
          %644 = vmatprep.subr.mxu0 0.0
          %645 = vmatpush1.msra.mxu0 %v621
          %646 = vmatprep.subr.mxu0 0.0
          %647 = vmatpush1.msra.mxu0 %v620
          %648 = vmatprep.subr.mxu0 0.0
          %649 = vmatpush1.msra.mxu0 %v619
          %650 = vmatprep.subr.mxu0 0.0
          %651 = vmatpush1.msra.mxu0 %v618
          %652 = vmatprep.subr.mxu0 0.0
          %653 = vmatpush1.msra.mxu0 %v617
          %654 = vmatprep.subr.mxu0 0.0
          %655 = vmatpush1.msra.mxu0 %v616
          %656 = vmatprep.subr.mxu0 0.0
          %657 = vmatpush1.msra.mxu0 %v615
          %658 = vmatprep.subr.mxu0 0.0
          %659 = vmatpush1.msra.mxu0 %v614
          %660 = vmatprep.subr.mxu0 0.0
          %661 = vmatpush1.msra.mxu0 %v613
          %662 = vmatprep.subr.mxu0 0.0
          %663 = vmatpush1.msra.mxu0 %v612
          %664 = vmatprep.subr.mxu0 0.0
          %665 = vmatpush1.msra.mxu0 %v611
          %666 = vmatprep.subr.mxu0 0.0
          %667 = vmatpush1.msra.mxu0 %v610
          %668 = vmatprep.subr.mxu0 0.0
          %669 = vmatpush1.msra.mxu0 %v609
          %670 = vmatprep.subr.mxu0 0.0
          %671 = vmatpush1.msra.mxu0 %v608
          %672 = vmatprep.subr.mxu0 0.0
          %673 = vmatpush2.msra.mxu0 %v639
          %674 = vmatprep.subr.mxu0 0.0
          %675 = vmatpush2.msra.mxu0 %v638
          %676 = vmatprep.subr.mxu0 0.0
          %677 = vmatpush2.msra.mxu0 %v637
          %678 = vmatprep.subr.mxu0 0.0
          %679 = vmatpush2.msra.mxu0 %v636
          %680 = vmatprep.subr.mxu0 0.0
          %681 = vmatpush2.msra.mxu0 %v635
          %682 = vmatprep.subr.mxu0 0.0
          %683 = vmatpush2.msra.mxu0 %v634
          %684 = vmatprep.subr.mxu0 0.0
          %685 = vmatpush2.msra.mxu0 %v633
          %686 = vmatprep.subr.mxu0 0.0
          %687 = vmatpush2.msra.mxu0 %v632
          %688 = vmatprep.subr.mxu0 0.0
          %689 = vmatpush2.msra.mxu0 %v631
          %690 = vmatprep.subr.mxu0 0.0
          %691 = vmatpush2.msra.mxu0 %v630
          %692 = vmatprep.subr.mxu0 0.0
          %693 = vmatpush2.msra.mxu0 %v629
          %694 = vmatprep.subr.mxu0 0.0
          %695 = vmatpush2.msra.mxu0 %v628
          %696 = vmatprep.subr.mxu0 0.0
          %697 = vmatpush2.msra.mxu0 %v627
          %698 = vmatprep.subr.mxu0 0.0
          %699 = vmatpush2.msra.mxu0 %v626
          %700 = vmatprep.subr.mxu0 0.0
          %701 = vmatpush2.msra.mxu0 %v625
          %702 = vmatprep.subr.mxu0 0.0
          %703 = vmatpush2.msra.mxu0 %v624
          %704 = vmatprep.mubr.f32.mxu0 %v605
          %705 = vmatmul.mubr.f32.gmra.mxu0 %v604
          %v706 = vpop.f32.mrf.mxu0
          %v707 = vadd.f32 0.0, %v706
          %v708 = vpop.f32.mrf.mxu0
          %709 = vmatprep.mubr.f32.mxu0 %v607
          %710 = vmatmul.mubr.f32.gmra.mxu0 %v606
          %v711 = vpop.f32.mrf.mxu0
          %v712 = vadd.f32 0.0, %v711
          %v713 = vpop.f32.mrf.mxu0
          %714 = vdwg.mxu0
          %715 = vst [vmem:[#allocation2] sm:$0xff] %v707
          %716 = vst [vmem:[#allocation2 + $0x8] sm:$0xff] %v712
        $region96: #{tpu_custom_call.1} parent=59 // pred_fallthru
          _
        %v717 = vld [vmem:[#allocation2] sm:$0xff]
        %v718 = vld [vmem:[#allocation2 + $0x8] sm:$0xff]
        %v719 = vpack.c.bf16 %v718, %v717
        %v720 = vld [vmem:[%s579] sm:$0xff]
        %v721 = vld [vmem:[%s579 + $0x8] sm:$0x1]
        %v722 = vld [vmem:[%s474] sm:$0xff]
        %v723 = vld [vmem:[%s474 + $0x8] sm:$0xf]
        %v724 = vld [vmem:[%s474 + $0xc] sm:$0xff]
        %v725 = vld [vmem:[%s474 + $0x14] sm:$0xf]
        %v726 = vld [vmem:[%s474 + $0x18] sm:$0xff]
        %v727 = vld [vmem:[%s474 + $0x20] sm:$0xf]
        %v728 = vld [vmem:[%s474 + $0x24] sm:$0xff]
        %v729 = vld [vmem:[%s474 + $0x2c] sm:$0xf]
        %v730 = vld [vmem:[%s474 + $0x30] sm:$0xff]
        %v731 = vld [vmem:[%s474 + $0x38] sm:$0xf]
        %v732 = vld [vmem:[%s474 + $0x3c] sm:$0xff]
        %v733 = vld [vmem:[%s474 + $0x44] sm:$0xf]
        %v734 = vld [vmem:[%s474 + $0x48] sm:$0xff]
        %v735 = vld [vmem:[%s474 + $0x50] sm:$0xf]
        %v736 = vld [vmem:[%s474 + $0x54] sm:$0xff]
        %v737 = vld [vmem:[%s474 + $0x5c] sm:$0xf]
        %v738 = vld [vmem:[%s474 + $0x60] sm:$0xff]
        %v739 = vld [vmem:[%s474 + $0x68] sm:$0xf]
        %v740 = vld [vmem:[%s474 + $0x6c] sm:$0xff]
        %v741 = vld [vmem:[%s474 + $0x74] sm:$0xf]
        %v742 = vld [vmem:[%s474 + $0x78] sm:$0xff]
        %v743 = vld [vmem:[%s474 + $0x80] sm:$0xf]
        %v744 = vld [vmem:[%s474 + $0x84] sm:$0xff]
        %v745 = vld [vmem:[%s474 + $0x8c] sm:$0xf]
        %v746 = vld [vmem:[%s474 + $0x90] sm:$0xff]
        %v747 = vld [vmem:[%s474 + $0x98] sm:$0xf]
        %v748 = vld [vmem:[%s474 + $0x9c] sm:$0xff]
        %v749 = vld [vmem:[%s474 + $0xa4] sm:$0xf]
        %v750 = vld [vmem:[%s474 + $0xa8] sm:$0xff]
        %v751 = vld [vmem:[%s474 + $0xb0] sm:$0xf]
        %v752 = vld [vmem:[%s474 + $0xb4] sm:$0xff]
        %v753 = vld [vmem:[%s474 + $0xbc] sm:$0xf]
        %v786 = vunpack.c.l.b16 %v722
        %v787 = vunpack.c.h.b16 %v722
        %v788 = vunpack.c.l.b16 %v723
        %v789 = vunpack.c.l.b16 %v724
        %v790 = vunpack.c.h.b16 %v724
        %v791 = vunpack.c.l.b16 %v725
        %v792 = vunpack.c.l.b16 %v726
        %v793 = vunpack.c.h.b16 %v726
        %v794 = vunpack.c.l.b16 %v727
        %v795 = vunpack.c.l.b16 %v728
        %v796 = vunpack.c.h.b16 %v728
        %v797 = vunpack.c.l.b16 %v729
        %v798 = vunpack.c.l.b16 %v730
        %v799 = vunpack.c.h.b16 %v730
        %v800 = vunpack.c.l.b16 %v731
        %v801 = vunpack.c.l.b16 %v732
        %v802 = vunpack.c.h.b16 %v732
        %v803 = vunpack.c.l.b16 %v733
        %v804 = vunpack.c.l.b16 %v734
        %v805 = vunpack.c.h.b16 %v734
        %v806 = vunpack.c.l.b16 %v735
        %v807 = vunpack.c.l.b16 %v736
        %v808 = vunpack.c.h.b16 %v736
        %v809 = vunpack.c.l.b16 %v737
        %v810 = vunpack.c.l.b16 %v738
        %v811 = vunpack.c.h.b16 %v738
        %v812 = vunpack.c.l.b16 %v739
        %v813 = vunpack.c.l.b16 %v740
        %v814 = vunpack.c.h.b16 %v740
        %v815 = vunpack.c.l.b16 %v741
        %v816 = vunpack.c.l.b16 %v742
        %v817 = vunpack.c.h.b16 %v742
        %v818 = vunpack.c.l.b16 %v743
        %v819 = vunpack.c.l.b16 %v744
        %v820 = vunpack.c.h.b16 %v744
        %v821 = vunpack.c.l.b16 %v745
        %v822 = vunpack.c.l.b16 %v746
        %v823 = vunpack.c.h.b16 %v746
        %v824 = vunpack.c.l.b16 %v747
        %v825 = vunpack.c.l.b16 %v748
        %v826 = vunpack.c.h.b16 %v748
        %v827 = vunpack.c.l.b16 %v749
        %v828 = vunpack.c.l.b16 %v750
        %v829 = vunpack.c.h.b16 %v750
        %v830 = vunpack.c.l.b16 %v751
        %v831 = vunpack.c.l.b16 %v752
        %v832 = vunpack.c.h.b16 %v752
        %v833 = vunpack.c.l.b16 %v753
        %v834 = vpack.c.b16 %v789, %v786
        %v835 = vpack.c.b16 %v790, %v787
        %v836 = vpack.c.b16 %v791, %v788
        %v837 = vpack.c.b16 %v795, %v792
        %v838 = vpack.c.b16 %v796, %v793
        %v839 = vpack.c.b16 %v797, %v794
        %v840 = vpack.c.b16 %v801, %v798
        %v841 = vpack.c.b16 %v802, %v799
        %v842 = vpack.c.b16 %v803, %v800
        %v843 = vpack.c.b16 %v807, %v804
        %v844 = vpack.c.b16 %v808, %v805
        %v845 = vpack.c.b16 %v809, %v806
        %v846 = vpack.c.b16 %v813, %v810
        %v847 = vpack.c.b16 %v814, %v811
        %v848 = vpack.c.b16 %v815, %v812
        %v849 = vpack.c.b16 %v819, %v816
        %v850 = vpack.c.b16 %v820, %v817
        %v851 = vpack.c.b16 %v821, %v818
        %v852 = vpack.c.b16 %v825, %v822
        %v853 = vpack.c.b16 %v826, %v823
        %v854 = vpack.c.b16 %v827, %v824
        %v855 = vpack.c.b16 %v831, %v828
        %v856 = vpack.c.b16 %v832, %v829
        %v857 = vpack.c.b16 %v833, %v830
        %882 = vmatprep.subr.bf16.mxu0 %v856
        %883 = vmatpush1.bf16.msra.mxu0 %v855
        %884 = vmatprep.subr.bf16.mxu0 %v853
        %885 = vmatpush1.bf16.msra.mxu0 %v852
        %886 = vmatprep.subr.bf16.mxu0 %v850
        %887 = vmatpush1.bf16.msra.mxu0 %v849
        %888 = vmatprep.subr.bf16.mxu0 %v847
        %889 = vmatpush1.bf16.msra.mxu0 %v846
        %890 = vmatprep.subr.bf16.mxu0 %v844
        %891 = vmatpush1.bf16.msra.mxu0 %v843
        %892 = vmatprep.subr.bf16.mxu0 %v841
        %893 = vmatpush1.bf16.msra.mxu0 %v840
        %894 = vmatprep.subr.bf16.mxu0 %v838
        %895 = vmatpush1.bf16.msra.mxu0 %v837
        %896 = vmatprep.subr.bf16.mxu0 %v835
        %897 = vmatpush1.bf16.msra.mxu0 %v834
        %898 = vmatprep.subr.bf16.mxu0 0
        %899 = vmatpush2.bf16.msra.mxu0 0
        %900 = vmatprep.subr.bf16.mxu0 0
        %901 = vmatpush2.bf16.msra.mxu0 0
        %902 = vmatprep.subr.bf16.mxu0 0
        %903 = vmatpush2.bf16.msra.mxu0 0
        %904 = vmatprep.subr.bf16.mxu0 0
        %905 = vmatpush2.bf16.msra.mxu0 0
        %906 = vmatprep.subr.bf16.mxu0 0
        %907 = vmatpush2.bf16.msra.mxu0 0
        %908 = vmatprep.subr.bf16.mxu0 0
        %909 = vmatpush2.bf16.msra.mxu0 0
        %910 = vmatprep.subr.bf16.mxu0 0
        %911 = vmatpush2.bf16.msra.mxu0 0
        %912 = vmatprep.subr.bf16.mxu0 0
        %913 = vmatpush2.bf16.msra.mxu0 0
        %914 = vmatprep.mubr.bf16.mxu0 0
        %915 = vmatmul.mubr.bf16.gmra.mxu0 %v719
        %v916 = vpop.f32.mrf.mxu0
        %v917 = vadd.f32 0.0, %v916
        %v918 = vpop.f32.mrf.mxu0
        %v919 = vadd.f32 0.0, %v918
        %v920 = vpop.f32.mrf.mxu0
        %v921 = vadd.f32 0.0, %v920
        %v922 = vpop.f32.mrf.mxu0
        %v923 = vadd.f32 0.0, %v922
        %924 = vdwg.mxu0
        %925 = vmatprep.subr.bf16.mxu0 0
        %926 = vmatpush1.bf16.msra.mxu0 %v857
        %927 = vmatprep.subr.bf16.mxu0 0
        %928 = vmatpush1.bf16.msra.mxu0 %v854
        %929 = vmatprep.subr.bf16.mxu0 0
        %930 = vmatpush1.bf16.msra.mxu0 %v851
        %931 = vmatprep.subr.bf16.mxu0 0
        %932 = vmatpush1.bf16.msra.mxu0 %v848
        %933 = vmatprep.subr.bf16.mxu0 0
        %934 = vmatpush1.bf16.msra.mxu0 %v845
        %935 = vmatprep.subr.bf16.mxu0 0
        %936 = vmatpush1.bf16.msra.mxu0 %v842
        %937 = vmatprep.subr.bf16.mxu0 0
        %938 = vmatpush1.bf16.msra.mxu0 %v839
        %939 = vmatprep.subr.bf16.mxu0 0
        %940 = vmatpush1.bf16.msra.mxu0 %v836
        %941 = vmatprep.subr.bf16.mxu0 0
        %942 = vmatpush2.bf16.msra.mxu0 0
        %943 = vmatprep.subr.bf16.mxu0 0
        %944 = vmatpush2.bf16.msra.mxu0 0
        %945 = vmatprep.subr.bf16.mxu0 0
        %946 = vmatpush2.bf16.msra.mxu0 0
        %947 = vmatprep.subr.bf16.mxu0 0
        %948 = vmatpush2.bf16.msra.mxu0 0
        %949 = vmatprep.subr.bf16.mxu0 0
        %950 = vmatpush2.bf16.msra.mxu0 0
        %951 = vmatprep.subr.bf16.mxu0 0
        %952 = vmatpush2.bf16.msra.mxu0 0
        %953 = vmatprep.subr.bf16.mxu0 0
        %954 = vmatpush2.bf16.msra.mxu0 0
        %955 = vmatprep.subr.bf16.mxu0 0
        %956 = vmatpush2.bf16.msra.mxu0 0
        %957 = vmatprep.mubr.bf16.mxu0 0
        %958 = vmatmul.mubr.bf16.gmra.mxu0 %v719
        %v959 = vpop.f32.mrf.mxu0
        %v960 = vadd.f32 0.0, %v959
        %v961 = vpop.f32.mrf.mxu0
        %v962 = vpop.f32.mrf.mxu0
        %v963 = vadd.f32 0.0, %v962
        %v964 = vpop.f32.mrf.mxu0
        %965 = vdwg.mxu0
        %v966 = vlaneseq
        %v967 = vshrl.u32 %v966, 7
        %v968 = vsub.s32 0, %v967
        %v969 = vrot.slane %v720, %v968
        %v970 = vadd.f32 %v917, %v969
        %v971 = vadd.f32 %v921, %v969
        %v972 = vlaneseq
        %v973 = vshrl.u32 %v972, 7
        %v974 = vsub.s32 1, %v973
        %v975 = vrot.slane %v720, %v974
        %v976 = vadd.f32 %v919, %v975
        %v977 = vadd.f32 %v923, %v975
        %v978 = vlaneseq
        %v979 = vshrl.u32 %v978, 7
        %v980 = vsub.s32 2, %v979
        %v981 = vrot.slane %v720, %v980
        %v982 = vadd.f32 %v960, %v981
        %v983 = vadd.f32 %v963, %v981
        %v984 = vlaneseq
        %v985 = vshrl.u32 %v984, 7
        %v986 = vadd.s32 %v985, 8
        %v987 = vadd.s32 %v985, 16
        %v988 = vadd.s32 %v985, 24
        %v989 = vadd.s32 %v985, 32
        %v990 = vadd.s32 %v985, 40
        %v991 = vadd.s32 %v985, 48
        %v992 = vadd.s32 %v985, 56
        %v993 = vshra.s32 %v985, 4
        %v994 = vshra.s32 %v986, 4
        %v995 = vshra.s32 %v987, 4
        %v996 = vshra.s32 %v988, 4
        %v997 = vshra.s32 %v989, 4
        %v998 = vshra.s32 %v990, 4
        %v999 = vshra.s32 %v991, 4
        %v1000 = vshra.s32 %v992, 4
        %v1001 = vlaneseq
        %v1002 = vand.u32 %v1001, 127
        %v1003 = vshra.s32 %v1002, 5
        %vm1004 = vcmp.eq.s32.totalorder %v993, %v1003
        %vm1005 = vcmp.eq.s32.totalorder %v994, %v1003
        %vm1006 = vcmp.eq.s32.totalorder %v995, %v1003
        %vm1007 = vcmp.eq.s32.totalorder %v996, %v1003
        %vm1008 = vcmp.eq.s32.totalorder %v997, %v1003
        %vm1009 = vcmp.eq.s32.totalorder %v998, %v1003
        %vm1010 = vcmp.eq.s32.totalorder %v999, %v1003
        %vm1011 = vcmp.eq.s32.totalorder %v1000, %v1003
        %v1012 = vsel %vm1004, %v976, 0.0
        %v1013 = vsel %vm1005, %v977, 0.0
        %v1014 = vsel %vm1006, %v976, 0.0
        %v1015 = vsel %vm1007, %v977, 0.0
        %v1016 = vsel %vm1008, %v976, 0.0
        %v1017 = vsel %vm1009, %v977, 0.0
        %v1018 = vsel %vm1010, %v976, 0.0
        %v1019 = vsel %vm1011, %v977, 0.0
        %v1020 = vpack.c.bf16 %v1013, %v1012
        %v1021 = vpack.c.bf16 %v1015, %v1014
        %v1022 = vpack.c.bf16 %v1017, %v1016
        %v1023 = vpack.c.bf16 %v1019, %v1018
        %v1024 = vsel %vm1004, %v982, 0.0
        %v1025 = vsel %vm1005, %v983, 0.0
        %v1026 = vsel %vm1006, %v982, 0.0
        %v1027 = vsel %vm1007, %v983, 0.0
        %v1028 = vsel %vm1008, %v982, 0.0
        %v1029 = vsel %vm1009, %v983, 0.0
        %v1030 = vsel %vm1010, %v982, 0.0
        %v1031 = vsel %vm1011, %v983, 0.0
        %v1032 = vpack.c.bf16 %v1025, %v1024
        %v1033 = vpack.c.bf16 %v1027, %v1026
        %v1034 = vpack.c.bf16 %v1029, %v1028
        %v1035 = vpack.c.bf16 %v1031, %v1030
        %v1036 = vpack.c.bf16 %v971, %v970
        %1037 = vmatprep.subr.bf16.mxu0 0
        %1038 = vmatpush1.bf16.xpose.msra.mxu0 0
        %1039 = vmatprep.subr.bf16.mxu0 0
        %1040 = vmatpush1.bf16.xpose.msra.mxu0 0
        %1041 = vmatprep.subr.bf16.mxu0 0
        %1042 = vmatpush1.bf16.xpose.msra.mxu0 0
        %1043 = vmatprep.subr.bf16.mxu0 0
        %1044 = vmatpush1.bf16.xpose.msra.mxu0 0
        %1045 = vmatprep.subr.bf16.mxu0 0
        %1046 = vmatpush1.bf16.xpose.msra.mxu0 %v1023
        %1047 = vmatprep.subr.bf16.mxu0 0
        %1048 = vmatpush1.bf16.xpose.msra.mxu0 %v1022
        %1049 = vmatprep.subr.bf16.mxu0 0
        %1050 = vmatpush1.bf16.xpose.msra.mxu0 %v1021
        %1051 = vmatprep.subr.bf16.mxu0 0
        %1052 = vmatpush1.bf16.xpose.msra.mxu0 %v1020
        %1053 = vmatprep.subr.bf16.mxu0 0
        %1054 = vmatpush2.bf16.xpose.msra.mxu0 0
        %1055 = vmatprep.subr.bf16.mxu0 0
        %1056 = vmatpush2.bf16.xpose.msra.mxu0 0
        %1057 = vmatprep.subr.bf16.mxu0 0
        %1058 = vmatpush2.bf16.xpose.msra.mxu0 0
        %1059 = vmatprep.subr.bf16.mxu0 0
        %1060 = vmatpush2.bf16.xpose.msra.mxu0 0
        %1061 = vmatprep.subr.bf16.mxu0 0
        %1062 = vmatpush2.bf16.xpose.msra.mxu0 0
        %1063 = vmatprep.subr.bf16.mxu0 0
        %1064 = vmatpush2.bf16.xpose.msra.mxu0 0
        %1065 = vmatprep.subr.bf16.mxu0 0
        %1066 = vmatpush2.bf16.xpose.msra.mxu0 0
        %1067 = vmatprep.subr.bf16.mxu0 0
        %1068 = vmatpush2.bf16.xpose.msra.mxu0 0
        %1069 = vmatprep.mubr.bf16.mxu0 0
        %1070 = vmatmul.mubr.bf16.gmra.mxu0 %v1036
        %v1071 = vpop.f32.mrf.mxu0
        %v1072 = vadd.f32 0.0, %v1071
        %v1073 = vpop.f32.mrf.mxu0
        %v1074 = vpop.f32.mrf.mxu0
        %v1075 = vadd.f32 0.0, %v1074
        %v1076 = vpop.f32.mrf.mxu0
        %1077 = vdwg.mxu0
        %v1078 = vmul.f32 %v1072, 0.17677669
        %v1079 = vmul.f32 %v1075, 0.17677669
        %v1080 = vshra.s32 %v985, 3
        %v1081 = vshra.s32 %v986, 3
        %v1082 = vand.u32 %v1002, 15
        %v1083 = vshra.s32 %v1082, 3
        %vm1084 = vcmp.eq.s32.totalorder %v1080, %v1083
        %vm1085 = vcmp.eq.s32.totalorder %v1081, %v1083
        %v1086 = vsel %vm1084, %v1078, -1e+30
        %v1087 = vsel %vm1085, %v1079, -1e+30
        %vm1088 = vcmask 523264
        %v1089 = vsel %vm1088, %v1086, -inf
        %1090 = vmax.xlane.f32.xlu0 %v1089
        %v1091 = vpop.xlane.xlu0 %1090
        %v1092 = vsel %vm1088, %v1087, -inf
        %1093 = vmax.xlane.f32.xlu0 %v1092
        %v1094 = vpop.xlane.xlu0 %1093
        %v1095 = vsub.f32 %v1086, %v1091
        %v1096 = vsub.f32 %v1087, %v1094
        %v1097 = vmul.f32 %v1095, 1.442695
        %v1098 = vpow.pop %v1097
        %v1099 = vmul.f32 %v1096, 1.442695
        %v1100 = vpow.pop %v1099
        %v1101 = vsel %vm1004, 1, 0
        %v1102 = vsel %vm1005, 1, 0
        %v1103 = vsel %vm1006, 1, 0
        %v1104 = vsel %vm1007, 1, 0
        %v1105 = vsel %vm1008, 1, 0
        %v1106 = vsel %vm1009, 1, 0
        %v1107 = vsel %vm1010, 1, 0
        %v1108 = vsel %vm1011, 1, 0
        %v1109 = vcvt.s32.f32 %v1101
        %v1110 = vcvt.s32.f32 %v1102
        %v1111 = vcvt.s32.f32 %v1103
        %v1112 = vcvt.s32.f32 %v1104
        %v1113 = vcvt.s32.f32 %v1105
        %v1114 = vcvt.s32.f32 %v1106
        %v1115 = vcvt.s32.f32 %v1107
        %v1116 = vcvt.s32.f32 %v1108
        %v1118 = vsel %vm1088, %v1098, 0
        %v1121 = vsel %vm1088, %v1100, 0
        %1123 = vmatprep.subr.mxu0 0.0
        %1124 = vmatpush1.msra.mxu0 0.0
        %1125 = vmatprep.subr.mxu0 0.0
        %1126 = vmatpush1.msra.mxu0 0.0
        %1127 = vmatprep.subr.mxu0 0.0
        %1128 = vmatpush1.msra.mxu0 0.0
        %1129 = vmatprep.subr.mxu0 0.0
        %1130 = vmatpush1.msra.mxu0 0.0
        %1131 = vmatprep.subr.mxu0 0.0
        %1132 = vmatpush1.msra.mxu0 0.0
        %1133 = vmatprep.subr.mxu0 0.0
        %1134 = vmatpush1.msra.mxu0 0.0
        %1135 = vmatprep.subr.mxu0 0.0
        %1136 = vmatpush1.msra.mxu0 0.0
        %1137 = vmatprep.subr.mxu0 0.0
        %1138 = vmatpush1.msra.mxu0 0.0
        %1139 = vmatprep.subr.mxu0 0.0
        %1140 = vmatpush1.msra.mxu0 %v1116
        %1141 = vmatprep.subr.mxu0 0.0
        %1142 = vmatpush1.msra.mxu0 %v1115
        %1143 = vmatprep.subr.mxu0 0.0
        %1144 = vmatpush1.msra.mxu0 %v1114
        %1145 = vmatprep.subr.mxu0 0.0
        %1146 = vmatpush1.msra.mxu0 %v1113
        %1147 = vmatprep.subr.mxu0 0.0
        %1148 = vmatpush1.msra.mxu0 %v1112
        %1149 = vmatprep.subr.mxu0 0.0
        %1150 = vmatpush1.msra.mxu0 %v1111
        %1151 = vmatprep.subr.mxu0 0.0
        %1152 = vmatpush1.msra.mxu0 %v1110
        %1153 = vmatprep.subr.mxu0 0.0
        %1154 = vmatpush1.msra.mxu0 %v1109
        %1155 = vmatprep.subr.mxu0 0.0
        %1156 = vmatpush2.msra.mxu0 0.0
        %1157 = vmatprep.subr.mxu0 0.0
        %1158 = vmatpush2.msra.mxu0 0.0
        %1159 = vmatprep.subr.mxu0 0.0
        %1160 = vmatpush2.msra.mxu0 0.0
        %1161 = vmatprep.subr.mxu0 0.0
        %1162 = vmatpush2.msra.mxu0 0.0
        %1163 = vmatprep.subr.mxu0 0.0
        %1164 = vmatpush2.msra.mxu0 0.0
        %1165 = vmatprep.subr.mxu0 0.0
        %1166 = vmatpush2.msra.mxu0 0.0
        %1167 = vmatprep.subr.mxu0 0.0
        %1168 = vmatpush2.msra.mxu0 0.0
        %1169 = vmatprep.subr.mxu0 0.0
        %1170 = vmatpush2.msra.mxu0 0.0
        %1171 = vmatprep.subr.mxu0 0.0
        %1172 = vmatpush2.msra.mxu0 0.0
        %1173 = vmatprep.subr.mxu0 0.0
        %1174 = vmatpush2.msra.mxu0 0.0
        %1175 = vmatprep.subr.mxu0 0.0
        %1176 = vmatpush2.msra.mxu0 0.0
        %1177 = vmatprep.subr.mxu0 0.0
        %1178 = vmatpush2.msra.mxu0 0.0
        %1179 = vmatprep.subr.mxu0 0.0
        %1180 = vmatpush2.msra.mxu0 0.0
        %1181 = vmatprep.subr.mxu0 0.0
        %1182 = vmatpush2.msra.mxu0 0.0
        %1183 = vmatprep.subr.mxu0 0.0
        %1184 = vmatpush2.msra.mxu0 0.0
        %1185 = vmatprep.subr.mxu0 0.0
        %1186 = vmatpush2.msra.mxu0 0.0
        %1187 = vmatprep.mubr.f32.mxu0 0.0
        %1188 = vmatmul.mubr.f32.gmra.mxu0 %v1118
        %v1189 = vpop.f32.mrf.mxu0
        %v1190 = vadd.f32 0.0, %v1189
        %v1191 = vpop.f32.mrf.mxu0
        %1192 = vmatprep.mubr.f32.mxu0 0.0
        %1193 = vmatmul.mubr.f32.gmra.mxu0 %v1121
        %v1194 = vpop.f32.mrf.mxu0
        %v1195 = vadd.f32 0.0, %v1194
        %v1196 = vpop.f32.mrf.mxu0
        %1197 = vdwg.mxu0
        %v1198 = vpack.c.bf16 %v1100, %v1098
        %v1200 = vsel %vm1088, %v1198, 0
        %1202 = vmatprep.subr.bf16.mxu0 0
        %1203 = vmatpush1.bf16.msra.mxu0 0
        %1204 = vmatprep.subr.bf16.mxu0 0
        %1205 = vmatpush1.bf16.msra.mxu0 0
        %1206 = vmatprep.subr.bf16.mxu0 0
        %1207 = vmatpush1.bf16.msra.mxu0 0
        %1208 = vmatprep.subr.bf16.mxu0 0
        %1209 = vmatpush1.bf16.msra.mxu0 0
        %1210 = vmatprep.subr.bf16.mxu0 0
        %1211 = vmatpush1.bf16.msra.mxu0 %v1035
        %1212 = vmatprep.subr.bf16.mxu0 0
        %1213 = vmatpush1.bf16.msra.mxu0 %v1034
        %1214 = vmatprep.subr.bf16.mxu0 0
        %1215 = vmatpush1.bf16.msra.mxu0 %v1033
        %1216 = vmatprep.subr.bf16.mxu0 0
        %1217 = vmatpush1.bf16.msra.mxu0 %v1032
        %1218 = vmatprep.subr.bf16.mxu0 0
        %1219 = vmatpush2.bf16.msra.mxu0 0
        %1220 = vmatprep.subr.bf16.mxu0 0
        %1221 = vmatpush2.bf16.msra.mxu0 0
        %1222 = vmatprep.subr.bf16.mxu0 0
        %1223 = vmatpush2.bf16.msra.mxu0 0
        %1224 = vmatprep.subr.bf16.mxu0 0
        %1225 = vmatpush2.bf16.msra.mxu0 0
        %1226 = vmatprep.subr.bf16.mxu0 0
        %1227 = vmatpush2.bf16.msra.mxu0 0
        %1228 = vmatprep.subr.bf16.mxu0 0
        %1229 = vmatpush2.bf16.msra.mxu0 0
        %1230 = vmatprep.subr.bf16.mxu0 0
        %1231 = vmatpush2.bf16.msra.mxu0 0
        %1232 = vmatprep.subr.bf16.mxu0 0
        %1233 = vmatpush2.bf16.msra.mxu0 0
        %1234 = vmatprep.mubr.bf16.mxu0 0
        %1235 = vmatmul.mubr.bf16.gmra.mxu0 %v1200
        %v1236 = vpop.f32.mrf.mxu0
        %v1237 = vadd.f32 0.0, %v1236
        %v1238 = vpop.f32.mrf.mxu0
        %v1239 = vpop.f32.mrf.mxu0
        %v1240 = vadd.f32 0.0, %v1239
        %v1241 = vpop.f32.mrf.mxu0
        %1242 = vdwg.mxu0
        %v1243 = vrcp.pop %v1190
        %v1244 = vrcp.pop %v1195
        %v1245 = vmul.f32 %v1237, %v1243
        %v1246 = vmul.f32 %v1240, %v1244
        %v1247 = vpack.c.bf16 %v1246, %v1245
        %v1248 = vld [vmem:[%s483] sm:$0xf]
        %v1249 = vld [vmem:[%s483 + $0x4] sm:$0xf]
        %v1250 = vld [vmem:[%s483 + $0x8] sm:$0xf]
        %v1251 = vld [vmem:[%s483 + $0xc] sm:$0xf]
        %v1252 = vld [vmem:[%s483 + $0x10] sm:$0xf]
        %v1253 = vld [vmem:[%s483 + $0x14] sm:$0xf]
        %v1254 = vld [vmem:[%s483 + $0x18] sm:$0xf]
        %v1255 = vld [vmem:[%s483 + $0x1c] sm:$0xf]
        %v1256 = vld [vmem:[%s483 + $0x20] sm:$0xf]
        %v1257 = vld [vmem:[%s483 + $0x24] sm:$0xf]
        %v1258 = vld [vmem:[%s483 + $0x28] sm:$0xf]
        %v1259 = vld [vmem:[%s483 + $0x2c] sm:$0xf]
        %v1260 = vld [vmem:[%s483 + $0x30] sm:$0xf]
        %v1261 = vld [vmem:[%s483 + $0x34] sm:$0xf]
        %v1262 = vld [vmem:[%s483 + $0x38] sm:$0xf]
        %v1263 = vld [vmem:[%s483 + $0x3c] sm:$0xf]
        %v1264 = vlaneseq
        %v1265 = vshrl.u32 %v1264, 7
        %v1266 = vsub.s32 3, %v1265
        %v1267 = vrot.slane %v720, %v1266
        %v1284 = vunpack.c.l.b16 %v1248
        %v1285 = vunpack.c.l.b16 %v1249
        %v1286 = vunpack.c.l.b16 %v1250
        %v1287 = vunpack.c.l.b16 %v1251
        %v1288 = vunpack.c.l.b16 %v1252
        %v1289 = vunpack.c.l.b16 %v1253
        %v1290 = vunpack.c.l.b16 %v1254
        %v1291 = vunpack.c.l.b16 %v1255
        %v1292 = vunpack.c.l.b16 %v1256
        %v1293 = vunpack.c.l.b16 %v1257
        %v1294 = vunpack.c.l.b16 %v1258
        %v1295 = vunpack.c.l.b16 %v1259
        %v1296 = vunpack.c.l.b16 %v1260
        %v1297 = vunpack.c.l.b16 %v1261
        %v1298 = vunpack.c.l.b16 %v1262
        %v1299 = vunpack.c.l.b16 %v1263
        %v1300 = vpack.c.b16 %v1285, %v1284
        %v1301 = vpack.c.b16 %v1287, %v1286
        %v1302 = vpack.c.b16 %v1289, %v1288
        %v1303 = vpack.c.b16 %v1291, %v1290
        %v1304 = vpack.c.b16 %v1293, %v1292
        %v1305 = vpack.c.b16 %v1295, %v1294
        %v1306 = vpack.c.b16 %v1297, %v1296
        %v1307 = vpack.c.b16 %v1299, %v1298
        %1316 = vmatprep.subr.bf16.mxu0 0
        %1317 = vmatpush1.bf16.msra.mxu0 %v1307
        %1318 = vmatprep.subr.bf16.mxu0 0
        %1319 = vmatpush1.bf16.msra.mxu0 %v1306
        %1320 = vmatprep.subr.bf16.mxu0 0
        %1321 = vmatpush1.bf16.msra.mxu0 %v1305
        %1322 = vmatprep.subr.bf16.mxu0 0
        %1323 = vmatpush1.bf16.msra.mxu0 %v1304
        %1324 = vmatprep.subr.bf16.mxu0 0
        %1325 = vmatpush1.bf16.msra.mxu0 %v1303
        %1326 = vmatprep.subr.bf16.mxu0 0
        %1327 = vmatpush1.bf16.msra.mxu0 %v1302
        %1328 = vmatprep.subr.bf16.mxu0 0
        %1329 = vmatpush1.bf16.msra.mxu0 %v1301
        %1330 = vmatprep.subr.bf16.mxu0 0
        %1331 = vmatpush1.bf16.msra.mxu0 %v1300
        %1332 = vmatprep.subr.bf16.mxu0 0
        %1333 = vmatpush2.bf16.msra.mxu0 0
        %1334 = vmatprep.subr.bf16.mxu0 0
        %1335 = vmatpush2.bf16.msra.mxu0 0
        %1336 = vmatprep.subr.bf16.mxu0 0
        %1337 = vmatpush2.bf16.msra.mxu0 0
        %1338 = vmatprep.subr.bf16.mxu0 0
        %1339 = vmatpush2.bf16.msra.mxu0 0
        %1340 = vmatprep.subr.bf16.mxu0 0
        %1341 = vmatpush2.bf16.msra.mxu0 0
        %1342 = vmatprep.subr.bf16.mxu0 0
        %1343 = vmatpush2.bf16.msra.mxu0 0
        %1344 = vmatprep.subr.bf16.mxu0 0
        %1345 = vmatpush2.bf16.msra.mxu0 0
        %1346 = vmatprep.subr.bf16.mxu0 0
        %1347 = vmatpush2.bf16.msra.mxu0 0
        %1348 = vmatprep.mubr.bf16.mxu0 0
        %1349 = vmatmul.mubr.bf16.gmra.mxu0 %v1247
        %v1350 = vpop.f32.mrf.mxu0
        %v1351 = vadd.f32 %v1267, %v1350
        %v1352 = vpop.f32.mrf.mxu0
        %v1353 = vpop.f32.mrf.mxu0
        %v1354 = vadd.f32 %v1267, %v1353
        %v1355 = vpop.f32.mrf.mxu0
        %1356 = vdwg.mxu0
        %v1357 = vadd.f32 %v717, %v1351
        %v1358 = vadd.f32 %v718, %v1354
        %1359 = vadd.xlane.f32.xlu0 %v1357
        %v1360 = vpop.xlane.xlu0 %1359
        %1361 = vadd.xlane.f32.xlu0 %v1358
        %v1362 = vpop.xlane.xlu0 %1361
        %v1363 = vrcp.pop 128.0
        %v1364 = vmul.f32 %v1360, %v1363
        %v1365 = vmul.f32 %v1362, %v1363
        %v1366 = vsub.f32 %v1357, %v1364
        %v1367 = vsub.f32 %v1358, %v1365
        %v1368 = vmul.f32 %v1366, %v1366
        %v1369 = vmul.f32 %v1367, %v1367
        %1370 = vadd.xlane.f32.xlu0 %v1368
        %v1371 = vpop.xlane.xlu0 %1370
        %1372 = vadd.xlane.f32.xlu0 %v1369
        %v1373 = vpop.xlane.xlu0 %1372
        %v1374 = vmul.f32 %v1371, %v1363
        %v1375 = vmul.f32 %v1373, %v1363
        %v1376 = vadd.f32 %v1374, 1e-05
        %v1377 = vadd.f32 %v1375, 1e-05
        %v1378 = vrsqrt.pop %v1376
        %v1379 = vrsqrt.pop %v1377
        %v1380 = vmul.f32 %v1366, %v1378
        %v1381 = vmul.f32 %v1367, %v1379
        %v1382 = vlaneseq
        %v1383 = vshrl.u32 %v1382, 7
        %v1384 = vsub.s32 4, %v1383
        %v1385 = vrot.slane %v720, %v1384
        %v1386 = vmul.f32 %v1380, %v1385
        %v1387 = vmul.f32 %v1381, %v1385
        %v1388 = vlaneseq
        %v1389 = vshrl.u32 %v1388, 7
        %v1390 = vsub.s32 5, %v1389
        %v1391 = vrot.slane %v720, %v1390
        %v1392 = vadd.f32 %v1386, %v1391
        %v1393 = vadd.f32 %v1387, %v1391
        %v1394 = vpack.c.bf16 %v1393, %v1392
        %v1395 = vld [vmem:[%s492] sm:$0xff]
        %v1396 = vld [vmem:[%s492 + $0x8] sm:$0xff]
        %v1397 = vld [vmem:[%s492 + $0x10] sm:$0xff]
        %v1398 = vld [vmem:[%s492 + $0x18] sm:$0xff]
        %v1399 = vld [vmem:[%s492 + $0x20] sm:$0xff]
        %v1400 = vld [vmem:[%s492 + $0x28] sm:$0xff]
        %v1401 = vld [vmem:[%s492 + $0x30] sm:$0xff]
        %v1402 = vld [vmem:[%s492 + $0x38] sm:$0xff]
        %v1403 = vld [vmem:[%s492 + $0x40] sm:$0xff]
        %v1404 = vld [vmem:[%s492 + $0x48] sm:$0xff]
        %v1405 = vld [vmem:[%s492 + $0x50] sm:$0xff]
        %v1406 = vld [vmem:[%s492 + $0x58] sm:$0xff]
        %v1407 = vld [vmem:[%s492 + $0x60] sm:$0xff]
        %v1408 = vld [vmem:[%s492 + $0x68] sm:$0xff]
        %v1409 = vld [vmem:[%s492 + $0x70] sm:$0xff]
        %v1410 = vld [vmem:[%s492 + $0x78] sm:$0xff]
        %v1411 = vld [vmem:[%s492 + $0x80] sm:$0xff]
        %v1412 = vld [vmem:[%s492 + $0x88] sm:$0xff]
        %v1413 = vld [vmem:[%s492 + $0x90] sm:$0xff]
        %v1414 = vld [vmem:[%s492 + $0x98] sm:$0xff]
        %v1415 = vld [vmem:[%s492 + $0xa0] sm:$0xff]
        %v1416 = vld [vmem:[%s492 + $0xa8] sm:$0xff]
        %v1417 = vld [vmem:[%s492 + $0xb0] sm:$0xff]
        %v1418 = vld [vmem:[%s492 + $0xb8] sm:$0xff]
        %v1419 = vld [vmem:[%s492 + $0xc0] sm:$0xff]
        %v1420 = vld [vmem:[%s492 + $0xc8] sm:$0xff]
        %v1421 = vld [vmem:[%s492 + $0xd0] sm:$0xff]
        %v1422 = vld [vmem:[%s492 + $0xd8] sm:$0xff]
        %v1423 = vld [vmem:[%s492 + $0xe0] sm:$0xff]
        %v1424 = vld [vmem:[%s492 + $0xe8] sm:$0xff]
        %v1425 = vld [vmem:[%s492 + $0xf0] sm:$0xff]
        %v1426 = vld [vmem:[%s492 + $0xf8] sm:$0xff]
        %v1427 = vld [vmem:[%s492 + $0x100] sm:$0xff]
        %v1428 = vld [vmem:[%s492 + $0x108] sm:$0xff]
        %v1429 = vld [vmem:[%s492 + $0x110] sm:$0xff]
        %v1430 = vld [vmem:[%s492 + $0x118] sm:$0xff]
        %v1431 = vld [vmem:[%s492 + $0x120] sm:$0xff]
        %v1432 = vld [vmem:[%s492 + $0x128] sm:$0xff]
        %v1433 = vld [vmem:[%s492 + $0x130] sm:$0xff]
        %v1434 = vld [vmem:[%s492 + $0x138] sm:$0xff]
        %v1435 = vld [vmem:[%s492 + $0x140] sm:$0xff]
        %v1436 = vld [vmem:[%s492 + $0x148] sm:$0xff]
        %v1437 = vld [vmem:[%s492 + $0x150] sm:$0xff]
        %v1438 = vld [vmem:[%s492 + $0x158] sm:$0xff]
        %v1439 = vld [vmem:[%s492 + $0x160] sm:$0xff]
        %v1440 = vld [vmem:[%s492 + $0x168] sm:$0xff]
        %v1441 = vld [vmem:[%s492 + $0x170] sm:$0xff]
        %v1442 = vld [vmem:[%s492 + $0x178] sm:$0xff]
        %v1443 = vld [vmem:[%s492 + $0x180] sm:$0xff]
        %v1444 = vld [vmem:[%s492 + $0x188] sm:$0xff]
        %v1445 = vld [vmem:[%s492 + $0x190] sm:$0xff]
        %v1446 = vld [vmem:[%s492 + $0x198] sm:$0xff]
        %v1447 = vld [vmem:[%s492 + $0x1a0] sm:$0xff]
        %v1448 = vld [vmem:[%s492 + $0x1a8] sm:$0xff]
        %v1449 = vld [vmem:[%s492 + $0x1b0] sm:$0xff]
        %v1450 = vld [vmem:[%s492 + $0x1b8] sm:$0xff]
        %v1451 = vld [vmem:[%s492 + $0x1c0] sm:$0xff]
        %v1452 = vld [vmem:[%s492 + $0x1c8] sm:$0xff]
        %v1453 = vld [vmem:[%s492 + $0x1d0] sm:$0xff]
        %v1454 = vld [vmem:[%s492 + $0x1d8] sm:$0xff]
        %v1455 = vld [vmem:[%s492 + $0x1e0] sm:$0xff]
        %v1456 = vld [vmem:[%s492 + $0x1e8] sm:$0xff]
        %v1457 = vld [vmem:[%s492 + $0x1f0] sm:$0xff]
        %v1458 = vld [vmem:[%s492 + $0x1f8] sm:$0xff]
        %v1459 = vld [vmem:[%s492 + $0x200] sm:$0xff]
        %v1460 = vld [vmem:[%s492 + $0x208] sm:$0xff]
        %v1461 = vld [vmem:[%s492 + $0x210] sm:$0xff]
        %v1462 = vld [vmem:[%s492 + $0x218] sm:$0xff]
        %v1463 = vld [vmem:[%s492 + $0x220] sm:$0xff]
        %v1464 = vld [vmem:[%s492 + $0x228] sm:$0xff]
        %v1465 = vld [vmem:[%s492 + $0x230] sm:$0xff]
        %v1466 = vld [vmem:[%s492 + $0x238] sm:$0xff]
        %v1467 = vld [vmem:[%s492 + $0x240] sm:$0xff]
        %v1468 = vld [vmem:[%s492 + $0x248] sm:$0xff]
        %v1469 = vld [vmem:[%s492 + $0x250] sm:$0xff]
        %v1470 = vld [vmem:[%s492 + $0x258] sm:$0xff]
        %v1471 = vld [vmem:[%s492 + $0x260] sm:$0xff]
        %v1472 = vld [vmem:[%s492 + $0x268] sm:$0xff]
        %v1473 = vld [vmem:[%s492 + $0x270] sm:$0xff]
        %v1474 = vld [vmem:[%s492 + $0x278] sm:$0xff]
        %v1475 = vld [vmem:[%s492 + $0x280] sm:$0xff]
        %v1476 = vld [vmem:[%s492 + $0x288] sm:$0xff]
        %v1477 = vld [vmem:[%s492 + $0x290] sm:$0xff]
        %v1478 = vld [vmem:[%s492 + $0x298] sm:$0xff]
        %v1479 = vld [vmem:[%s492 + $0x2a0] sm:$0xff]
        %v1480 = vld [vmem:[%s492 + $0x2a8] sm:$0xff]
        %v1481 = vld [vmem:[%s492 + $0x2b0] sm:$0xff]
        %v1482 = vld [vmem:[%s492 + $0x2b8] sm:$0xff]
        %v1483 = vld [vmem:[%s492 + $0x2c0] sm:$0xff]
        %v1484 = vld [vmem:[%s492 + $0x2c8] sm:$0xff]
        %v1485 = vld [vmem:[%s492 + $0x2d0] sm:$0xff]
        %v1486 = vld [vmem:[%s492 + $0x2d8] sm:$0xff]
        %v1487 = vld [vmem:[%s492 + $0x2e0] sm:$0xff]
        %v1488 = vld [vmem:[%s492 + $0x2e8] sm:$0xff]
        %v1489 = vld [vmem:[%s492 + $0x2f0] sm:$0xff]
        %v1490 = vld [vmem:[%s492 + $0x2f8] sm:$0xff]
        %v1491 = vld [vmem:[%s492 + $0x300] sm:$0xff]
        %v1492 = vld [vmem:[%s492 + $0x308] sm:$0xff]
        %v1493 = vld [vmem:[%s492 + $0x310] sm:$0xff]
        %v1494 = vld [vmem:[%s492 + $0x318] sm:$0xff]
        %v1495 = vld [vmem:[%s492 + $0x320] sm:$0xff]
        %v1496 = vld [vmem:[%s492 + $0x328] sm:$0xff]
        %v1497 = vld [vmem:[%s492 + $0x330] sm:$0xff]
        %v1498 = vld [vmem:[%s492 + $0x338] sm:$0xff]
        %v1499 = vld [vmem:[%s492 + $0x340] sm:$0xff]
        %v1500 = vld [vmem:[%s492 + $0x348] sm:$0xff]
        %v1501 = vld [vmem:[%s492 + $0x350] sm:$0xff]
        %v1502 = vld [vmem:[%s492 + $0x358] sm:$0xff]
        %v1503 = vld [vmem:[%s492 + $0x360] sm:$0xff]
        %v1504 = vld [vmem:[%s492 + $0x368] sm:$0xff]
        %v1505 = vld [vmem:[%s492 + $0x370] sm:$0xff]
        %v1506 = vld [vmem:[%s492 + $0x378] sm:$0xff]
        %v1507 = vld [vmem:[%s492 + $0x380] sm:$0xff]
        %v1508 = vld [vmem:[%s492 + $0x388] sm:$0xff]
        %v1509 = vld [vmem:[%s492 + $0x390] sm:$0xff]
        %v1510 = vld [vmem:[%s492 + $0x398] sm:$0xff]
        %v1511 = vld [vmem:[%s492 + $0x3a0] sm:$0xff]
        %v1512 = vld [vmem:[%s492 + $0x3a8] sm:$0xff]
        %v1513 = vld [vmem:[%s492 + $0x3b0] sm:$0xff]
        %v1514 = vld [vmem:[%s492 + $0x3b8] sm:$0xff]
        %v1515 = vld [vmem:[%s492 + $0x3c0] sm:$0xff]
        %v1516 = vld [vmem:[%s492 + $0x3c8] sm:$0xff]
        %v1517 = vld [vmem:[%s492 + $0x3d0] sm:$0xff]
        %v1518 = vld [vmem:[%s492 + $0x3d8] sm:$0xff]
        %v1519 = vld [vmem:[%s492 + $0x3e0] sm:$0xff]
        %v1520 = vld [vmem:[%s492 + $0x3e8] sm:$0xff]
        %v1521 = vld [vmem:[%s492 + $0x3f0] sm:$0xff]
        %v1522 = vld [vmem:[%s492 + $0x3f8] sm:$0xff]
        %v1523 = vld [vmem:[%s510] sm:$0xff]
        %v1524 = vld [vmem:[%s510 + $0x8] sm:$0xff]
        %v1527 = vlaneseq
        %v1528 = vshrl.u32 %v1527, 7
        %v1529 = vsub.s32 0, %v1528
        %v1530 = vrot.slane %v1523, %v1529
        %v1531 = vlaneseq
        %v1532 = vshrl.u32 %v1531, 7
        %v1533 = vsub.s32 1, %v1532
        %v1534 = vrot.slane %v1523, %v1533
        %v1535 = vlaneseq
        %v1536 = vshrl.u32 %v1535, 7
        %v1537 = vsub.s32 2, %v1536
        %v1538 = vrot.slane %v1523, %v1537
        %v1539 = vlaneseq
        %v1540 = vshrl.u32 %v1539, 7
        %v1541 = vsub.s32 3, %v1540
        %v1542 = vrot.slane %v1523, %v1541
        %v1543 = vlaneseq
        %v1544 = vshrl.u32 %v1543, 7
        %v1545 = vsub.s32 4, %v1544
        %v1546 = vrot.slane %v1523, %v1545
        %v1547 = vlaneseq
        %v1548 = vshrl.u32 %v1547, 7
        %v1549 = vsub.s32 5, %v1548
        %v1550 = vrot.slane %v1523, %v1549
        %v1551 = vlaneseq
        %v1552 = vshrl.u32 %v1551, 7
        %v1553 = vsub.s32 6, %v1552
        %v1554 = vrot.slane %v1523, %v1553
        %v1555 = vlaneseq
        %v1556 = vshrl.u32 %v1555, 7
        %v1557 = vsub.s32 7, %v1556
        %v1558 = vrot.slane %v1523, %v1557
        %v1559 = vlaneseq
        %v1560 = vshrl.u32 %v1559, 7
        %v1561 = vsub.s32 0, %v1560
        %v1562 = vrot.slane %v1524, %v1561
        %v1563 = vlaneseq
        %v1564 = vshrl.u32 %v1563, 7
        %v1565 = vsub.s32 1, %v1564
        %v1566 = vrot.slane %v1524, %v1565
        %v1567 = vlaneseq
        %v1568 = vshrl.u32 %v1567, 7
        %v1569 = vsub.s32 2, %v1568
        %v1570 = vrot.slane %v1524, %v1569
        %v1571 = vlaneseq
        %v1572 = vshrl.u32 %v1571, 7
        %v1573 = vsub.s32 3, %v1572
        %v1574 = vrot.slane %v1524, %v1573
        %v1575 = vlaneseq
        %v1576 = vshrl.u32 %v1575, 7
        %v1577 = vsub.s32 4, %v1576
        %v1578 = vrot.slane %v1524, %v1577
        %v1579 = vlaneseq
        %v1580 = vshrl.u32 %v1579, 7
        %v1581 = vsub.s32 5, %v1580
        %v1582 = vrot.slane %v1524, %v1581
        %v1583 = vlaneseq
        %v1584 = vshrl.u32 %v1583, 7
        %v1585 = vsub.s32 6, %v1584
        %v1586 = vrot.slane %v1524, %v1585
        %v1587 = vlaneseq
        %v1588 = vshrl.u32 %v1587, 7
        %v1589 = vsub.s32 7, %v1588
        %v1590 = vrot.slane %v1524, %v1589
        %v1735 = vunpack.c.l.b16 %v1395
        %v1736 = vunpack.c.h.b16 %v1395
        %v1737 = vunpack.c.l.b16 %v1396
        %v1738 = vunpack.c.h.b16 %v1396
        %v1739 = vunpack.c.l.b16 %v1397
        %v1740 = vunpack.c.h.b16 %v1397
        %v1741 = vunpack.c.l.b16 %v1398
        %v1742 = vunpack.c.h.b16 %v1398
        %v1743 = vunpack.c.l.b16 %v1399
        %v1744 = vunpack.c.h.b16 %v1399
        %v1745 = vunpack.c.l.b16 %v1400
        %v1746 = vunpack.c.h.b16 %v1400
        %v1747 = vunpack.c.l.b16 %v1401
        %v1748 = vunpack.c.h.b16 %v1401
        %v1749 = vunpack.c.l.b16 %v1402
        %v1750 = vunpack.c.h.b16 %v1402
        %v1751 = vunpack.c.l.b16 %v1403
        %v1752 = vunpack.c.h.b16 %v1403
        %v1753 = vunpack.c.l.b16 %v1404
        %v1754 = vunpack.c.h.b16 %v1404
        %v1755 = vunpack.c.l.b16 %v1405
        %v1756 = vunpack.c.h.b16 %v1405
        %v1757 = vunpack.c.l.b16 %v1406
        %v1758 = vunpack.c.h.b16 %v1406
        %v1759 = vunpack.c.l.b16 %v1407
        %v1760 = vunpack.c.h.b16 %v1407
        %v1761 = vunpack.c.l.b16 %v1408
        %v1762 = vunpack.c.h.b16 %v1408
        %v1763 = vunpack.c.l.b16 %v1409
        %v1764 = vunpack.c.h.b16 %v1409
        %v1765 = vunpack.c.l.b16 %v1410
        %v1766 = vunpack.c.h.b16 %v1410
        %v1767 = vunpack.c.l.b16 %v1411
        %v1768 = vunpack.c.h.b16 %v1411
        %v1769 = vunpack.c.l.b16 %v1412
        %v1770 = vunpack.c.h.b16 %v1412
        %v1771 = vunpack.c.l.b16 %v1413
        %v1772 = vunpack.c.h.b16 %v1413
        %v1773 = vunpack.c.l.b16 %v1414
        %v1774 = vunpack.c.h.b16 %v1414
        %v1775 = vunpack.c.l.b16 %v1415
        %v1776 = vunpack.c.h.b16 %v1415
        %v1777 = vunpack.c.l.b16 %v1416
        %v1778 = vunpack.c.h.b16 %v1416
        %v1779 = vunpack.c.l.b16 %v1417
        %v1780 = vunpack.c.h.b16 %v1417
        %v1781 = vunpack.c.l.b16 %v1418
        %v1782 = vunpack.c.h.b16 %v1418
        %v1783 = vunpack.c.l.b16 %v1419
        %v1784 = vunpack.c.h.b16 %v1419
        %v1785 = vunpack.c.l.b16 %v1420
        %v1786 = vunpack.c.h.b16 %v1420
        %v1787 = vunpack.c.l.b16 %v1421
        %v1788 = vunpack.c.h.b16 %v1421
        %v1789 = vunpack.c.l.b16 %v1422
        %v1790 = vunpack.c.h.b16 %v1422
        %v1791 = vunpack.c.l.b16 %v1423
        %v1792 = vunpack.c.h.b16 %v1423
        %v1793 = vunpack.c.l.b16 %v1424
        %v1794 = vunpack.c.h.b16 %v1424
        %v1795 = vunpack.c.l.b16 %v1425
        %v1796 = vunpack.c.h.b16 %v1425
        %v1797 = vunpack.c.l.b16 %v1426
        %v1798 = vunpack.c.h.b16 %v1426
        %v1799 = vunpack.c.l.b16 %v1427
        %v1800 = vunpack.c.h.b16 %v1427
        %v1801 = vunpack.c.l.b16 %v1428
        %v1802 = vunpack.c.h.b16 %v1428
        %v1803 = vunpack.c.l.b16 %v1429
        %v1804 = vunpack.c.h.b16 %v1429
        %v1805 = vunpack.c.l.b16 %v1430
        %v1806 = vunpack.c.h.b16 %v1430
        %v1807 = vunpack.c.l.b16 %v1431
        %v1808 = vunpack.c.h.b16 %v1431
        %v1809 = vunpack.c.l.b16 %v1432
        %v1810 = vunpack.c.h.b16 %v1432
        %v1811 = vunpack.c.l.b16 %v1433
        %v1812 = vunpack.c.h.b16 %v1433
        %v1813 = vunpack.c.l.b16 %v1434
        %v1814 = vunpack.c.h.b16 %v1434
        %v1815 = vunpack.c.l.b16 %v1435
        %v1816 = vunpack.c.h.b16 %v1435
        %v1817 = vunpack.c.l.b16 %v1436
        %v1818 = vunpack.c.h.b16 %v1436
        %v1819 = vunpack.c.l.b16 %v1437
        %v1820 = vunpack.c.h.b16 %v1437
        %v1821 = vunpack.c.l.b16 %v1438
        %v1822 = vunpack.c.h.b16 %v1438
        %v1823 = vunpack.c.l.b16 %v1439
        %v1824 = vunpack.c.h.b16 %v1439
        %v1825 = vunpack.c.l.b16 %v1440
        %v1826 = vunpack.c.h.b16 %v1440
        %v1827 = vunpack.c.l.b16 %v1441
        %v1828 = vunpack.c.h.b16 %v1441
        %v1829 = vunpack.c.l.b16 %v1442
        %v1830 = vunpack.c.h.b16 %v1442
        %v1831 = vunpack.c.l.b16 %v1443
        %v1832 = vunpack.c.h.b16 %v1443
        %v1833 = vunpack.c.l.b16 %v1444
        %v1834 = vunpack.c.h.b16 %v1444
        %v1835 = vunpack.c.l.b16 %v1445
        %v1836 = vunpack.c.h.b16 %v1445
        %v1837 = vunpack.c.l.b16 %v1446
        %v1838 = vunpack.c.h.b16 %v1446
        %v1839 = vunpack.c.l.b16 %v1447
        %v1840 = vunpack.c.h.b16 %v1447
        %v1841 = vunpack.c.l.b16 %v1448
        %v1842 = vunpack.c.h.b16 %v1448
        %v1843 = vunpack.c.l.b16 %v1449
        %v1844 = vunpack.c.h.b16 %v1449
        %v1845 = vunpack.c.l.b16 %v1450
        %v1846 = vunpack.c.h.b16 %v1450
        %v1847 = vunpack.c.l.b16 %v1451
        %v1848 = vunpack.c.h.b16 %v1451
        %v1849 = vunpack.c.l.b16 %v1452
        %v1850 = vunpack.c.h.b16 %v1452
        %v1851 = vunpack.c.l.b16 %v1453
        %v1852 = vunpack.c.h.b16 %v1453
        %v1853 = vunpack.c.l.b16 %v1454
        %v1854 = vunpack.c.h.b16 %v1454
        %v1855 = vunpack.c.l.b16 %v1455
        %v1856 = vunpack.c.h.b16 %v1455
        %v1857 = vunpack.c.l.b16 %v1456
        %v1858 = vunpack.c.h.b16 %v1456
        %v1859 = vunpack.c.l.b16 %v1457
        %v1860 = vunpack.c.h.b16 %v1457
        %v1861 = vunpack.c.l.b16 %v1458
        %v1862 = vunpack.c.h.b16 %v1458
        %v1863 = vunpack.c.l.b16 %v1459
        %v1864 = vunpack.c.h.b16 %v1459
        %v1865 = vunpack.c.l.b16 %v1460
        %v1866 = vunpack.c.h.b16 %v1460
        %v1867 = vunpack.c.l.b16 %v1461
        %v1868 = vunpack.c.h.b16 %v1461
        %v1869 = vunpack.c.l.b16 %v1462
        %v1870 = vunpack.c.h.b16 %v1462
        %v1871 = vunpack.c.l.b16 %v1463
        %v1872 = vunpack.c.h.b16 %v1463
        %v1873 = vunpack.c.l.b16 %v1464
        %v1874 = vunpack.c.h.b16 %v1464
        %v1875 = vunpack.c.l.b16 %v1465
        %v1876 = vunpack.c.h.b16 %v1465
        %v1877 = vunpack.c.l.b16 %v1466
        %v1878 = vunpack.c.h.b16 %v1466
        %v1879 = vunpack.c.l.b16 %v1467
        %v1880 = vunpack.c.h.b16 %v1467
        %v1881 = vunpack.c.l.b16 %v1468
        %v1882 = vunpack.c.h.b16 %v1468
        %v1883 = vunpack.c.l.b16 %v1469
        %v1884 = vunpack.c.h.b16 %v1469
        %v1885 = vunpack.c.l.b16 %v1470
        %v1886 = vunpack.c.h.b16 %v1470
        %v1887 = vunpack.c.l.b16 %v1471
        %v1888 = vunpack.c.h.b16 %v1471
        %v1889 = vunpack.c.l.b16 %v1472
        %v1890 = vunpack.c.h.b16 %v1472
        %v1891 = vunpack.c.l.b16 %v1473
        %v1892 = vunpack.c.h.b16 %v1473
        %v1893 = vunpack.c.l.b16 %v1474
        %v1894 = vunpack.c.h.b16 %v1474
        %v1895 = vunpack.c.l.b16 %v1475
        %v1896 = vunpack.c.h.b16 %v1475
        %v1897 = vunpack.c.l.b16 %v1476
        %v1898 = vunpack.c.h.b16 %v1476
        %v1899 = vunpack.c.l.b16 %v1477
        %v1900 = vunpack.c.h.b16 %v1477
        %v1901 = vunpack.c.l.b16 %v1478
        %v1902 = vunpack.c.h.b16 %v1478
        %v1903 = vunpack.c.l.b16 %v1479
        %v1904 = vunpack.c.h.b16 %v1479
        %v1905 = vunpack.c.l.b16 %v1480
        %v1906 = vunpack.c.h.b16 %v1480
        %v1907 = vunpack.c.l.b16 %v1481
        %v1908 = vunpack.c.h.b16 %v1481
        %v1909 = vunpack.c.l.b16 %v1482
        %v1910 = vunpack.c.h.b16 %v1482
        %v1911 = vunpack.c.l.b16 %v1483
        %v1912 = vunpack.c.h.b16 %v1483
        %v1913 = vunpack.c.l.b16 %v1484
        %v1914 = vunpack.c.h.b16 %v1484
        %v1915 = vunpack.c.l.b16 %v1485
        %v1916 = vunpack.c.h.b16 %v1485
        %v1917 = vunpack.c.l.b16 %v1486
        %v1918 = vunpack.c.h.b16 %v1486
        %v1919 = vunpack.c.l.b16 %v1487
        %v1920 = vunpack.c.h.b16 %v1487
        %v1921 = vunpack.c.l.b16 %v1488
        %v1922 = vunpack.c.h.b16 %v1488
        %v1923 = vunpack.c.l.b16 %v1489
        %v1924 = vunpack.c.h.b16 %v1489
        %v1925 = vunpack.c.l.b16 %v1490
        %v1926 = vunpack.c.h.b16 %v1490
        %v1927 = vunpack.c.l.b16 %v1491
        %v1928 = vunpack.c.h.b16 %v1491
        %v1929 = vunpack.c.l.b16 %v1492
        %v1930 = vunpack.c.h.b16 %v1492
        %v1931 = vunpack.c.l.b16 %v1493
        %v1932 = vunpack.c.h.b16 %v1493
        %v1933 = vunpack.c.l.b16 %v1494
        %v1934 = vunpack.c.h.b16 %v1494
        %v1935 = vunpack.c.l.b16 %v1495
        %v1936 = vunpack.c.h.b16 %v1495
        %v1937 = vunpack.c.l.b16 %v1496
        %v1938 = vunpack.c.h.b16 %v1496
        %v1939 = vunpack.c.l.b16 %v1497
        %v1940 = vunpack.c.h.b16 %v1497
        %v1941 = vunpack.c.l.b16 %v1498
        %v1942 = vunpack.c.h.b16 %v1498
        %v1943 = vunpack.c.l.b16 %v1499
        %v1944 = vunpack.c.h.b16 %v1499
        %v1945 = vunpack.c.l.b16 %v1500
        %v1946 = vunpack.c.h.b16 %v1500
        %v1947 = vunpack.c.l.b16 %v1501
        %v1948 = vunpack.c.h.b16 %v1501
        %v1949 = vunpack.c.l.b16 %v1502
        %v1950 = vunpack.c.h.b16 %v1502
        %v1951 = vunpack.c.l.b16 %v1503
        %v1952 = vunpack.c.h.b16 %v1503
        %v1953 = vunpack.c.l.b16 %v1504
        %v1954 = vunpack.c.h.b16 %v1504
        %v1955 = vunpack.c.l.b16 %v1505
        %v1956 = vunpack.c.h.b16 %v1505
        %v1957 = vunpack.c.l.b16 %v1506
        %v1958 = vunpack.c.h.b16 %v1506
        %v1959 = vunpack.c.l.b16 %v1507
        %v1960 = vunpack.c.h.b16 %v1507
        %v1961 = vunpack.c.l.b16 %v1508
        %v1962 = vunpack.c.h.b16 %v1508
        %v1963 = vunpack.c.l.b16 %v1509
        %v1964 = vunpack.c.h.b16 %v1509
        %v1965 = vunpack.c.l.b16 %v1510
        %v1966 = vunpack.c.h.b16 %v1510
        %v1967 = vunpack.c.l.b16 %v1511
        %v1968 = vunpack.c.h.b16 %v1511
        %v1969 = vunpack.c.l.b16 %v1512
        %v1970 = vunpack.c.h.b16 %v1512
        %v1971 = vunpack.c.l.b16 %v1513
        %v1972 = vunpack.c.h.b16 %v1513
        %v1973 = vunpack.c.l.b16 %v1514
        %v1974 = vunpack.c.h.b16 %v1514
        %v1975 = vunpack.c.l.b16 %v1515
        %v1976 = vunpack.c.h.b16 %v1515
        %v1977 = vunpack.c.l.b16 %v1516
        %v1978 = vunpack.c.h.b16 %v1516
        %v1979 = vunpack.c.l.b16 %v1517
        %v1980 = vunpack.c.h.b16 %v1517
        %v1981 = vunpack.c.l.b16 %v1518
        %v1982 = vunpack.c.h.b16 %v1518
        %v1983 = vunpack.c.l.b16 %v1519
        %v1984 = vunpack.c.h.b16 %v1519
        %v1985 = vunpack.c.l.b16 %v1520
        %v1986 = vunpack.c.h.b16 %v1520
        %v1987 = vunpack.c.l.b16 %v1521
        %v1988 = vunpack.c.h.b16 %v1521
        %v1989 = vunpack.c.l.b16 %v1522
        %v1990 = vunpack.c.h.b16 %v1522
        %v1991 = vpack.c.b16 %v1751, %v1735
        %v1992 = vpack.c.b16 %v1752, %v1736
        %v1993 = vpack.c.b16 %v1753, %v1737
        %v1994 = vpack.c.b16 %v1754, %v1738
        %v1995 = vpack.c.b16 %v1755, %v1739
        %v1996 = vpack.c.b16 %v1756, %v1740
        %v1997 = vpack.c.b16 %v1757, %v1741
        %v1998 = vpack.c.b16 %v1758, %v1742
        %v1999 = vpack.c.b16 %v1759, %v1743
        %v2000 = vpack.c.b16 %v1760, %v1744
        %v2001 = vpack.c.b16 %v1761, %v1745
        %v2002 = vpack.c.b16 %v1762, %v1746
        %v2003 = vpack.c.b16 %v1763, %v1747
        %v2004 = vpack.c.b16 %v1764, %v1748
        %v2005 = vpack.c.b16 %v1765, %v1749
        %v2006 = vpack.c.b16 %v1766, %v1750
        %v2007 = vpack.c.b16 %v1783, %v1767
        %v2008 = vpack.c.b16 %v1784, %v1768
        %v2009 = vpack.c.b16 %v1785, %v1769
        %v2010 = vpack.c.b16 %v1786, %v1770
        %v2011 = vpack.c.b16 %v1787, %v1771
        %v2012 = vpack.c.b16 %v1788, %v1772
        %v2013 = vpack.c.b16 %v1789, %v1773
        %v2014 = vpack.c.b16 %v1790, %v1774
        %v2015 = vpack.c.b16 %v1791, %v1775
        %v2016 = vpack.c.b16 %v1792, %v1776
        %v2017 = vpack.c.b16 %v1793, %v1777
        %v2018 = vpack.c.b16 %v1794, %v1778
        %v2019 = vpack.c.b16 %v1795, %v1779
        %v2020 = vpack.c.b16 %v1796, %v1780
        %v2021 = vpack.c.b16 %v1797, %v1781
        %v2022 = vpack.c.b16 %v1798, %v1782
        %v2023 = vpack.c.b16 %v1815, %v1799
        %v2024 = vpack.c.b16 %v1816, %v1800
        %v2025 = vpack.c.b16 %v1817, %v1801
        %v2026 = vpack.c.b16 %v1818, %v1802
        %v2027 = vpack.c.b16 %v1819, %v1803
        %v2028 = vpack.c.b16 %v1820, %v1804
        %v2029 = vpack.c.b16 %v1821, %v1805
        %v2030 = vpack.c.b16 %v1822, %v1806
        %v2031 = vpack.c.b16 %v1823, %v1807
        %v2032 = vpack.c.b16 %v1824, %v1808
        %v2033 = vpack.c.b16 %v1825, %v1809
        %v2034 = vpack.c.b16 %v1826, %v1810
        %v2035 = vpack.c.b16 %v1827, %v1811
        %v2036 = vpack.c.b16 %v1828, %v1812
        %v2037 = vpack.c.b16 %v1829, %v1813
        %v2038 = vpack.c.b16 %v1830, %v1814
        %v2039 = vpack.c.b16 %v1847, %v1831
        %v2040 = vpack.c.b16 %v1848, %v1832
        %v2041 = vpack.c.b16 %v1849, %v1833
        %v2042 = vpack.c.b16 %v1850, %v1834
        %v2043 = vpack.c.b16 %v1851, %v1835
        %v2044 = vpack.c.b16 %v1852, %v1836
        %v2045 = vpack.c.b16 %v1853, %v1837
        %v2046 = vpack.c.b16 %v1854, %v1838
        %v2047 = vpack.c.b16 %v1855, %v1839
        %v2048 = vpack.c.b16 %v1856, %v1840
        %v2049 = vpack.c.b16 %v1857, %v1841
        %v2050 = vpack.c.b16 %v1858, %v1842
        %v2051 = vpack.c.b16 %v1859, %v1843
        %v2052 = vpack.c.b16 %v1860, %v1844
        %v2053 = vpack.c.b16 %v1861, %v1845
        %v2054 = vpack.c.b16 %v1862, %v1846
        %v2055 = vpack.c.b16 %v1879, %v1863
        %v2056 = vpack.c.b16 %v1880, %v1864
        %v2057 = vpack.c.b16 %v1881, %v1865
        %v2058 = vpack.c.b16 %v1882, %v1866
        %v2059 = vpack.c.b16 %v1883, %v1867
        %v2060 = vpack.c.b16 %v1884, %v1868
        %v2061 = vpack.c.b16 %v1885, %v1869
        %v2062 = vpack.c.b16 %v1886, %v1870
        %v2063 = vpack.c.b16 %v1887, %v1871
        %v2064 = vpack.c.b16 %v1888, %v1872
        %v2065 = vpack.c.b16 %v1889, %v1873
        %v2066 = vpack.c.b16 %v1890, %v1874
        %v2067 = vpack.c.b16 %v1891, %v1875
        %v2068 = vpack.c.b16 %v1892, %v1876
        %v2069 = vpack.c.b16 %v1893, %v1877
        %v2070 = vpack.c.b16 %v1894, %v1878
        %v2071 = vpack.c.b16 %v1911, %v1895
        %v2072 = vpack.c.b16 %v1912, %v1896
        %v2073 = vpack.c.b16 %v1913, %v1897
        %v2074 = vpack.c.b16 %v1914, %v1898
        %v2075 = vpack.c.b16 %v1915, %v1899
        %v2076 = vpack.c.b16 %v1916, %v1900
        %v2077 = vpack.c.b16 %v1917, %v1901
        %v2078 = vpack.c.b16 %v1918, %v1902
        %v2079 = vpack.c.b16 %v1919, %v1903
        %v2080 = vpack.c.b16 %v1920, %v1904
        %v2081 = vpack.c.b16 %v1921, %v1905
        %v2082 = vpack.c.b16 %v1922, %v1906
        %v2083 = vpack.c.b16 %v1923, %v1907
        %v2084 = vpack.c.b16 %v1924, %v1908
        %v2085 = vpack.c.b16 %v1925, %v1909
        %v2086 = vpack.c.b16 %v1926, %v1910
        %v2087 = vpack.c.b16 %v1943, %v1927
        %v2088 = vpack.c.b16 %v1944, %v1928
        %v2089 = vpack.c.b16 %v1945, %v1929
        %v2090 = vpack.c.b16 %v1946, %v1930
        %v2091 = vpack.c.b16 %v1947, %v1931
        %v2092 = vpack.c.b16 %v1948, %v1932
        %v2093 = vpack.c.b16 %v1949, %v1933
        %v2094 = vpack.c.b16 %v1950, %v1934
        %v2095 = vpack.c.b16 %v1951, %v1935
        %v2096 = vpack.c.b16 %v1952, %v1936
        %v2097 = vpack.c.b16 %v1953, %v1937
        %v2098 = vpack.c.b16 %v1954, %v1938
        %v2099 = vpack.c.b16 %v1955, %v1939
        %v2100 = vpack.c.b16 %v1956, %v1940
        %v2101 = vpack.c.b16 %v1957, %v1941
        %v2102 = vpack.c.b16 %v1958, %v1942
        %v2103 = vpack.c.b16 %v1975, %v1959
        %v2104 = vpack.c.b16 %v1976, %v1960
        %v2105 = vpack.c.b16 %v1977, %v1961
        %v2106 = vpack.c.b16 %v1978, %v1962
        %v2107 = vpack.c.b16 %v1979, %v1963
        %v2108 = vpack.c.b16 %v1980, %v1964
        %v2109 = vpack.c.b16 %v1981, %v1965
        %v2110 = vpack.c.b16 %v1982, %v1966
        %v2111 = vpack.c.b16 %v1983, %v1967
        %v2112 = vpack.c.b16 %v1984, %v1968
        %v2113 = vpack.c.b16 %v1985, %v1969
        %v2114 = vpack.c.b16 %v1986, %v1970
        %v2115 = vpack.c.b16 %v1987, %v1971
        %v2116 = vpack.c.b16 %v1988, %v1972
        %v2117 = vpack.c.b16 %v1989, %v1973
        %v2118 = vpack.c.b16 %v1990, %v1974
        %2247 = vmatprep.subr.bf16.mxu0 %v2104
        %2248 = vmatpush1.bf16.msra.mxu0 %v2103
        %2249 = vmatprep.subr.bf16.mxu0 %v2088
        %2250 = vmatpush1.bf16.msra.mxu0 %v2087
        %2251 = vmatprep.subr.bf16.mxu0 %v2072
        %2252 = vmatpush1.bf16.msra.mxu0 %v2071
        %2253 = vmatprep.subr.bf16.mxu0 %v2056
        %2254 = vmatpush1.bf16.msra.mxu0 %v2055
        %2255 = vmatprep.subr.bf16.mxu0 %v2040
        %2256 = vmatpush1.bf16.msra.mxu0 %v2039
        %2257 = vmatprep.subr.bf16.mxu0 %v2024
        %2258 = vmatpush1.bf16.msra.mxu0 %v2023
        %2259 = vmatprep.subr.bf16.mxu0 %v2008
        %2260 = vmatpush1.bf16.msra.mxu0 %v2007
        %2261 = vmatprep.subr.bf16.mxu0 %v1992
        %2262 = vmatpush1.bf16.msra.mxu0 %v1991
        %2263 = vmatprep.subr.bf16.mxu0 0
        %2264 = vmatpush2.bf16.msra.mxu0 0
        %2265 = vmatprep.subr.bf16.mxu0 0
        %2266 = vmatpush2.bf16.msra.mxu0 0
        %2267 = vmatprep.subr.bf16.mxu0 0
        %2268 = vmatpush2.bf16.msra.mxu0 0
        %2269 = vmatprep.subr.bf16.mxu0 0
        %2270 = vmatpush2.bf16.msra.mxu0 0
        %2271 = vmatprep.subr.bf16.mxu0 0
        %2272 = vmatpush2.bf16.msra.mxu0 0
        %2273 = vmatprep.subr.bf16.mxu0 0
        %2274 = vmatpush2.bf16.msra.mxu0 0
        %2275 = vmatprep.subr.bf16.mxu0 0
        %2276 = vmatpush2.bf16.msra.mxu0 0
        %2277 = vmatprep.subr.bf16.mxu0 0
        %2278 = vmatpush2.bf16.msra.mxu0 0
        %2279 = vmatprep.mubr.bf16.mxu0 0
        %2280 = vmatmul.mubr.bf16.gmra.mxu0 %v1394
        %v2281 = vpop.f32.mrf.mxu0
        %v2282 = vadd.f32 %v1530, %v2281
        %v2283 = vpop.f32.mrf.mxu0
        %v2284 = vadd.f32 %v1534, %v2283
        %v2285 = vpop.f32.mrf.mxu0
        %v2286 = vadd.f32 %v1530, %v2285
        %v2287 = vpop.f32.mrf.mxu0
        %v2288 = vadd.f32 %v1534, %v2287
        %2289 = vdwg.mxu0
        %2290 = vmatprep.subr.bf16.mxu0 %v2106
        %2291 = vmatpush1.bf16.msra.mxu0 %v2105
        %2292 = vmatprep.subr.bf16.mxu0 %v2090
        %2293 = vmatpush1.bf16.msra.mxu0 %v2089
        %2294 = vmatprep.subr.bf16.mxu0 %v2074
        %2295 = vmatpush1.bf16.msra.mxu0 %v2073
        %2296 = vmatprep.subr.bf16.mxu0 %v2058
        %2297 = vmatpush1.bf16.msra.mxu0 %v2057
        %2298 = vmatprep.subr.bf16.mxu0 %v2042
        %2299 = vmatpush1.bf16.msra.mxu0 %v2041
        %2300 = vmatprep.subr.bf16.mxu0 %v2026
        %2301 = vmatpush1.bf16.msra.mxu0 %v2025
        %2302 = vmatprep.subr.bf16.mxu0 %v2010
        %2303 = vmatpush1.bf16.msra.mxu0 %v2009
        %2304 = vmatprep.subr.bf16.mxu0 %v1994
        %2305 = vmatpush1.bf16.msra.mxu0 %v1993
        %2306 = vmatprep.subr.bf16.mxu0 0
        %2307 = vmatpush2.bf16.msra.mxu0 0
        %2308 = vmatprep.subr.bf16.mxu0 0
        %2309 = vmatpush2.bf16.msra.mxu0 0
        %2310 = vmatprep.subr.bf16.mxu0 0
        %2311 = vmatpush2.bf16.msra.mxu0 0
        %2312 = vmatprep.subr.bf16.mxu0 0
        %2313 = vmatpush2.bf16.msra.mxu0 0
        %2314 = vmatprep.subr.bf16.mxu0 0
        %2315 = vmatpush2.bf16.msra.mxu0 0
        %2316 = vmatprep.subr.bf16.mxu0 0
        %2317 = vmatpush2.bf16.msra.mxu0 0
        %2318 = vmatprep.subr.bf16.mxu0 0
        %2319 = vmatpush2.bf16.msra.mxu0 0
        %2320 = vmatprep.subr.bf16.mxu0 0
        %2321 = vmatpush2.bf16.msra.mxu0 0
        %2322 = vmatprep.mubr.bf16.mxu0 0
        %2323 = vmatmul.mubr.bf16.gmra.mxu0 %v1394
        %v2324 = vpop.f32.mrf.mxu0
        %v2325 = vadd.f32 %v1538, %v2324
        %v2326 = vpop.f32.mrf.mxu0
        %v2327 = vadd.f32 %v1542, %v2326
        %v2328 = vpop.f32.mrf.mxu0
        %v2329 = vadd.f32 %v1538, %v2328
        %v2330 = vpop.f32.mrf.mxu0
        %v2331 = vadd.f32 %v1542, %v2330
        %2332 = vdwg.mxu0
        %2333 = vmatprep.subr.bf16.mxu0 %v2108
        %2334 = vmatpush1.bf16.msra.mxu0 %v2107
        %2335 = vmatprep.subr.bf16.mxu0 %v2092
        %2336 = vmatpush1.bf16.msra.mxu0 %v2091
        %2337 = vmatprep.subr.bf16.mxu0 %v2076
        %2338 = vmatpush1.bf16.msra.mxu0 %v2075
        %2339 = vmatprep.subr.bf16.mxu0 %v2060
        %2340 = vmatpush1.bf16.msra.mxu0 %v2059
        %2341 = vmatprep.subr.bf16.mxu0 %v2044
        %2342 = vmatpush1.bf16.msra.mxu0 %v2043
        %2343 = vmatprep.subr.bf16.mxu0 %v2028
        %2344 = vmatpush1.bf16.msra.mxu0 %v2027
        %2345 = vmatprep.subr.bf16.mxu0 %v2012
        %2346 = vmatpush1.bf16.msra.mxu0 %v2011
        %2347 = vmatprep.subr.bf16.mxu0 %v1996
        %2348 = vmatpush1.bf16.msra.mxu0 %v1995
        %2349 = vmatprep.subr.bf16.mxu0 0
        %2350 = vmatpush2.bf16.msra.mxu0 0
        %2351 = vmatprep.subr.bf16.mxu0 0
        %2352 = vmatpush2.bf16.msra.mxu0 0
        %2353 = vmatprep.subr.bf16.mxu0 0
        %2354 = vmatpush2.bf16.msra.mxu0 0
        %2355 = vmatprep.subr.bf16.mxu0 0
        %2356 = vmatpush2.bf16.msra.mxu0 0
        %2357 = vmatprep.subr.bf16.mxu0 0
        %2358 = vmatpush2.bf16.msra.mxu0 0
        %2359 = vmatprep.subr.bf16.mxu0 0
        %2360 = vmatpush2.bf16.msra.mxu0 0
        %2361 = vmatprep.subr.bf16.mxu0 0
        %2362 = vmatpush2.bf16.msra.mxu0 0
        %2363 = vmatprep.subr.bf16.mxu0 0
        %2364 = vmatpush2.bf16.msra.mxu0 0
        %2365 = vmatprep.mubr.bf16.mxu0 0
        %2366 = vmatmul.mubr.bf16.gmra.mxu0 %v1394
        %v2367 = vpop.f32.mrf.mxu0
        %v2368 = vadd.f32 %v1546, %v2367
        %v2369 = vpop.f32.mrf.mxu0
        %v2370 = vadd.f32 %v1550, %v2369
        %v2371 = vpop.f32.mrf.mxu0
        %v2372 = vadd.f32 %v1546, %v2371
        %v2373 = vpop.f32.mrf.mxu0
        %v2374 = vadd.f32 %v1550, %v2373
        %2375 = vdwg.mxu0
        %2376 = vmatprep.subr.bf16.mxu0 %v2110
        %2377 = vmatpush1.bf16.msra.mxu0 %v2109
        %2378 = vmatprep.subr.bf16.mxu0 %v2094
        %2379 = vmatpush1.bf16.msra.mxu0 %v2093
        %2380 = vmatprep.subr.bf16.mxu0 %v2078
        %2381 = vmatpush1.bf16.msra.mxu0 %v2077
        %2382 = vmatprep.subr.bf16.mxu0 %v2062
        %2383 = vmatpush1.bf16.msra.mxu0 %v2061
        %2384 = vmatprep.subr.bf16.mxu0 %v2046
        %2385 = vmatpush1.bf16.msra.mxu0 %v2045
        %2386 = vmatprep.subr.bf16.mxu0 %v2030
        %2387 = vmatpush1.bf16.msra.mxu0 %v2029
        %2388 = vmatprep.subr.bf16.mxu0 %v2014
        %2389 = vmatpush1.bf16.msra.mxu0 %v2013
        %2390 = vmatprep.subr.bf16.mxu0 %v1998
        %2391 = vmatpush1.bf16.msra.mxu0 %v1997
        %2392 = vmatprep.subr.bf16.mxu0 0
        %2393 = vmatpush2.bf16.msra.mxu0 0
        %2394 = vmatprep.subr.bf16.mxu0 0
        %2395 = vmatpush2.bf16.msra.mxu0 0
        %2396 = vmatprep.subr.bf16.mxu0 0
        %2397 = vmatpush2.bf16.msra.mxu0 0
        %2398 = vmatprep.subr.bf16.mxu0 0
        %2399 = vmatpush2.bf16.msra.mxu0 0
        %2400 = vmatprep.subr.bf16.mxu0 0
        %2401 = vmatpush2.bf16.msra.mxu0 0
        %2402 = vmatprep.subr.bf16.mxu0 0
        %2403 = vmatpush2.bf16.msra.mxu0 0
        %2404 = vmatprep.subr.bf16.mxu0 0
        %2405 = vmatpush2.bf16.msra.mxu0 0
        %2406 = vmatprep.subr.bf16.mxu0 0
        %2407 = vmatpush2.bf16.msra.mxu0 0
        %2408 = vmatprep.mubr.bf16.mxu0 0
        %2409 = vmatmul.mubr.bf16.gmra.mxu0 %v1394
        %v2410 = vpop.f32.mrf.mxu0
        %v2411 = vadd.f32 %v1554, %v2410
        %v2412 = vpop.f32.mrf.mxu0
        %v2413 = vadd.f32 %v1558, %v2412
        %v2414 = vpop.f32.mrf.mxu0
        %v2415 = vadd.f32 %v1554, %v2414
        %v2416 = vpop.f32.mrf.mxu0
        %v2417 = vadd.f32 %v1558, %v2416
        %2418 = vdwg.mxu0
        %2419 = vmatprep.subr.bf16.mxu0 %v2112
        %2420 = vmatpush1.bf16.msra.mxu0 %v2111
        %2421 = vmatprep.subr.bf16.mxu0 %v2096
        %2422 = vmatpush1.bf16.msra.mxu0 %v2095
        %2423 = vmatprep.subr.bf16.mxu0 %v2080
        %2424 = vmatpush1.bf16.msra.mxu0 %v2079
        %2425 = vmatprep.subr.bf16.mxu0 %v2064
        %2426 = vmatpush1.bf16.msra.mxu0 %v2063
        %2427 = vmatprep.subr.bf16.mxu0 %v2048
        %2428 = vmatpush1.bf16.msra.mxu0 %v2047
        %2429 = vmatprep.subr.bf16.mxu0 %v2032
        %2430 = vmatpush1.bf16.msra.mxu0 %v2031
        %2431 = vmatprep.subr.bf16.mxu0 %v2016
        %2432 = vmatpush1.bf16.msra.mxu0 %v2015
        %2433 = vmatprep.subr.bf16.mxu0 %v2000
        %2434 = vmatpush1.bf16.msra.mxu0 %v1999
        %2435 = vmatprep.subr.bf16.mxu0 0
        %2436 = vmatpush2.bf16.msra.mxu0 0
        %2437 = vmatprep.subr.bf16.mxu0 0
        %2438 = vmatpush2.bf16.msra.mxu0 0
        %2439 = vmatprep.subr.bf16.mxu0 0
        %2440 = vmatpush2.bf16.msra.mxu0 0
        %2441 = vmatprep.subr.bf16.mxu0 0
        %2442 = vmatpush2.bf16.msra.mxu0 0
        %2443 = vmatprep.subr.bf16.mxu0 0
        %2444 = vmatpush2.bf16.msra.mxu0 0
        %2445 = vmatprep.subr.bf16.mxu0 0
        %2446 = vmatpush2.bf16.msra.mxu0 0
        %2447 = vmatprep.subr.bf16.mxu0 0
        %2448 = vmatpush2.bf16.msra.mxu0 0
        %2449 = vmatprep.subr.bf16.mxu0 0
        %2450 = vmatpush2.bf16.msra.mxu0 0
        %2451 = vmatprep.mubr.bf16.mxu0 0
        %2452 = vmatmul.mubr.bf16.gmra.mxu0 %v1394
        %v2453 = vpop.f32.mrf.mxu0
        %v2454 = vadd.f32 %v1562, %v2453
        %v2455 = vpop.f32.mrf.mxu0
        %v2456 = vadd.f32 %v1566, %v2455
        %v2457 = vpop.f32.mrf.mxu0
        %v2458 = vadd.f32 %v1562, %v2457
        %v2459 = vpop.f32.mrf.mxu0
        %v2460 = vadd.f32 %v1566, %v2459
        %2461 = vdwg.mxu0
        %2462 = vmatprep.subr.bf16.mxu0 %v2114
        %2463 = vmatpush1.bf16.msra.mxu0 %v2113
        %2464 = vmatprep.subr.bf16.mxu0 %v2098
        %2465 = vmatpush1.bf16.msra.mxu0 %v2097
        %2466 = vmatprep.subr.bf16.mxu0 %v2082
        %2467 = vmatpush1.bf16.msra.mxu0 %v2081
        %2468 = vmatprep.subr.bf16.mxu0 %v2066
        %2469 = vmatpush1.bf16.msra.mxu0 %v2065
        %2470 = vmatprep.subr.bf16.mxu0 %v2050
        %2471 = vmatpush1.bf16.msra.mxu0 %v2049
        %2472 = vmatprep.subr.bf16.mxu0 %v2034
        %2473 = vmatpush1.bf16.msra.mxu0 %v2033
        %2474 = vmatprep.subr.bf16.mxu0 %v2018
        %2475 = vmatpush1.bf16.msra.mxu0 %v2017
        %2476 = vmatprep.subr.bf16.mxu0 %v2002
        %2477 = vmatpush1.bf16.msra.mxu0 %v2001
        %2478 = vmatprep.subr.bf16.mxu0 0
        %2479 = vmatpush2.bf16.msra.mxu0 0
        %2480 = vmatprep.subr.bf16.mxu0 0
        %2481 = vmatpush2.bf16.msra.mxu0 0
        %2482 = vmatprep.subr.bf16.mxu0 0
        %2483 = vmatpush2.bf16.msra.mxu0 0
        %2484 = vmatprep.subr.bf16.mxu0 0
        %2485 = vmatpush2.bf16.msra.mxu0 0
        %2486 = vmatprep.subr.bf16.mxu0 0
        %2487 = vmatpush2.bf16.msra.mxu0 0
        %2488 = vmatprep.subr.bf16.mxu0 0
        %2489 = vmatpush2.bf16.msra.mxu0 0
        %2490 = vmatprep.subr.bf16.mxu0 0
        %2491 = vmatpush2.bf16.msra.mxu0 0
        %2492 = vmatprep.subr.bf16.mxu0 0
        %2493 = vmatpush2.bf16.msra.mxu0 0
        %2494 = vmatprep.mubr.bf16.mxu0 0
        %2495 = vmatmul.mubr.bf16.gmra.mxu0 %v1394
        %v2496 = vpop.f32.mrf.mxu0
        %v2497 = vadd.f32 %v1570, %v2496
        %v2498 = vpop.f32.mrf.mxu0
        %v2499 = vadd.f32 %v1574, %v2498
        %v2500 = vpop.f32.mrf.mxu0
        %v2501 = vadd.f32 %v1570, %v2500
        %v2502 = vpop.f32.mrf.mxu0
        %v2503 = vadd.f32 %v1574, %v2502
        %2504 = vdwg.mxu0
        %2505 = vmatprep.subr.bf16.mxu0 %v2116
        %2506 = vmatpush1.bf16.msra.mxu0 %v2115
        %2507 = vmatprep.subr.bf16.mxu0 %v2100
        %2508 = vmatpush1.bf16.msra.mxu0 %v2099
        %2509 = vmatprep.subr.bf16.mxu0 %v2084
        %2510 = vmatpush1.bf16.msra.mxu0 %v2083
        %2511 = vmatprep.subr.bf16.mxu0 %v2068
        %2512 = vmatpush1.bf16.msra.mxu0 %v2067
        %2513 = vmatprep.subr.bf16.mxu0 %v2052
        %2514 = vmatpush1.bf16.msra.mxu0 %v2051
        %2515 = vmatprep.subr.bf16.mxu0 %v2036
        %2516 = vmatpush1.bf16.msra.mxu0 %v2035
        %2517 = vmatprep.subr.bf16.mxu0 %v2020
        %2518 = vmatpush1.bf16.msra.mxu0 %v2019
        %2519 = vmatprep.subr.bf16.mxu0 %v2004
        %2520 = vmatpush1.bf16.msra.mxu0 %v2003
        %2521 = vmatprep.subr.bf16.mxu0 0
        %2522 = vmatpush2.bf16.msra.mxu0 0
        %2523 = vmatprep.subr.bf16.mxu0 0
        %2524 = vmatpush2.bf16.msra.mxu0 0
        %2525 = vmatprep.subr.bf16.mxu0 0
        %2526 = vmatpush2.bf16.msra.mxu0 0
        %2527 = vmatprep.subr.bf16.mxu0 0
        %2528 = vmatpush2.bf16.msra.mxu0 0
        %2529 = vmatprep.subr.bf16.mxu0 0
        %2530 = vmatpush2.bf16.msra.mxu0 0
        %2531 = vmatprep.subr.bf16.mxu0 0
        %2532 = vmatpush2.bf16.msra.mxu0 0
        %2533 = vmatprep.subr.bf16.mxu0 0
        %2534 = vmatpush2.bf16.msra.mxu0 0
        %2535 = vmatprep.subr.bf16.mxu0 0
        %2536 = vmatpush2.bf16.msra.mxu0 0
        %2537 = vmatprep.mubr.bf16.mxu0 0
        %2538 = vmatmul.mubr.bf16.gmra.mxu0 %v1394
        %v2539 = vpop.f32.mrf.mxu0
        %v2540 = vadd.f32 %v1578, %v2539
        %v2541 = vpop.f32.mrf.mxu0
        %v2542 = vadd.f32 %v1582, %v2541
        %v2543 = vpop.f32.mrf.mxu0
        %v2544 = vadd.f32 %v1578, %v2543
        %v2545 = vpop.f32.mrf.mxu0
        %v2546 = vadd.f32 %v1582, %v2545
        %2547 = vdwg.mxu0
        %2548 = vmatprep.subr.bf16.mxu0 %v2118
        %2549 = vmatpush1.bf16.msra.mxu0 %v2117
        %2550 = vmatprep.subr.bf16.mxu0 %v2102
        %2551 = vmatpush1.bf16.msra.mxu0 %v2101
        %2552 = vmatprep.subr.bf16.mxu0 %v2086
        %2553 = vmatpush1.bf16.msra.mxu0 %v2085
        %2554 = vmatprep.subr.bf16.mxu0 %v2070
        %2555 = vmatpush1.bf16.msra.mxu0 %v2069
        %2556 = vmatprep.subr.bf16.mxu0 %v2054
        %2557 = vmatpush1.bf16.msra.mxu0 %v2053
        %2558 = vmatprep.subr.bf16.mxu0 %v2038
        %2559 = vmatpush1.bf16.msra.mxu0 %v2037
        %2560 = vmatprep.subr.bf16.mxu0 %v2022
        %2561 = vmatpush1.bf16.msra.mxu0 %v2021
        %2562 = vmatprep.subr.bf16.mxu0 %v2006
        %2563 = vmatpush1.bf16.msra.mxu0 %v2005
        %2564 = vmatprep.subr.bf16.mxu0 0
        %2565 = vmatpush2.bf16.msra.mxu0 0
        %2566 = vmatprep.subr.bf16.mxu0 0
        %2567 = vmatpush2.bf16.msra.mxu0 0
        %2568 = vmatprep.subr.bf16.mxu0 0
        %2569 = vmatpush2.bf16.msra.mxu0 0
        %2570 = vmatprep.subr.bf16.mxu0 0
        %2571 = vmatpush2.bf16.msra.mxu0 0
        %2572 = vmatprep.subr.bf16.mxu0 0
        %2573 = vmatpush2.bf16.msra.mxu0 0
        %2574 = vmatprep.subr.bf16.mxu0 0
        %2575 = vmatpush2.bf16.msra.mxu0 0
        %2576 = vmatprep.subr.bf16.mxu0 0
        %2577 = vmatpush2.bf16.msra.mxu0 0
        %2578 = vmatprep.subr.bf16.mxu0 0
        %2579 = vmatpush2.bf16.msra.mxu0 0
        %2580 = vmatprep.mubr.bf16.mxu0 0
        %2581 = vmatmul.mubr.bf16.gmra.mxu0 %v1394
        %v2582 = vpop.f32.mrf.mxu0
        %v2583 = vadd.f32 %v1586, %v2582
        %v2584 = vpop.f32.mrf.mxu0
        %v2585 = vadd.f32 %v1590, %v2584
        %v2586 = vpop.f32.mrf.mxu0
        %v2587 = vadd.f32 %v1586, %v2586
        %v2588 = vpop.f32.mrf.mxu0
        %v2589 = vadd.f32 %v1590, %v2588
        %2590 = vdwg.mxu0
        %v2591 = vmax.f32 %v2282, 0.0
        %v2592 = vmax.f32 %v2284, 0.0
        %v2593 = vmax.f32 %v2325, 0.0
        %v2594 = vmax.f32 %v2327, 0.0
        %v2595 = vmax.f32 %v2368, 0.0
        %v2596 = vmax.f32 %v2370, 0.0
        %v2597 = vmax.f32 %v2411, 0.0
        %v2598 = vmax.f32 %v2413, 0.0
        %v2599 = vmax.f32 %v2454, 0.0
        %v2600 = vmax.f32 %v2456, 0.0
        %v2601 = vmax.f32 %v2497, 0.0
        %v2602 = vmax.f32 %v2499, 0.0
        %v2603 = vmax.f32 %v2540, 0.0
        %v2604 = vmax.f32 %v2542, 0.0
        %v2605 = vmax.f32 %v2583, 0.0
        %v2606 = vmax.f32 %v2585, 0.0
        %v2607 = vmax.f32 %v2286, 0.0
        %v2608 = vmax.f32 %v2288, 0.0
        %v2609 = vmax.f32 %v2329, 0.0
        %v2610 = vmax.f32 %v2331, 0.0
        %v2611 = vmax.f32 %v2372, 0.0
        %v2612 = vmax.f32 %v2374, 0.0
        %v2613 = vmax.f32 %v2415, 0.0
        %v2614 = vmax.f32 %v2417, 0.0
        %v2615 = vmax.f32 %v2458, 0.0
        %v2616 = vmax.f32 %v2460, 0.0
        %v2617 = vmax.f32 %v2501, 0.0
        %v2618 = vmax.f32 %v2503, 0.0
        %v2619 = vmax.f32 %v2544, 0.0
        %v2620 = vmax.f32 %v2546, 0.0
        %v2621 = vmax.f32 %v2587, 0.0
        %v2622 = vmax.f32 %v2589, 0.0
        %v2623 = vpack.c.bf16 %v2607, %v2591
        %v2624 = vpack.c.bf16 %v2608, %v2592
        %v2625 = vpack.c.bf16 %v2609, %v2593
        %v2626 = vpack.c.bf16 %v2610, %v2594
        %v2627 = vpack.c.bf16 %v2611, %v2595
        %v2628 = vpack.c.bf16 %v2612, %v2596
        %v2629 = vpack.c.bf16 %v2613, %v2597
        %v2630 = vpack.c.bf16 %v2614, %v2598
        %v2631 = vpack.c.bf16 %v2615, %v2599
        %v2632 = vpack.c.bf16 %v2616, %v2600
        %v2633 = vpack.c.bf16 %v2617, %v2601
        %v2634 = vpack.c.bf16 %v2618, %v2602
        %v2635 = vpack.c.bf16 %v2619, %v2603
        %v2636 = vpack.c.bf16 %v2620, %v2604
        %v2637 = vpack.c.bf16 %v2621, %v2605
        %v2638 = vpack.c.bf16 %v2622, %v2606
        %v2639 = vld [vmem:[%s501] sm:$0xf]
        %v2640 = vld [vmem:[%s501 + $0x4] sm:$0xf]
        %v2641 = vld [vmem:[%s501 + $0x8] sm:$0xf]
        %v2642 = vld [vmem:[%s501 + $0xc] sm:$0xf]
        %v2643 = vld [vmem:[%s501 + $0x10] sm:$0xf]
        %v2644 = vld [vmem:[%s501 + $0x14] sm:$0xf]
        %v2645 = vld [vmem:[%s501 + $0x18] sm:$0xf]
        %v2646 = vld [vmem:[%s501 + $0x1c] sm:$0xf]
        %v2647 = vld [vmem:[%s501 + $0x20] sm:$0xf]
        %v2648 = vld [vmem:[%s501 + $0x24] sm:$0xf]
        %v2649 = vld [vmem:[%s501 + $0x28] sm:$0xf]
        %v2650 = vld [vmem:[%s501 + $0x2c] sm:$0xf]
        %v2651 = vld [vmem:[%s501 + $0x30] sm:$0xf]
        %v2652 = vld [vmem:[%s501 + $0x34] sm:$0xf]
        %v2653 = vld [vmem:[%s501 + $0x38] sm:$0xf]
        %v2654 = vld [vmem:[%s501 + $0x3c] sm:$0xf]
        %v2655 = vld [vmem:[%s501 + $0x40] sm:$0xf]
        %v2656 = vld [vmem:[%s501 + $0x44] sm:$0xf]
        %v2657 = vld [vmem:[%s501 + $0x48] sm:$0xf]
        %v2658 = vld [vmem:[%s501 + $0x4c] sm:$0xf]
        %v2659 = vld [vmem:[%s501 + $0x50] sm:$0xf]
        %v2660 = vld [vmem:[%s501 + $0x54] sm:$0xf]
        %v2661 = vld [vmem:[%s501 + $0x58] sm:$0xf]
        %v2662 = vld [vmem:[%s501 + $0x5c] sm:$0xf]
        %v2663 = vld [vmem:[%s501 + $0x60] sm:$0xf]
        %v2664 = vld [vmem:[%s501 + $0x64] sm:$0xf]
        %v2665 = vld [vmem:[%s501 + $0x68] sm:$0xf]
        %v2666 = vld [vmem:[%s501 + $0x6c] sm:$0xf]
        %v2667 = vld [vmem:[%s501 + $0x70] sm:$0xf]
        %v2668 = vld [vmem:[%s501 + $0x74] sm:$0xf]
        %v2669 = vld [vmem:[%s501 + $0x78] sm:$0xf]
        %v2670 = vld [vmem:[%s501 + $0x7c] sm:$0xf]
        %v2671 = vld [vmem:[%s501 + $0x80] sm:$0xf]
        %v2672 = vld [vmem:[%s501 + $0x84] sm:$0xf]
        %v2673 = vld [vmem:[%s501 + $0x88] sm:$0xf]
        %v2674 = vld [vmem:[%s501 + $0x8c] sm:$0xf]
        %v2675 = vld [vmem:[%s501 + $0x90] sm:$0xf]
        %v2676 = vld [vmem:[%s501 + $0x94] sm:$0xf]
        %v2677 = vld [vmem:[%s501 + $0x98] sm:$0xf]
        %v2678 = vld [vmem:[%s501 + $0x9c] sm:$0xf]
        %v2679 = vld [vmem:[%s501 + $0xa0] sm:$0xf]
        %v2680 = vld [vmem:[%s501 + $0xa4] sm:$0xf]
        %v2681 = vld [vmem:[%s501 + $0xa8] sm:$0xf]
        %v2682 = vld [vmem:[%s501 + $0xac] sm:$0xf]
        %v2683 = vld [vmem:[%s501 + $0xb0] sm:$0xf]
        %v2684 = vld [vmem:[%s501 + $0xb4] sm:$0xf]
        %v2685 = vld [vmem:[%s501 + $0xb8] sm:$0xf]
        %v2686 = vld [vmem:[%s501 + $0xbc] sm:$0xf]
        %v2687 = vld [vmem:[%s501 + $0xc0] sm:$0xf]
        %v2688 = vld [vmem:[%s501 + $0xc4] sm:$0xf]
        %v2689 = vld [vmem:[%s501 + $0xc8] sm:$0xf]
        %v2690 = vld [vmem:[%s501 + $0xcc] sm:$0xf]
        %v2691 = vld [vmem:[%s501 + $0xd0] sm:$0xf]
        %v2692 = vld [vmem:[%s501 + $0xd4] sm:$0xf]
        %v2693 = vld [vmem:[%s501 + $0xd8] sm:$0xf]
        %v2694 = vld [vmem:[%s501 + $0xdc] sm:$0xf]
        %v2695 = vld [vmem:[%s501 + $0xe0] sm:$0xf]
        %v2696 = vld [vmem:[%s501 + $0xe4] sm:$0xf]
        %v2697 = vld [vmem:[%s501 + $0xe8] sm:$0xf]
        %v2698 = vld [vmem:[%s501 + $0xec] sm:$0xf]
        %v2699 = vld [vmem:[%s501 + $0xf0] sm:$0xf]
        %v2700 = vld [vmem:[%s501 + $0xf4] sm:$0xf]
        %v2701 = vld [vmem:[%s501 + $0xf8] sm:$0xf]
        %v2702 = vld [vmem:[%s501 + $0xfc] sm:$0xf]
        %v2703 = vld [vmem:[%s501 + $0x100] sm:$0xf]
        %v2704 = vld [vmem:[%s501 + $0x104] sm:$0xf]
        %v2705 = vld [vmem:[%s501 + $0x108] sm:$0xf]
        %v2706 = vld [vmem:[%s501 + $0x10c] sm:$0xf]
        %v2707 = vld [vmem:[%s501 + $0x110] sm:$0xf]
        %v2708 = vld [vmem:[%s501 + $0x114] sm:$0xf]
        %v2709 = vld [vmem:[%s501 + $0x118] sm:$0xf]
        %v2710 = vld [vmem:[%s501 + $0x11c] sm:$0xf]
        %v2711 = vld [vmem:[%s501 + $0x120] sm:$0xf]
        %v2712 = vld [vmem:[%s501 + $0x124] sm:$0xf]
        %v2713 = vld [vmem:[%s501 + $0x128] sm:$0xf]
        %v2714 = vld [vmem:[%s501 + $0x12c] sm:$0xf]
        %v2715 = vld [vmem:[%s501 + $0x130] sm:$0xf]
        %v2716 = vld [vmem:[%s501 + $0x134] sm:$0xf]
        %v2717 = vld [vmem:[%s501 + $0x138] sm:$0xf]
        %v2718 = vld [vmem:[%s501 + $0x13c] sm:$0xf]
        %v2719 = vld [vmem:[%s501 + $0x140] sm:$0xf]
        %v2720 = vld [vmem:[%s501 + $0x144] sm:$0xf]
        %v2721 = vld [vmem:[%s501 + $0x148] sm:$0xf]
        %v2722 = vld [vmem:[%s501 + $0x14c] sm:$0xf]
        %v2723 = vld [vmem:[%s501 + $0x150] sm:$0xf]
        %v2724 = vld [vmem:[%s501 + $0x154] sm:$0xf]
        %v2725 = vld [vmem:[%s501 + $0x158] sm:$0xf]
        %v2726 = vld [vmem:[%s501 + $0x15c] sm:$0xf]
        %v2727 = vld [vmem:[%s501 + $0x160] sm:$0xf]
        %v2728 = vld [vmem:[%s501 + $0x164] sm:$0xf]
        %v2729 = vld [vmem:[%s501 + $0x168] sm:$0xf]
        %v2730 = vld [vmem:[%s501 + $0x16c] sm:$0xf]
        %v2731 = vld [vmem:[%s501 + $0x170] sm:$0xf]
        %v2732 = vld [vmem:[%s501 + $0x174] sm:$0xf]
        %v2733 = vld [vmem:[%s501 + $0x178] sm:$0xf]
        %v2734 = vld [vmem:[%s501 + $0x17c] sm:$0xf]
        %v2735 = vld [vmem:[%s501 + $0x180] sm:$0xf]
        %v2736 = vld [vmem:[%s501 + $0x184] sm:$0xf]
        %v2737 = vld [vmem:[%s501 + $0x188] sm:$0xf]
        %v2738 = vld [vmem:[%s501 + $0x18c] sm:$0xf]
        %v2739 = vld [vmem:[%s501 + $0x190] sm:$0xf]
        %v2740 = vld [vmem:[%s501 + $0x194] sm:$0xf]
        %v2741 = vld [vmem:[%s501 + $0x198] sm:$0xf]
        %v2742 = vld [vmem:[%s501 + $0x19c] sm:$0xf]
        %v2743 = vld [vmem:[%s501 + $0x1a0] sm:$0xf]
        %v2744 = vld [vmem:[%s501 + $0x1a4] sm:$0xf]
        %v2745 = vld [vmem:[%s501 + $0x1a8] sm:$0xf]
        %v2746 = vld [vmem:[%s501 + $0x1ac] sm:$0xf]
        %v2747 = vld [vmem:[%s501 + $0x1b0] sm:$0xf]
        %v2748 = vld [vmem:[%s501 + $0x1b4] sm:$0xf]
        %v2749 = vld [vmem:[%s501 + $0x1b8] sm:$0xf]
        %v2750 = vld [vmem:[%s501 + $0x1bc] sm:$0xf]
        %v2751 = vld [vmem:[%s501 + $0x1c0] sm:$0xf]
        %v2752 = vld [vmem:[%s501 + $0x1c4] sm:$0xf]
        %v2753 = vld [vmem:[%s501 + $0x1c8] sm:$0xf]
        %v2754 = vld [vmem:[%s501 + $0x1cc] sm:$0xf]
        %v2755 = vld [vmem:[%s501 + $0x1d0] sm:$0xf]
        %v2756 = vld [vmem:[%s501 + $0x1d4] sm:$0xf]
        %v2757 = vld [vmem:[%s501 + $0x1d8] sm:$0xf]
        %v2758 = vld [vmem:[%s501 + $0x1dc] sm:$0xf]
        %v2759 = vld [vmem:[%s501 + $0x1e0] sm:$0xf]
        %v2760 = vld [vmem:[%s501 + $0x1e4] sm:$0xf]
        %v2761 = vld [vmem:[%s501 + $0x1e8] sm:$0xf]
        %v2762 = vld [vmem:[%s501 + $0x1ec] sm:$0xf]
        %v2763 = vld [vmem:[%s501 + $0x1f0] sm:$0xf]
        %v2764 = vld [vmem:[%s501 + $0x1f4] sm:$0xf]
        %v2765 = vld [vmem:[%s501 + $0x1f8] sm:$0xf]
        %v2766 = vld [vmem:[%s501 + $0x1fc] sm:$0xf]
        %v2767 = vld [vmem:[%s501 + $0x200] sm:$0xf]
        %v2768 = vld [vmem:[%s501 + $0x204] sm:$0xf]
        %v2769 = vld [vmem:[%s501 + $0x208] sm:$0xf]
        %v2770 = vld [vmem:[%s501 + $0x20c] sm:$0xf]
        %v2771 = vld [vmem:[%s501 + $0x210] sm:$0xf]
        %v2772 = vld [vmem:[%s501 + $0x214] sm:$0xf]
        %v2773 = vld [vmem:[%s501 + $0x218] sm:$0xf]
        %v2774 = vld [vmem:[%s501 + $0x21c] sm:$0xf]
        %v2775 = vld [vmem:[%s501 + $0x220] sm:$0xf]
        %v2776 = vld [vmem:[%s501 + $0x224] sm:$0xf]
        %v2777 = vld [vmem:[%s501 + $0x228] sm:$0xf]
        %v2778 = vld [vmem:[%s501 + $0x22c] sm:$0xf]
        %v2779 = vld [vmem:[%s501 + $0x230] sm:$0xf]
        %v2780 = vld [vmem:[%s501 + $0x234] sm:$0xf]
        %v2781 = vld [vmem:[%s501 + $0x238] sm:$0xf]
        %v2782 = vld [vmem:[%s501 + $0x23c] sm:$0xf]
        %v2783 = vld [vmem:[%s501 + $0x240] sm:$0xf]
        %v2784 = vld [vmem:[%s501 + $0x244] sm:$0xf]
        %v2785 = vld [vmem:[%s501 + $0x248] sm:$0xf]
        %v2786 = vld [vmem:[%s501 + $0x24c] sm:$0xf]
        %v2787 = vld [vmem:[%s501 + $0x250] sm:$0xf]
        %v2788 = vld [vmem:[%s501 + $0x254] sm:$0xf]
        %v2789 = vld [vmem:[%s501 + $0x258] sm:$0xf]
        %v2790 = vld [vmem:[%s501 + $0x25c] sm:$0xf]
        %v2791 = vld [vmem:[%s501 + $0x260] sm:$0xf]
        %v2792 = vld [vmem:[%s501 + $0x264] sm:$0xf]
        %v2793 = vld [vmem:[%s501 + $0x268] sm:$0xf]
        %v2794 = vld [vmem:[%s501 + $0x26c] sm:$0xf]
        %v2795 = vld [vmem:[%s501 + $0x270] sm:$0xf]
        %v2796 = vld [vmem:[%s501 + $0x274] sm:$0xf]
        %v2797 = vld [vmem:[%s501 + $0x278] sm:$0xf]
        %v2798 = vld [vmem:[%s501 + $0x27c] sm:$0xf]
        %v2799 = vld [vmem:[%s501 + $0x280] sm:$0xf]
        %v2800 = vld [vmem:[%s501 + $0x284] sm:$0xf]
        %v2801 = vld [vmem:[%s501 + $0x288] sm:$0xf]
        %v2802 = vld [vmem:[%s501 + $0x28c] sm:$0xf]
        %v2803 = vld [vmem:[%s501 + $0x290] sm:$0xf]
        %v2804 = vld [vmem:[%s501 + $0x294] sm:$0xf]
        %v2805 = vld [vmem:[%s501 + $0x298] sm:$0xf]
        %v2806 = vld [vmem:[%s501 + $0x29c] sm:$0xf]
        %v2807 = vld [vmem:[%s501 + $0x2a0] sm:$0xf]
        %v2808 = vld [vmem:[%s501 + $0x2a4] sm:$0xf]
        %v2809 = vld [vmem:[%s501 + $0x2a8] sm:$0xf]
        %v2810 = vld [vmem:[%s501 + $0x2ac] sm:$0xf]
        %v2811 = vld [vmem:[%s501 + $0x2b0] sm:$0xf]
        %v2812 = vld [vmem:[%s501 + $0x2b4] sm:$0xf]
        %v2813 = vld [vmem:[%s501 + $0x2b8] sm:$0xf]
        %v2814 = vld [vmem:[%s501 + $0x2bc] sm:$0xf]
        %v2815 = vld [vmem:[%s501 + $0x2c0] sm:$0xf]
        %v2816 = vld [vmem:[%s501 + $0x2c4] sm:$0xf]
        %v2817 = vld [vmem:[%s501 + $0x2c8] sm:$0xf]
        %v2818 = vld [vmem:[%s501 + $0x2cc] sm:$0xf]
        %v2819 = vld [vmem:[%s501 + $0x2d0] sm:$0xf]
        %v2820 = vld [vmem:[%s501 + $0x2d4] sm:$0xf]
        %v2821 = vld [vmem:[%s501 + $0x2d8] sm:$0xf]
        %v2822 = vld [vmem:[%s501 + $0x2dc] sm:$0xf]
        %v2823 = vld [vmem:[%s501 + $0x2e0] sm:$0xf]
        %v2824 = vld [vmem:[%s501 + $0x2e4] sm:$0xf]
        %v2825 = vld [vmem:[%s501 + $0x2e8] sm:$0xf]
        %v2826 = vld [vmem:[%s501 + $0x2ec] sm:$0xf]
        %v2827 = vld [vmem:[%s501 + $0x2f0] sm:$0xf]
        %v2828 = vld [vmem:[%s501 + $0x2f4] sm:$0xf]
        %v2829 = vld [vmem:[%s501 + $0x2f8] sm:$0xf]
        %v2830 = vld [vmem:[%s501 + $0x2fc] sm:$0xf]
        %v2831 = vld [vmem:[%s501 + $0x300] sm:$0xf]
        %v2832 = vld [vmem:[%s501 + $0x304] sm:$0xf]
        %v2833 = vld [vmem:[%s501 + $0x308] sm:$0xf]
        %v2834 = vld [vmem:[%s501 + $0x30c] sm:$0xf]
        %v2835 = vld [vmem:[%s501 + $0x310] sm:$0xf]
        %v2836 = vld [vmem:[%s501 + $0x314] sm:$0xf]
        %v2837 = vld [vmem:[%s501 + $0x318] sm:$0xf]
        %v2838 = vld [vmem:[%s501 + $0x31c] sm:$0xf]
        %v2839 = vld [vmem:[%s501 + $0x320] sm:$0xf]
        %v2840 = vld [vmem:[%s501 + $0x324] sm:$0xf]
        %v2841 = vld [vmem:[%s501 + $0x328] sm:$0xf]
        %v2842 = vld [vmem:[%s501 + $0x32c] sm:$0xf]
        %v2843 = vld [vmem:[%s501 + $0x330] sm:$0xf]
        %v2844 = vld [vmem:[%s501 + $0x334] sm:$0xf]
        %v2845 = vld [vmem:[%s501 + $0x338] sm:$0xf]
        %v2846 = vld [vmem:[%s501 + $0x33c] sm:$0xf]
        %v2847 = vld [vmem:[%s501 + $0x340] sm:$0xf]
        %v2848 = vld [vmem:[%s501 + $0x344] sm:$0xf]
        %v2849 = vld [vmem:[%s501 + $0x348] sm:$0xf]
        %v2850 = vld [vmem:[%s501 + $0x34c] sm:$0xf]
        %v2851 = vld [vmem:[%s501 + $0x350] sm:$0xf]
        %v2852 = vld [vmem:[%s501 + $0x354] sm:$0xf]
        %v2853 = vld [vmem:[%s501 + $0x358] sm:$0xf]
        %v2854 = vld [vmem:[%s501 + $0x35c] sm:$0xf]
        %v2855 = vld [vmem:[%s501 + $0x360] sm:$0xf]
        %v2856 = vld [vmem:[%s501 + $0x364] sm:$0xf]
        %v2857 = vld [vmem:[%s501 + $0x368] sm:$0xf]
        %v2858 = vld [vmem:[%s501 + $0x36c] sm:$0xf]
        %v2859 = vld [vmem:[%s501 + $0x370] sm:$0xf]
        %v2860 = vld [vmem:[%s501 + $0x374] sm:$0xf]
        %v2861 = vld [vmem:[%s501 + $0x378] sm:$0xf]
        %v2862 = vld [vmem:[%s501 + $0x37c] sm:$0xf]
        %v2863 = vld [vmem:[%s501 + $0x380] sm:$0xf]
        %v2864 = vld [vmem:[%s501 + $0x384] sm:$0xf]
        %v2865 = vld [vmem:[%s501 + $0x388] sm:$0xf]
        %v2866 = vld [vmem:[%s501 + $0x38c] sm:$0xf]
        %v2867 = vld [vmem:[%s501 + $0x390] sm:$0xf]
        %v2868 = vld [vmem:[%s501 + $0x394] sm:$0xf]
        %v2869 = vld [vmem:[%s501 + $0x398] sm:$0xf]
        %v2870 = vld [vmem:[%s501 + $0x39c] sm:$0xf]
        %v2871 = vld [vmem:[%s501 + $0x3a0] sm:$0xf]
        %v2872 = vld [vmem:[%s501 + $0x3a4] sm:$0xf]
        %v2873 = vld [vmem:[%s501 + $0x3a8] sm:$0xf]
        %v2874 = vld [vmem:[%s501 + $0x3ac] sm:$0xf]
        %v2875 = vld [vmem:[%s501 + $0x3b0] sm:$0xf]
        %v2876 = vld [vmem:[%s501 + $0x3b4] sm:$0xf]
        %v2877 = vld [vmem:[%s501 + $0x3b8] sm:$0xf]
        %v2878 = vld [vmem:[%s501 + $0x3bc] sm:$0xf]
        %v2879 = vld [vmem:[%s501 + $0x3c0] sm:$0xf]
        %v2880 = vld [vmem:[%s501 + $0x3c4] sm:$0xf]
        %v2881 = vld [vmem:[%s501 + $0x3c8] sm:$0xf]
        %v2882 = vld [vmem:[%s501 + $0x3cc] sm:$0xf]
        %v2883 = vld [vmem:[%s501 + $0x3d0] sm:$0xf]
        %v2884 = vld [vmem:[%s501 + $0x3d4] sm:$0xf]
        %v2885 = vld [vmem:[%s501 + $0x3d8] sm:$0xf]
        %v2886 = vld [vmem:[%s501 + $0x3dc] sm:$0xf]
        %v2887 = vld [vmem:[%s501 + $0x3e0] sm:$0xf]
        %v2888 = vld [vmem:[%s501 + $0x3e4] sm:$0xf]
        %v2889 = vld [vmem:[%s501 + $0x3e8] sm:$0xf]
        %v2890 = vld [vmem:[%s501 + $0x3ec] sm:$0xf]
        %v2891 = vld [vmem:[%s501 + $0x3f0] sm:$0xf]
        %v2892 = vld [vmem:[%s501 + $0x3f4] sm:$0xf]
        %v2893 = vld [vmem:[%s501 + $0x3f8] sm:$0xf]
        %v2894 = vld [vmem:[%s501 + $0x3fc] sm:$0xf]
        %v2895 = vlaneseq
        %v2896 = vshrl.u32 %v2895, 7
        %v2897 = vsub.s32 6, %v2896
        %v2898 = vrot.slane %v720, %v2897
        %v3155 = vunpack.c.l.b16 %v2639
        %v3156 = vunpack.c.l.b16 %v2640
        %v3157 = vunpack.c.l.b16 %v2641
        %v3158 = vunpack.c.l.b16 %v2642
        %v3159 = vunpack.c.l.b16 %v2643
        %v3160 = vunpack.c.l.b16 %v2644
        %v3161 = vunpack.c.l.b16 %v2645
        %v3162 = vunpack.c.l.b16 %v2646
        %v3163 = vunpack.c.l.b16 %v2647
        %v3164 = vunpack.c.l.b16 %v2648
        %v3165 = vunpack.c.l.b16 %v2649
        %v3166 = vunpack.c.l.b16 %v2650
        %v3167 = vunpack.c.l.b16 %v2651
        %v3168 = vunpack.c.l.b16 %v2652
        %v3169 = vunpack.c.l.b16 %v2653
        %v3170 = vunpack.c.l.b16 %v2654
        %v3171 = vunpack.c.l.b16 %v2655
        %v3172 = vunpack.c.l.b16 %v2656
        %v3173 = vunpack.c.l.b16 %v2657
        %v3174 = vunpack.c.l.b16 %v2658
        %v3175 = vunpack.c.l.b16 %v2659
        %v3176 = vunpack.c.l.b16 %v2660
        %v3177 = vunpack.c.l.b16 %v2661
        %v3178 = vunpack.c.l.b16 %v2662
        %v3179 = vunpack.c.l.b16 %v2663
        %v3180 = vunpack.c.l.b16 %v2664
        %v3181 = vunpack.c.l.b16 %v2665
        %v3182 = vunpack.c.l.b16 %v2666
        %v3183 = vunpack.c.l.b16 %v2667
        %v3184 = vunpack.c.l.b16 %v2668
        %v3185 = vunpack.c.l.b16 %v2669
        %v3186 = vunpack.c.l.b16 %v2670
        %v3187 = vunpack.c.l.b16 %v2671
        %v3188 = vunpack.c.l.b16 %v2672
        %v3189 = vunpack.c.l.b16 %v2673
        %v3190 = vunpack.c.l.b16 %v2674
        %v3191 = vunpack.c.l.b16 %v2675
        %v3192 = vunpack.c.l.b16 %v2676
        %v3193 = vunpack.c.l.b16 %v2677
        %v3194 = vunpack.c.l.b16 %v2678
        %v3195 = vunpack.c.l.b16 %v2679
        %v3196 = vunpack.c.l.b16 %v2680
        %v3197 = vunpack.c.l.b16 %v2681
        %v3198 = vunpack.c.l.b16 %v2682
        %v3199 = vunpack.c.l.b16 %v2683
        %v3200 = vunpack.c.l.b16 %v2684
        %v3201 = vunpack.c.l.b16 %v2685
        %v3202 = vunpack.c.l.b16 %v2686
        %v3203 = vunpack.c.l.b16 %v2687
        %v3204 = vunpack.c.l.b16 %v2688
        %v3205 = vunpack.c.l.b16 %v2689
        %v3206 = vunpack.c.l.b16 %v2690
        %v3207 = vunpack.c.l.b16 %v2691
        %v3208 = vunpack.c.l.b16 %v2692
        %v3209 = vunpack.c.l.b16 %v2693
        %v3210 = vunpack.c.l.b16 %v2694
        %v3211 = vunpack.c.l.b16 %v2695
        %v3212 = vunpack.c.l.b16 %v2696
        %v3213 = vunpack.c.l.b16 %v2697
        %v3214 = vunpack.c.l.b16 %v2698
        %v3215 = vunpack.c.l.b16 %v2699
        %v3216 = vunpack.c.l.b16 %v2700
        %v3217 = vunpack.c.l.b16 %v2701
        %v3218 = vunpack.c.l.b16 %v2702
        %v3219 = vunpack.c.l.b16 %v2703
        %v3220 = vunpack.c.l.b16 %v2704
        %v3221 = vunpack.c.l.b16 %v2705
        %v3222 = vunpack.c.l.b16 %v2706
        %v3223 = vunpack.c.l.b16 %v2707
        %v3224 = vunpack.c.l.b16 %v2708
        %v3225 = vunpack.c.l.b16 %v2709
        %v3226 = vunpack.c.l.b16 %v2710
        %v3227 = vunpack.c.l.b16 %v2711
        %v3228 = vunpack.c.l.b16 %v2712
        %v3229 = vunpack.c.l.b16 %v2713
        %v3230 = vunpack.c.l.b16 %v2714
        %v3231 = vunpack.c.l.b16 %v2715
        %v3232 = vunpack.c.l.b16 %v2716
        %v3233 = vunpack.c.l.b16 %v2717
        %v3234 = vunpack.c.l.b16 %v2718
        %v3235 = vunpack.c.l.b16 %v2719
        %v3236 = vunpack.c.l.b16 %v2720
        %v3237 = vunpack.c.l.b16 %v2721
        %v3238 = vunpack.c.l.b16 %v2722
        %v3239 = vunpack.c.l.b16 %v2723
        %v3240 = vunpack.c.l.b16 %v2724
        %v3241 = vunpack.c.l.b16 %v2725
        %v3242 = vunpack.c.l.b16 %v2726
        %v3243 = vunpack.c.l.b16 %v2727
        %v3244 = vunpack.c.l.b16 %v2728
        %v3245 = vunpack.c.l.b16 %v2729
        %v3246 = vunpack.c.l.b16 %v2730
        %v3247 = vunpack.c.l.b16 %v2731
        %v3248 = vunpack.c.l.b16 %v2732
        %v3249 = vunpack.c.l.b16 %v2733
        %v3250 = vunpack.c.l.b16 %v2734
        %v3251 = vunpack.c.l.b16 %v2735
        %v3252 = vunpack.c.l.b16 %v2736
        %v3253 = vunpack.c.l.b16 %v2737
        %v3254 = vunpack.c.l.b16 %v2738
        %v3255 = vunpack.c.l.b16 %v2739
        %v3256 = vunpack.c.l.b16 %v2740
        %v3257 = vunpack.c.l.b16 %v2741
        %v3258 = vunpack.c.l.b16 %v2742
        %v3259 = vunpack.c.l.b16 %v2743
        %v3260 = vunpack.c.l.b16 %v2744
        %v3261 = vunpack.c.l.b16 %v2745
        %v3262 = vunpack.c.l.b16 %v2746
        %v3263 = vunpack.c.l.b16 %v2747
        %v3264 = vunpack.c.l.b16 %v2748
        %v3265 = vunpack.c.l.b16 %v2749
        %v3266 = vunpack.c.l.b16 %v2750
        %v3267 = vunpack.c.l.b16 %v2751
        %v3268 = vunpack.c.l.b16 %v2752
        %v3269 = vunpack.c.l.b16 %v2753
        %v3270 = vunpack.c.l.b16 %v2754
        %v3271 = vunpack.c.l.b16 %v2755
        %v3272 = vunpack.c.l.b16 %v2756
        %v3273 = vunpack.c.l.b16 %v2757
        %v3274 = vunpack.c.l.b16 %v2758
        %v3275 = vunpack.c.l.b16 %v2759
        %v3276 = vunpack.c.l.b16 %v2760
        %v3277 = vunpack.c.l.b16 %v2761
        %v3278 = vunpack.c.l.b16 %v2762
        %v3279 = vunpack.c.l.b16 %v2763
        %v3280 = vunpack.c.l.b16 %v2764
        %v3281 = vunpack.c.l.b16 %v2765
        %v3282 = vunpack.c.l.b16 %v2766
        %v3283 = vunpack.c.l.b16 %v2767
        %v3284 = vunpack.c.l.b16 %v2768
        %v3285 = vunpack.c.l.b16 %v2769
        %v3286 = vunpack.c.l.b16 %v2770
        %v3287 = vunpack.c.l.b16 %v2771
        %v3288 = vunpack.c.l.b16 %v2772
        %v3289 = vunpack.c.l.b16 %v2773
        %v3290 = vunpack.c.l.b16 %v2774
        %v3291 = vunpack.c.l.b16 %v2775
        %v3292 = vunpack.c.l.b16 %v2776
        %v3293 = vunpack.c.l.b16 %v2777
        %v3294 = vunpack.c.l.b16 %v2778
        %v3295 = vunpack.c.l.b16 %v2779
        %v3296 = vunpack.c.l.b16 %v2780
        %v3297 = vunpack.c.l.b16 %v2781
        %v3298 = vunpack.c.l.b16 %v2782
        %v3299 = vunpack.c.l.b16 %v2783
        %v3300 = vunpack.c.l.b16 %v2784
        %v3301 = vunpack.c.l.b16 %v2785
        %v3302 = vunpack.c.l.b16 %v2786
        %v3303 = vunpack.c.l.b16 %v2787
        %v3304 = vunpack.c.l.b16 %v2788
        %v3305 = vunpack.c.l.b16 %v2789
        %v3306 = vunpack.c.l.b16 %v2790
        %v3307 = vunpack.c.l.b16 %v2791
        %v3308 = vunpack.c.l.b16 %v2792
        %v3309 = vunpack.c.l.b16 %v2793
        %v3310 = vunpack.c.l.b16 %v2794
        %v3311 = vunpack.c.l.b16 %v2795
        %v3312 = vunpack.c.l.b16 %v2796
        %v3313 = vunpack.c.l.b16 %v2797
        %v3314 = vunpack.c.l.b16 %v2798
        %v3315 = vunpack.c.l.b16 %v2799
        %v3316 = vunpack.c.l.b16 %v2800
        %v3317 = vunpack.c.l.b16 %v2801
        %v3318 = vunpack.c.l.b16 %v2802
        %v3319 = vunpack.c.l.b16 %v2803
        %v3320 = vunpack.c.l.b16 %v2804
        %v3321 = vunpack.c.l.b16 %v2805
        %v3322 = vunpack.c.l.b16 %v2806
        %v3323 = vunpack.c.l.b16 %v2807
        %v3324 = vunpack.c.l.b16 %v2808
        %v3325 = vunpack.c.l.b16 %v2809
        %v3326 = vunpack.c.l.b16 %v2810
        %v3327 = vunpack.c.l.b16 %v2811
        %v3328 = vunpack.c.l.b16 %v2812
        %v3329 = vunpack.c.l.b16 %v2813
        %v3330 = vunpack.c.l.b16 %v2814
        %v3331 = vunpack.c.l.b16 %v2815
        %v3332 = vunpack.c.l.b16 %v2816
        %v3333 = vunpack.c.l.b16 %v2817
        %v3334 = vunpack.c.l.b16 %v2818
        %v3335 = vunpack.c.l.b16 %v2819
        %v3336 = vunpack.c.l.b16 %v2820
        %v3337 = vunpack.c.l.b16 %v2821
        %v3338 = vunpack.c.l.b16 %v2822
        %v3339 = vunpack.c.l.b16 %v2823
        %v3340 = vunpack.c.l.b16 %v2824
        %v3341 = vunpack.c.l.b16 %v2825
        %v3342 = vunpack.c.l.b16 %v2826
        %v3343 = vunpack.c.l.b16 %v2827
        %v3344 = vunpack.c.l.b16 %v2828
        %v3345 = vunpack.c.l.b16 %v2829
        %v3346 = vunpack.c.l.b16 %v2830
        %v3347 = vunpack.c.l.b16 %v2831
        %v3348 = vunpack.c.l.b16 %v2832
        %v3349 = vunpack.c.l.b16 %v2833
        %v3350 = vunpack.c.l.b16 %v2834
        %v3351 = vunpack.c.l.b16 %v2835
        %v3352 = vunpack.c.l.b16 %v2836
        %v3353 = vunpack.c.l.b16 %v2837
        %v3354 = vunpack.c.l.b16 %v2838
        %v3355 = vunpack.c.l.b16 %v2839
        %v3356 = vunpack.c.l.b16 %v2840
        %v3357 = vunpack.c.l.b16 %v2841
        %v3358 = vunpack.c.l.b16 %v2842
        %v3359 = vunpack.c.l.b16 %v2843
        %v3360 = vunpack.c.l.b16 %v2844
        %v3361 = vunpack.c.l.b16 %v2845
        %v3362 = vunpack.c.l.b16 %v2846
        %v3363 = vunpack.c.l.b16 %v2847
        %v3364 = vunpack.c.l.b16 %v2848
        %v3365 = vunpack.c.l.b16 %v2849
        %v3366 = vunpack.c.l.b16 %v2850
        %v3367 = vunpack.c.l.b16 %v2851
        %v3368 = vunpack.c.l.b16 %v2852
        %v3369 = vunpack.c.l.b16 %v2853
        %v3370 = vunpack.c.l.b16 %v2854
        %v3371 = vunpack.c.l.b16 %v2855
        %v3372 = vunpack.c.l.b16 %v2856
        %v3373 = vunpack.c.l.b16 %v2857
        %v3374 = vunpack.c.l.b16 %v2858
        %v3375 = vunpack.c.l.b16 %v2859
        %v3376 = vunpack.c.l.b16 %v2860
        %v3377 = vunpack.c.l.b16 %v2861
        %v3378 = vunpack.c.l.b16 %v2862
        %v3379 = vunpack.c.l.b16 %v2863
        %v3380 = vunpack.c.l.b16 %v2864
        %v3381 = vunpack.c.l.b16 %v2865
        %v3382 = vunpack.c.l.b16 %v2866
        %v3383 = vunpack.c.l.b16 %v2867
        %v3384 = vunpack.c.l.b16 %v2868
        %v3385 = vunpack.c.l.b16 %v2869
        %v3386 = vunpack.c.l.b16 %v2870
        %v3387 = vunpack.c.l.b16 %v2871
        %v3388 = vunpack.c.l.b16 %v2872
        %v3389 = vunpack.c.l.b16 %v2873
        %v3390 = vunpack.c.l.b16 %v2874
        %v3391 = vunpack.c.l.b16 %v2875
        %v3392 = vunpack.c.l.b16 %v2876
        %v3393 = vunpack.c.l.b16 %v2877
        %v3394 = vunpack.c.l.b16 %v2878
        %v3395 = vunpack.c.l.b16 %v2879
        %v3396 = vunpack.c.l.b16 %v2880
        %v3397 = vunpack.c.l.b16 %v2881
        %v3398 = vunpack.c.l.b16 %v2882
        %v3399 = vunpack.c.l.b16 %v2883
        %v3400 = vunpack.c.l.b16 %v2884
        %v3401 = vunpack.c.l.b16 %v2885
        %v3402 = vunpack.c.l.b16 %v2886
        %v3403 = vunpack.c.l.b16 %v2887
        %v3404 = vunpack.c.l.b16 %v2888
        %v3405 = vunpack.c.l.b16 %v2889
        %v3406 = vunpack.c.l.b16 %v2890
        %v3407 = vunpack.c.l.b16 %v2891
        %v3408 = vunpack.c.l.b16 %v2892
        %v3409 = vunpack.c.l.b16 %v2893
        %v3410 = vunpack.c.l.b16 %v2894
        %v3411 = vpack.c.b16 %v3156, %v3155
        %v3412 = vpack.c.b16 %v3158, %v3157
        %v3413 = vpack.c.b16 %v3160, %v3159
        %v3414 = vpack.c.b16 %v3162, %v3161
        %v3415 = vpack.c.b16 %v3164, %v3163
        %v3416 = vpack.c.b16 %v3166, %v3165
        %v3417 = vpack.c.b16 %v3168, %v3167
        %v3418 = vpack.c.b16 %v3170, %v3169
        %v3419 = vpack.c.b16 %v3172, %v3171
        %v3420 = vpack.c.b16 %v3174, %v3173
        %v3421 = vpack.c.b16 %v3176, %v3175
        %v3422 = vpack.c.b16 %v3178, %v3177
        %v3423 = vpack.c.b16 %v3180, %v3179
        %v3424 = vpack.c.b16 %v3182, %v3181
        %v3425 = vpack.c.b16 %v3184, %v3183
        %v3426 = vpack.c.b16 %v3186, %v3185
        %v3427 = vpack.c.b16 %v3188, %v3187
        %v3428 = vpack.c.b16 %v3190, %v3189
        %v3429 = vpack.c.b16 %v3192, %v3191
        %v3430 = vpack.c.b16 %v3194, %v3193
        %v3431 = vpack.c.b16 %v3196, %v3195
        %v3432 = vpack.c.b16 %v3198, %v3197
        %v3433 = vpack.c.b16 %v3200, %v3199
        %v3434 = vpack.c.b16 %v3202, %v3201
        %v3435 = vpack.c.b16 %v3204, %v3203
        %v3436 = vpack.c.b16 %v3206, %v3205
        %v3437 = vpack.c.b16 %v3208, %v3207
        %v3438 = vpack.c.b16 %v3210, %v3209
        %v3439 = vpack.c.b16 %v3212, %v3211
        %v3440 = vpack.c.b16 %v3214, %v3213
        %v3441 = vpack.c.b16 %v3216, %v3215
        %v3442 = vpack.c.b16 %v3218, %v3217
        %v3443 = vpack.c.b16 %v3220, %v3219
        %v3444 = vpack.c.b16 %v3222, %v3221
        %v3445 = vpack.c.b16 %v3224, %v3223
        %v3446 = vpack.c.b16 %v3226, %v3225
        %v3447 = vpack.c.b16 %v3228, %v3227
        %v3448 = vpack.c.b16 %v3230, %v3229
        %v3449 = vpack.c.b16 %v3232, %v3231
        %v3450 = vpack.c.b16 %v3234, %v3233
        %v3451 = vpack.c.b16 %v3236, %v3235
        %v3452 = vpack.c.b16 %v3238, %v3237
        %v3453 = vpack.c.b16 %v3240, %v3239
        %v3454 = vpack.c.b16 %v3242, %v3241
        %v3455 = vpack.c.b16 %v3244, %v3243
        %v3456 = vpack.c.b16 %v3246, %v3245
        %v3457 = vpack.c.b16 %v3248, %v3247
        %v3458 = vpack.c.b16 %v3250, %v3249
        %v3459 = vpack.c.b16 %v3252, %v3251
        %v3460 = vpack.c.b16 %v3254, %v3253
        %v3461 = vpack.c.b16 %v3256, %v3255
        %v3462 = vpack.c.b16 %v3258, %v3257
        %v3463 = vpack.c.b16 %v3260, %v3259
        %v3464 = vpack.c.b16 %v3262, %v3261
        %v3465 = vpack.c.b16 %v3264, %v3263
        %v3466 = vpack.c.b16 %v3266, %v3265
        %v3467 = vpack.c.b16 %v3268, %v3267
        %v3468 = vpack.c.b16 %v3270, %v3269
        %v3469 = vpack.c.b16 %v3272, %v3271
        %v3470 = vpack.c.b16 %v3274, %v3273
        %v3471 = vpack.c.b16 %v3276, %v3275
        %v3472 = vpack.c.b16 %v3278, %v3277
        %v3473 = vpack.c.b16 %v3280, %v3279
        %v3474 = vpack.c.b16 %v3282, %v3281
        %v3475 = vpack.c.b16 %v3284, %v3283
        %v3476 = vpack.c.b16 %v3286, %v3285
        %v3477 = vpack.c.b16 %v3288, %v3287
        %v3478 = vpack.c.b16 %v3290, %v3289
        %v3479 = vpack.c.b16 %v3292, %v3291
        %v3480 = vpack.c.b16 %v3294, %v3293
        %v3481 = vpack.c.b16 %v3296, %v3295
        %v3482 = vpack.c.b16 %v3298, %v3297
        %v3483 = vpack.c.b16 %v3300, %v3299
        %v3484 = vpack.c.b16 %v3302, %v3301
        %v3485 = vpack.c.b16 %v3304, %v3303
        %v3486 = vpack.c.b16 %v3306, %v3305
        %v3487 = vpack.c.b16 %v3308, %v3307
        %v3488 = vpack.c.b16 %v3310, %v3309
        %v3489 = vpack.c.b16 %v3312, %v3311
        %v3490 = vpack.c.b16 %v3314, %v3313
        %v3491 = vpack.c.b16 %v3316, %v3315
        %v3492 = vpack.c.b16 %v3318, %v3317
        %v3493 = vpack.c.b16 %v3320, %v3319
        %v3494 = vpack.c.b16 %v3322, %v3321
        %v3495 = vpack.c.b16 %v3324, %v3323
        %v3496 = vpack.c.b16 %v3326, %v3325
        %v3497 = vpack.c.b16 %v3328, %v3327
        %v3498 = vpack.c.b16 %v3330, %v3329
        %v3499 = vpack.c.b16 %v3332, %v3331
        %v3500 = vpack.c.b16 %v3334, %v3333
        %v3501 = vpack.c.b16 %v3336, %v3335
        %v3502 = vpack.c.b16 %v3338, %v3337
        %v3503 = vpack.c.b16 %v3340, %v3339
        %v3504 = vpack.c.b16 %v3342, %v3341
        %v3505 = vpack.c.b16 %v3344, %v3343
        %v3506 = vpack.c.b16 %v3346, %v3345
        %v3507 = vpack.c.b16 %v3348, %v3347
        %v3508 = vpack.c.b16 %v3350, %v3349
        %v3509 = vpack.c.b16 %v3352, %v3351
        %v3510 = vpack.c.b16 %v3354, %v3353
        %v3511 = vpack.c.b16 %v3356, %v3355
        %v3512 = vpack.c.b16 %v3358, %v3357
        %v3513 = vpack.c.b16 %v3360, %v3359
        %v3514 = vpack.c.b16 %v3362, %v3361
        %v3515 = vpack.c.b16 %v3364, %v3363
        %v3516 = vpack.c.b16 %v3366, %v3365
        %v3517 = vpack.c.b16 %v3368, %v3367
        %v3518 = vpack.c.b16 %v3370, %v3369
        %v3519 = vpack.c.b16 %v3372, %v3371
        %v3520 = vpack.c.b16 %v3374, %v3373
        %v3521 = vpack.c.b16 %v3376, %v3375
        %v3522 = vpack.c.b16 %v3378, %v3377
        %v3523 = vpack.c.b16 %v3380, %v3379
        %v3524 = vpack.c.b16 %v3382, %v3381
        %v3525 = vpack.c.b16 %v3384, %v3383
        %v3526 = vpack.c.b16 %v3386, %v3385
        %v3527 = vpack.c.b16 %v3388, %v3387
        %v3528 = vpack.c.b16 %v3390, %v3389
        %v3529 = vpack.c.b16 %v3392, %v3391
        %v3530 = vpack.c.b16 %v3394, %v3393
        %v3531 = vpack.c.b16 %v3396, %v3395
        %v3532 = vpack.c.b16 %v3398, %v3397
        %v3533 = vpack.c.b16 %v3400, %v3399
        %v3534 = vpack.c.b16 %v3402, %v3401
        %v3535 = vpack.c.b16 %v3404, %v3403
        %v3536 = vpack.c.b16 %v3406, %v3405
        %v3537 = vpack.c.b16 %v3408, %v3407
        %v3538 = vpack.c.b16 %v3410, %v3409
        %3667 = vmatprep.subr.bf16.mxu0 0
        %3668 = vmatpush1.bf16.msra.mxu0 %v3418
        %3669 = vmatprep.subr.bf16.mxu0 0
        %3670 = vmatpush1.bf16.msra.mxu0 %v3417
        %3671 = vmatprep.subr.bf16.mxu0 0
        %3672 = vmatpush1.bf16.msra.mxu0 %v3416
        %3673 = vmatprep.subr.bf16.mxu0 0
        %3674 = vmatpush1.bf16.msra.mxu0 %v3415
        %3675 = vmatprep.subr.bf16.mxu0 0
        %3676 = vmatpush1.bf16.msra.mxu0 %v3414
        %3677 = vmatprep.subr.bf16.mxu0 0
        %3678 = vmatpush1.bf16.msra.mxu0 %v3413
        %3679 = vmatprep.subr.bf16.mxu0 0
        %3680 = vmatpush1.bf16.msra.mxu0 %v3412
        %3681 = vmatprep.subr.bf16.mxu0 0
        %3682 = vmatpush1.bf16.msra.mxu0 %v3411
        %3683 = vmatprep.subr.bf16.mxu0 0
        %3684 = vmatpush2.bf16.msra.mxu0 %v3426
        %3685 = vmatprep.subr.bf16.mxu0 0
        %3686 = vmatpush2.bf16.msra.mxu0 %v3425
        %3687 = vmatprep.subr.bf16.mxu0 0
        %3688 = vmatpush2.bf16.msra.mxu0 %v3424
        %3689 = vmatprep.subr.bf16.mxu0 0
        %3690 = vmatpush2.bf16.msra.mxu0 %v3423
        %3691 = vmatprep.subr.bf16.mxu0 0
        %3692 = vmatpush2.bf16.msra.mxu0 %v3422
        %3693 = vmatprep.subr.bf16.mxu0 0
        %3694 = vmatpush2.bf16.msra.mxu0 %v3421
        %3695 = vmatprep.subr.bf16.mxu0 0
        %3696 = vmatpush2.bf16.msra.mxu0 %v3420
        %3697 = vmatprep.subr.bf16.mxu0 0
        %3698 = vmatpush2.bf16.msra.mxu0 %v3419
        %3699 = vmatprep.mubr.bf16.mxu0 %v2624
        %3700 = vmatmul.mubr.bf16.gmra.mxu0 %v2623
        %v3701 = vpop.f32.mrf.mxu0
        %v3702 = vadd.f32 %v2898, %v3701
        %v3703 = vpop.f32.mrf.mxu0
        %v3704 = vpop.f32.mrf.mxu0
        %v3705 = vadd.f32 %v2898, %v3704
        %v3706 = vpop.f32.mrf.mxu0
        %3707 = vdwg.mxu0
        %3708 = vmatprep.subr.bf16.mxu0 0
        %3709 = vmatpush1.bf16.msra.mxu0 %v3434
        %3710 = vmatprep.subr.bf16.mxu0 0
        %3711 = vmatpush1.bf16.msra.mxu0 %v3433
        %3712 = vmatprep.subr.bf16.mxu0 0
        %3713 = vmatpush1.bf16.msra.mxu0 %v3432
        %3714 = vmatprep.subr.bf16.mxu0 0
        %3715 = vmatpush1.bf16.msra.mxu0 %v3431
        %3716 = vmatprep.subr.bf16.mxu0 0
        %3717 = vmatpush1.bf16.msra.mxu0 %v3430
        %3718 = vmatprep.subr.bf16.mxu0 0
        %3719 = vmatpush1.bf16.msra.mxu0 %v3429
        %3720 = vmatprep.subr.bf16.mxu0 0
        %3721 = vmatpush1.bf16.msra.mxu0 %v3428
        %3722 = vmatprep.subr.bf16.mxu0 0
        %3723 = vmatpush1.bf16.msra.mxu0 %v3427
        %3724 = vmatprep.subr.bf16.mxu0 0
        %3725 = vmatpush2.bf16.msra.mxu0 %v3442
        %3726 = vmatprep.subr.bf16.mxu0 0
        %3727 = vmatpush2.bf16.msra.mxu0 %v3441
        %3728 = vmatprep.subr.bf16.mxu0 0
        %3729 = vmatpush2.bf16.msra.mxu0 %v3440
        %3730 = vmatprep.subr.bf16.mxu0 0
        %3731 = vmatpush2.bf16.msra.mxu0 %v3439
        %3732 = vmatprep.subr.bf16.mxu0 0
        %3733 = vmatpush2.bf16.msra.mxu0 %v3438
        %3734 = vmatprep.subr.bf16.mxu0 0
        %3735 = vmatpush2.bf16.msra.mxu0 %v3437
        %3736 = vmatprep.subr.bf16.mxu0 0
        %3737 = vmatpush2.bf16.msra.mxu0 %v3436
        %3738 = vmatprep.subr.bf16.mxu0 0
        %3739 = vmatpush2.bf16.msra.mxu0 %v3435
        %3740 = vmatprep.mubr.bf16.mxu0 %v2626
        %3741 = vmatmul.mubr.bf16.gmra.mxu0 %v2625
        %v3742 = vpop.f32.mrf.mxu0
        %v3743 = vadd.f32 %v3702, %v3742
        %v3744 = vpop.f32.mrf.mxu0
        %v3745 = vpop.f32.mrf.mxu0
        %v3746 = vadd.f32 %v3705, %v3745
        %v3747 = vpop.f32.mrf.mxu0
        %3748 = vdwg.mxu0
        %3749 = vmatprep.subr.bf16.mxu0 0
        %3750 = vmatpush1.bf16.msra.mxu0 %v3450
        %3751 = vmatprep.subr.bf16.mxu0 0
        %3752 = vmatpush1.bf16.msra.mxu0 %v3449
        %3753 = vmatprep.subr.bf16.mxu0 0
        %3754 = vmatpush1.bf16.msra.mxu0 %v3448
        %3755 = vmatprep.subr.bf16.mxu0 0
        %3756 = vmatpush1.bf16.msra.mxu0 %v3447
        %3757 = vmatprep.subr.bf16.mxu0 0
        %3758 = vmatpush1.bf16.msra.mxu0 %v3446
        %3759 = vmatprep.subr.bf16.mxu0 0
        %3760 = vmatpush1.bf16.msra.mxu0 %v3445
        %3761 = vmatprep.subr.bf16.mxu0 0
        %3762 = vmatpush1.bf16.msra.mxu0 %v3444
        %3763 = vmatprep.subr.bf16.mxu0 0
        %3764 = vmatpush1.bf16.msra.mxu0 %v3443
        %3765 = vmatprep.subr.bf16.mxu0 0
        %3766 = vmatpush2.bf16.msra.mxu0 %v3458
        %3767 = vmatprep.subr.bf16.mxu0 0
        %3768 = vmatpush2.bf16.msra.mxu0 %v3457
        %3769 = vmatprep.subr.bf16.mxu0 0
        %3770 = vmatpush2.bf16.msra.mxu0 %v3456
        %3771 = vmatprep.subr.bf16.mxu0 0
        %3772 = vmatpush2.bf16.msra.mxu0 %v3455
        %3773 = vmatprep.subr.bf16.mxu0 0
        %3774 = vmatpush2.bf16.msra.mxu0 %v3454
        %3775 = vmatprep.subr.bf16.mxu0 0
        %3776 = vmatpush2.bf16.msra.mxu0 %v3453
        %3777 = vmatprep.subr.bf16.mxu0 0
        %3778 = vmatpush2.bf16.msra.mxu0 %v3452
        %3779 = vmatprep.subr.bf16.mxu0 0
        %3780 = vmatpush2.bf16.msra.mxu0 %v3451
        %3781 = vmatprep.mubr.bf16.mxu0 %v2628
        %3782 = vmatmul.mubr.bf16.gmra.mxu0 %v2627
        %v3783 = vpop.f32.mrf.mxu0
        %v3784 = vadd.f32 %v3743, %v3783
        %v3785 = vpop.f32.mrf.mxu0
        %v3786 = vpop.f32.mrf.mxu0
        %v3787 = vadd.f32 %v3746, %v3786
        %v3788 = vpop.f32.mrf.mxu0
        %3789 = vdwg.mxu0
        %3790 = vmatprep.subr.bf16.mxu0 0
        %3791 = vmatpush1.bf16.msra.mxu0 %v3466
        %3792 = vmatprep.subr.bf16.mxu0 0
        %3793 = vmatpush1.bf16.msra.mxu0 %v3465
        %3794 = vmatprep.subr.bf16.mxu0 0
        %3795 = vmatpush1.bf16.msra.mxu0 %v3464
        %3796 = vmatprep.subr.bf16.mxu0 0
        %3797 = vmatpush1.bf16.msra.mxu0 %v3463
        %3798 = vmatprep.subr.bf16.mxu0 0
        %3799 = vmatpush1.bf16.msra.mxu0 %v3462
        %3800 = vmatprep.subr.bf16.mxu0 0
        %3801 = vmatpush1.bf16.msra.mxu0 %v3461
        %3802 = vmatprep.subr.bf16.mxu0 0
        %3803 = vmatpush1.bf16.msra.mxu0 %v3460
        %3804 = vmatprep.subr.bf16.mxu0 0
        %3805 = vmatpush1.bf16.msra.mxu0 %v3459
        %3806 = vmatprep.subr.bf16.mxu0 0
        %3807 = vmatpush2.bf16.msra.mxu0 %v3474
        %3808 = vmatprep.subr.bf16.mxu0 0
        %3809 = vmatpush2.bf16.msra.mxu0 %v3473
        %3810 = vmatprep.subr.bf16.mxu0 0
        %3811 = vmatpush2.bf16.msra.mxu0 %v3472
        %3812 = vmatprep.subr.bf16.mxu0 0
        %3813 = vmatpush2.bf16.msra.mxu0 %v3471
        %3814 = vmatprep.subr.bf16.mxu0 0
        %3815 = vmatpush2.bf16.msra.mxu0 %v3470
        %3816 = vmatprep.subr.bf16.mxu0 0
        %3817 = vmatpush2.bf16.msra.mxu0 %v3469
        %3818 = vmatprep.subr.bf16.mxu0 0
        %3819 = vmatpush2.bf16.msra.mxu0 %v3468
        %3820 = vmatprep.subr.bf16.mxu0 0
        %3821 = vmatpush2.bf16.msra.mxu0 %v3467
        %3822 = vmatprep.mubr.bf16.mxu0 %v2630
        %3823 = vmatmul.mubr.bf16.gmra.mxu0 %v2629
        %v3824 = vpop.f32.mrf.mxu0
        %v3825 = vadd.f32 %v3784, %v3824
        %v3826 = vpop.f32.mrf.mxu0
        %v3827 = vpop.f32.mrf.mxu0
        %v3828 = vadd.f32 %v3787, %v3827
        %v3829 = vpop.f32.mrf.mxu0
        %3830 = vdwg.mxu0
        %3831 = vmatprep.subr.bf16.mxu0 0
        %3832 = vmatpush1.bf16.msra.mxu0 %v3482
        %3833 = vmatprep.subr.bf16.mxu0 0
        %3834 = vmatpush1.bf16.msra.mxu0 %v3481
        %3835 = vmatprep.subr.bf16.mxu0 0
        %3836 = vmatpush1.bf16.msra.mxu0 %v3480
        %3837 = vmatprep.subr.bf16.mxu0 0
        %3838 = vmatpush1.bf16.msra.mxu0 %v3479
        %3839 = vmatprep.subr.bf16.mxu0 0
        %3840 = vmatpush1.bf16.msra.mxu0 %v3478
        %3841 = vmatprep.subr.bf16.mxu0 0
        %3842 = vmatpush1.bf16.msra.mxu0 %v3477
        %3843 = vmatprep.subr.bf16.mxu0 0
        %3844 = vmatpush1.bf16.msra.mxu0 %v3476
        %3845 = vmatprep.subr.bf16.mxu0 0
        %3846 = vmatpush1.bf16.msra.mxu0 %v3475
        %3847 = vmatprep.subr.bf16.mxu0 0
        %3848 = vmatpush2.bf16.msra.mxu0 %v3490
        %3849 = vmatprep.subr.bf16.mxu0 0
        %3850 = vmatpush2.bf16.msra.mxu0 %v3489
        %3851 = vmatprep.subr.bf16.mxu0 0
        %3852 = vmatpush2.bf16.msra.mxu0 %v3488
        %3853 = vmatprep.subr.bf16.mxu0 0
        %3854 = vmatpush2.bf16.msra.mxu0 %v3487
        %3855 = vmatprep.subr.bf16.mxu0 0
        %3856 = vmatpush2.bf16.msra.mxu0 %v3486
        %3857 = vmatprep.subr.bf16.mxu0 0
        %3858 = vmatpush2.bf16.msra.mxu0 %v3485
        %3859 = vmatprep.subr.bf16.mxu0 0
        %3860 = vmatpush2.bf16.msra.mxu0 %v3484
        %3861 = vmatprep.subr.bf16.mxu0 0
        %3862 = vmatpush2.bf16.msra.mxu0 %v3483
        %3863 = vmatprep.mubr.bf16.mxu0 %v2632
        %3864 = vmatmul.mubr.bf16.gmra.mxu0 %v2631
        %v3865 = vpop.f32.mrf.mxu0
        %v3866 = vadd.f32 %v3825, %v3865
        %v3867 = vpop.f32.mrf.mxu0
        %v3868 = vpop.f32.mrf.mxu0
        %v3869 = vadd.f32 %v3828, %v3868
        %v3870 = vpop.f32.mrf.mxu0
        %3871 = vdwg.mxu0
        %3872 = vmatprep.subr.bf16.mxu0 0
        %3873 = vmatpush1.bf16.msra.mxu0 %v3498
        %3874 = vmatprep.subr.bf16.mxu0 0
        %3875 = vmatpush1.bf16.msra.mxu0 %v3497
        %3876 = vmatprep.subr.bf16.mxu0 0
        %3877 = vmatpush1.bf16.msra.mxu0 %v3496
        %3878 = vmatprep.subr.bf16.mxu0 0
        %3879 = vmatpush1.bf16.msra.mxu0 %v3495
        %3880 = vmatprep.subr.bf16.mxu0 0
        %3881 = vmatpush1.bf16.msra.mxu0 %v3494
        %3882 = vmatprep.subr.bf16.mxu0 0
        %3883 = vmatpush1.bf16.msra.mxu0 %v3493
        %3884 = vmatprep.subr.bf16.mxu0 0
        %3885 = vmatpush1.bf16.msra.mxu0 %v3492
        %3886 = vmatprep.subr.bf16.mxu0 0
        %3887 = vmatpush1.bf16.msra.mxu0 %v3491
        %3888 = vmatprep.subr.bf16.mxu0 0
        %3889 = vmatpush2.bf16.msra.mxu0 %v3506
        %3890 = vmatprep.subr.bf16.mxu0 0
        %3891 = vmatpush2.bf16.msra.mxu0 %v3505
        %3892 = vmatprep.subr.bf16.mxu0 0
        %3893 = vmatpush2.bf16.msra.mxu0 %v3504
        %3894 = vmatprep.subr.bf16.mxu0 0
        %3895 = vmatpush2.bf16.msra.mxu0 %v3503
        %3896 = vmatprep.subr.bf16.mxu0 0
        %3897 = vmatpush2.bf16.msra.mxu0 %v3502
        %3898 = vmatprep.subr.bf16.mxu0 0
        %3899 = vmatpush2.bf16.msra.mxu0 %v3501
        %3900 = vmatprep.subr.bf16.mxu0 0
        %3901 = vmatpush2.bf16.msra.mxu0 %v3500
        %3902 = vmatprep.subr.bf16.mxu0 0
        %3903 = vmatpush2.bf16.msra.mxu0 %v3499
        %3904 = vmatprep.mubr.bf16.mxu0 %v2634
        %3905 = vmatmul.mubr.bf16.gmra.mxu0 %v2633
        %v3906 = vpop.f32.mrf.mxu0
        %v3907 = vadd.f32 %v3866, %v3906
        %v3908 = vpop.f32.mrf.mxu0
        %v3909 = vpop.f32.mrf.mxu0
        %v3910 = vadd.f32 %v3869, %v3909
        %v3911 = vpop.f32.mrf.mxu0
        %3912 = vdwg.mxu0
        %3913 = vmatprep.subr.bf16.mxu0 0
        %3914 = vmatpush1.bf16.msra.mxu0 %v3514
        %3915 = vmatprep.subr.bf16.mxu0 0
        %3916 = vmatpush1.bf16.msra.mxu0 %v3513
        %3917 = vmatprep.subr.bf16.mxu0 0
        %3918 = vmatpush1.bf16.msra.mxu0 %v3512
        %3919 = vmatprep.subr.bf16.mxu0 0
        %3920 = vmatpush1.bf16.msra.mxu0 %v3511
        %3921 = vmatprep.subr.bf16.mxu0 0
        %3922 = vmatpush1.bf16.msra.mxu0 %v3510
        %3923 = vmatprep.subr.bf16.mxu0 0
        %3924 = vmatpush1.bf16.msra.mxu0 %v3509
        %3925 = vmatprep.subr.bf16.mxu0 0
        %3926 = vmatpush1.bf16.msra.mxu0 %v3508
        %3927 = vmatprep.subr.bf16.mxu0 0
        %3928 = vmatpush1.bf16.msra.mxu0 %v3507
        %3929 = vmatprep.subr.bf16.mxu0 0
        %3930 = vmatpush2.bf16.msra.mxu0 %v3522
        %3931 = vmatprep.subr.bf16.mxu0 0
        %3932 = vmatpush2.bf16.msra.mxu0 %v3521
        %3933 = vmatprep.subr.bf16.mxu0 0
        %3934 = vmatpush2.bf16.msra.mxu0 %v3520
        %3935 = vmatprep.subr.bf16.mxu0 0
        %3936 = vmatpush2.bf16.msra.mxu0 %v3519
        %3937 = vmatprep.subr.bf16.mxu0 0
        %3938 = vmatpush2.bf16.msra.mxu0 %v3518
        %3939 = vmatprep.subr.bf16.mxu0 0
        %3940 = vmatpush2.bf16.msra.mxu0 %v3517
        %3941 = vmatprep.subr.bf16.mxu0 0
        %3942 = vmatpush2.bf16.msra.mxu0 %v3516
        %3943 = vmatprep.subr.bf16.mxu0 0
        %3944 = vmatpush2.bf16.msra.mxu0 %v3515
        %3945 = vmatprep.mubr.bf16.mxu0 %v2636
        %3946 = vmatmul.mubr.bf16.gmra.mxu0 %v2635
        %v3947 = vpop.f32.mrf.mxu0
        %v3948 = vadd.f32 %v3907, %v3947
        %v3949 = vpop.f32.mrf.mxu0
        %v3950 = vpop.f32.mrf.mxu0
        %v3951 = vadd.f32 %v3910, %v3950
        %v3952 = vpop.f32.mrf.mxu0
        %3953 = vdwg.mxu0
        %3954 = vmatprep.subr.bf16.mxu0 0
        %3955 = vmatpush1.bf16.msra.mxu0 %v3530
        %3956 = vmatprep.subr.bf16.mxu0 0
        %3957 = vmatpush1.bf16.msra.mxu0 %v3529
        %3958 = vmatprep.subr.bf16.mxu0 0
        %3959 = vmatpush1.bf16.msra.mxu0 %v3528
        %3960 = vmatprep.subr.bf16.mxu0 0
        %3961 = vmatpush1.bf16.msra.mxu0 %v3527
        %3962 = vmatprep.subr.bf16.mxu0 0
        %3963 = vmatpush1.bf16.msra.mxu0 %v3526
        %3964 = vmatprep.subr.bf16.mxu0 0
        %3965 = vmatpush1.bf16.msra.mxu0 %v3525
        %3966 = vmatprep.subr.bf16.mxu0 0
        %3967 = vmatpush1.bf16.msra.mxu0 %v3524
        %3968 = vmatprep.subr.bf16.mxu0 0
        %3969 = vmatpush1.bf16.msra.mxu0 %v3523
        %3970 = vmatprep.subr.bf16.mxu0 0
        %3971 = vmatpush2.bf16.msra.mxu0 %v3538
        %3972 = vmatprep.subr.bf16.mxu0 0
        %3973 = vmatpush2.bf16.msra.mxu0 %v3537
        %3974 = vmatprep.subr.bf16.mxu0 0
        %3975 = vmatpush2.bf16.msra.mxu0 %v3536
        %3976 = vmatprep.subr.bf16.mxu0 0
        %3977 = vmatpush2.bf16.msra.mxu0 %v3535
        %3978 = vmatprep.subr.bf16.mxu0 0
        %3979 = vmatpush2.bf16.msra.mxu0 %v3534
        %3980 = vmatprep.subr.bf16.mxu0 0
        %3981 = vmatpush2.bf16.msra.mxu0 %v3533
        %3982 = vmatprep.subr.bf16.mxu0 0
        %3983 = vmatpush2.bf16.msra.mxu0 %v3532
        %3984 = vmatprep.subr.bf16.mxu0 0
        %3985 = vmatpush2.bf16.msra.mxu0 %v3531
        %3986 = vmatprep.mubr.bf16.mxu0 %v2638
        %3987 = vmatmul.mubr.bf16.gmra.mxu0 %v2637
        %v3988 = vpop.f32.mrf.mxu0
        %v3989 = vadd.f32 %v3948, %v3988
        %v3990 = vpop.f32.mrf.mxu0
        %v3991 = vpop.f32.mrf.mxu0
        %v3992 = vadd.f32 %v3951, %v3991
        %v3993 = vpop.f32.mrf.mxu0
        %3994 = vdwg.mxu0
        %v3995 = vadd.f32 %v1392, %v3989
        %v3996 = vadd.f32 %v1393, %v3992
        %3997 = vadd.xlane.f32.xlu0 %v3995
        %v3998 = vpop.xlane.xlu0 %3997
        %3999 = vadd.xlane.f32.xlu0 %v3996
        %v4000 = vpop.xlane.xlu0 %3999
        %v4001 = vmul.f32 %v3998, %v1363
        %v4002 = vmul.f32 %v4000, %v1363
        %v4003 = vsub.f32 %v3995, %v4001
        %v4004 = vsub.f32 %v3996, %v4002
        %v4005 = vmul.f32 %v4003, %v4003
        %v4006 = vmul.f32 %v4004, %v4004
        %4007 = vadd.xlane.f32.xlu0 %v4005
        %v4008 = vpop.xlane.xlu0 %4007
        %4009 = vadd.xlane.f32.xlu0 %v4006
        %v4010 = vpop.xlane.xlu0 %4009
        %v4011 = vmul.f32 %v4008, %v1363
        %v4012 = vmul.f32 %v4010, %v1363
        %v4013 = vadd.f32 %v4011, 1e-05
        %v4014 = vadd.f32 %v4012, 1e-05
        %v4015 = vrsqrt.pop %v4013
        %v4016 = vrsqrt.pop %v4014
        %v4017 = vmul.f32 %v4003, %v4015
        %v4018 = vmul.f32 %v4004, %v4016
        %v4019 = vlaneseq
        %v4020 = vshrl.u32 %v4019, 7
        %v4021 = vsub.s32 7, %v4020
        %v4022 = vrot.slane %v720, %v4021
        %v4023 = vmul.f32 %v4017, %v4022
        %v4024 = vmul.f32 %v4018, %v4022
        %v4025 = vlaneseq
        %v4026 = vshrl.u32 %v4025, 7
        %v4027 = vsub.s32 0, %v4026
        %v4028 = vrot.slane %v721, %v4027
        %v4029 = vadd.f32 %v4023, %v4028
        %v4030 = vadd.f32 %v4024, %v4028
        %4031 = vst [vmem:[#allocation2] sm:$0xff] %v4029
        %4032 = vst [vmem:[#allocation2 + $0x8] sm:$0xff] %v4030
        %p4033 = scmp.eq.s32.totalorder %s33, 2
        // Predicated region
        $region97: #{tpu_custom_call.1} parent=59 // pred_check
          %p4034 = pneg %p4033
        $region98: #{tpu_custom_call.1} parent=59 // pred_check_branch
          %4036 = sbr.rel (%p4034) target = $region100
        $region99: #{tpu_custom_call.1} parent=59 // pred_region
          %v4037 = vpack.c.bf16 %v4030, %v4029
          %v4038 = vld [vmem:[#allocation14] sm:$0xff]
          %v4039 = vld [vmem:[#allocation14 + $0x8] sm:$0xff]
          %v4040 = vld [vmem:[#allocation14 + $0x10] sm:$0xff]
          %v4041 = vld [vmem:[#allocation14 + $0x18] sm:$0xff]
          %v4042 = vld [vmem:[#allocation14 + $0x20] sm:$0xff]
          %v4043 = vld [vmem:[#allocation14 + $0x28] sm:$0xff]
          %v4044 = vld [vmem:[#allocation14 + $0x30] sm:$0xff]
          %v4045 = vld [vmem:[#allocation14 + $0x38] sm:$0xff]
          %v4046 = vld [vmem:[#allocation14 + $0x40] sm:$0xff]
          %v4047 = vld [vmem:[#allocation14 + $0x48] sm:$0xff]
          %v4048 = vld [vmem:[#allocation14 + $0x50] sm:$0xff]
          %v4049 = vld [vmem:[#allocation14 + $0x58] sm:$0xff]
          %v4050 = vld [vmem:[#allocation14 + $0x60] sm:$0xff]
          %v4051 = vld [vmem:[#allocation14 + $0x68] sm:$0xff]
          %v4052 = vld [vmem:[#allocation14 + $0x70] sm:$0xff]
          %v4053 = vld [vmem:[#allocation14 + $0x78] sm:$0xff]
          %v4054 = vld [vmem:[#allocation15] sm:$0x3]
          %v4056 = vlaneseq
          %v4057 = vshrl.u32 %v4056, 7
          %v4058 = vsub.s32 0, %v4057
          %v4059 = vrot.slane %v4054, %v4058
          %v4060 = vlaneseq
          %v4061 = vshrl.u32 %v4060, 7
          %v4062 = vsub.s32 1, %v4061
          %v4063 = vrot.slane %v4054, %v4062
          %v4082 = vunpack.c.l.b16 %v4038
          %v4083 = vunpack.c.h.b16 %v4038
          %v4084 = vunpack.c.l.b16 %v4039
          %v4085 = vunpack.c.h.b16 %v4039
          %v4086 = vunpack.c.l.b16 %v4040
          %v4087 = vunpack.c.h.b16 %v4040
          %v4088 = vunpack.c.l.b16 %v4041
          %v4089 = vunpack.c.h.b16 %v4041
          %v4090 = vunpack.c.l.b16 %v4042
          %v4091 = vunpack.c.h.b16 %v4042
          %v4092 = vunpack.c.l.b16 %v4043
          %v4093 = vunpack.c.h.b16 %v4043
          %v4094 = vunpack.c.l.b16 %v4044
          %v4095 = vunpack.c.h.b16 %v4044
          %v4096 = vunpack.c.l.b16 %v4045
          %v4097 = vunpack.c.h.b16 %v4045
          %v4098 = vunpack.c.l.b16 %v4046
          %v4099 = vunpack.c.h.b16 %v4046
          %v4100 = vunpack.c.l.b16 %v4047
          %v4101 = vunpack.c.h.b16 %v4047
          %v4102 = vunpack.c.l.b16 %v4048
          %v4103 = vunpack.c.h.b16 %v4048
          %v4104 = vunpack.c.l.b16 %v4049
          %v4105 = vunpack.c.h.b16 %v4049
          %v4106 = vunpack.c.l.b16 %v4050
          %v4107 = vunpack.c.h.b16 %v4050
          %v4108 = vunpack.c.l.b16 %v4051
          %v4109 = vunpack.c.h.b16 %v4051
          %v4110 = vunpack.c.l.b16 %v4052
          %v4111 = vunpack.c.h.b16 %v4052
          %v4112 = vunpack.c.l.b16 %v4053
          %v4113 = vunpack.c.h.b16 %v4053
          %v4114 = vpack.c.b16 %v4084, %v4082
          %v4115 = vpack.c.b16 %v4085, %v4083
          %v4116 = vpack.c.b16 %v4088, %v4086
          %v4117 = vpack.c.b16 %v4089, %v4087
          %v4118 = vpack.c.b16 %v4092, %v4090
          %v4119 = vpack.c.b16 %v4093, %v4091
          %v4120 = vpack.c.b16 %v4096, %v4094
          %v4121 = vpack.c.b16 %v4097, %v4095
          %v4122 = vpack.c.b16 %v4100, %v4098
          %v4123 = vpack.c.b16 %v4101, %v4099
          %v4124 = vpack.c.b16 %v4104, %v4102
          %v4125 = vpack.c.b16 %v4105, %v4103
          %v4126 = vpack.c.b16 %v4108, %v4106
          %v4127 = vpack.c.b16 %v4109, %v4107
          %v4128 = vpack.c.b16 %v4112, %v4110
          %v4129 = vpack.c.b16 %v4113, %v4111
          %4146 = vmatprep.subr.bf16.mxu0 %v4129
          %4147 = vmatpush1.bf16.msra.mxu0 %v4128
          %4148 = vmatprep.subr.bf16.mxu0 %v4127
          %4149 = vmatpush1.bf16.msra.mxu0 %v4126
          %4150 = vmatprep.subr.bf16.mxu0 %v4125
          %4151 = vmatpush1.bf16.msra.mxu0 %v4124
          %4152 = vmatprep.subr.bf16.mxu0 %v4123
          %4153 = vmatpush1.bf16.msra.mxu0 %v4122
          %4154 = vmatprep.subr.bf16.mxu0 %v4121
          %4155 = vmatpush1.bf16.msra.mxu0 %v4120
          %4156 = vmatprep.subr.bf16.mxu0 %v4119
          %4157 = vmatpush1.bf16.msra.mxu0 %v4118
          %4158 = vmatprep.subr.bf16.mxu0 %v4117
          %4159 = vmatpush1.bf16.msra.mxu0 %v4116
          %4160 = vmatprep.subr.bf16.mxu0 %v4115
          %4161 = vmatpush1.bf16.msra.mxu0 %v4114
          %4162 = vmatprep.subr.bf16.mxu0 0
          %4163 = vmatpush2.bf16.msra.mxu0 0
          %4164 = vmatprep.subr.bf16.mxu0 0
          %4165 = vmatpush2.bf16.msra.mxu0 0
          %4166 = vmatprep.subr.bf16.mxu0 0
          %4167 = vmatpush2.bf16.msra.mxu0 0
          %4168 = vmatprep.subr.bf16.mxu0 0
          %4169 = vmatpush2.bf16.msra.mxu0 0
          %4170 = vmatprep.subr.bf16.mxu0 0
          %4171 = vmatpush2.bf16.msra.mxu0 0
          %4172 = vmatprep.subr.bf16.mxu0 0
          %4173 = vmatpush2.bf16.msra.mxu0 0
          %4174 = vmatprep.subr.bf16.mxu0 0
          %4175 = vmatpush2.bf16.msra.mxu0 0
          %4176 = vmatprep.subr.bf16.mxu0 0
          %4177 = vmatpush2.bf16.msra.mxu0 0
          %4178 = vmatprep.mubr.bf16.mxu0 0
          %4179 = vmatmul.mubr.bf16.gmra.mxu0 %v4037
          %v4180 = vpop.f32.mrf.mxu0
          %v4181 = vadd.f32 %v4059, %v4180
          %v4182 = vpop.f32.mrf.mxu0
          %v4183 = vadd.f32 %v4063, %v4182
          %v4184 = vpop.f32.mrf.mxu0
          %v4185 = vadd.f32 %v4059, %v4184
          %v4186 = vpop.f32.mrf.mxu0
          %v4187 = vadd.f32 %v4063, %v4186
          %4188 = vdwg.mxu0
          %4189 = vst [vmem:[#allocation17] sm:$0xff] %v4181
          %4190 = vst [vmem:[#allocation17 + $0x8] sm:$0xff] %v4183
          %4191 = vst [vmem:[#allocation17 + $0x10] sm:$0xff] %v4185
          %4192 = vst [vmem:[#allocation17 + $0x18] sm:$0xff] %v4187
        $region100: #{tpu_custom_call.1} parent=59 // pred_fallthru
          _
        // Predicated region
        $region101: #{tpu_custom_call.1} parent=59 // pred_check
          %p4193 = pneg %p286
        $region102: #{tpu_custom_call.1} parent=59 // pred_check_branch
          %4195 = sbr.rel (%p4193) target = $region104
        $region103: #{tpu_custom_call.1} parent=59 // pred_region
          %s4197 = ssub.s32 512, 512
          %4198 = vsyncadd [#allocation5], %s4197
          %s4199 = sshll.u32 [#allocation17], 4
          %s4200 = int_to_ptr.vmem [resolvable:$true] %s4199
          %4205 = dma.vmem_to_hbm [thread:$0]  %s4200, 512, %s10, [#allocation5], 256, 256, 16
        $region104: #{tpu_custom_call.1} parent=59 // pred_fallthru
          _
        // Predicated region
        $region105: #{tpu_custom_call.1} parent=59 // pred_check
          %p4206 = pneg %p286
        $region106: #{tpu_custom_call.1} parent=59 // pred_check_branch
          %4208 = sbr.rel (%p4206) target = $region108
        $region107: #{tpu_custom_call.1} parent=59 // pred_region
          %4209 = dma.done [#allocation5], 512
        $region108: #{tpu_custom_call.1} parent=59 // pred_fallthru
          _
      $region60: #{tpu_custom_call.1} parent=5 // pred_fallthru
        _
      %p4210 = scmp.le.s32.totalorder 2, %s28
      // Predicated region
      $region109: #{tpu_custom_call.1} parent=5 // pred_check
        %p4211 = pneg %p4210
      $region110: #{tpu_custom_call.1} parent=5 // pred_check_branch
        %4213 = sbr.rel (%p4211) target = $region112
      $region111: #{tpu_custom_call.1} parent=5 // pred_region
        %s4214 = ssub.s32 %s28, 2
      $region112: #{tpu_custom_call.1} parent=5 // pred_fallthru
        _
    $region6: #{tpu_custom_call.1} parent=1 // loop_footer
      %s32 = sadd.s32 1, %s28
    $region7: #{tpu_custom_call.1} parent=1 // loop_footer_branch
      %27 = sbr.rel target = $region3
    $region8: #{tpu_custom_call.1} parent=1 // loop_exit
      _
    %4215 = vsyncpa [#allocation4], 1
    %s4216 = scalar_lea.sflag [#allocation4], 1
    %4217 = vsyncpa %s4216, 1
    %4218 = vsyncpa [#allocation7], 1
    %s4219 = scalar_lea.sflag [#allocation7], 1
    %4220 = vsyncpa %s4219, 1
    %4221 = vsyncpa [#allocation10], 1
    %s4222 = scalar_lea.sflag [#allocation10], 1
    %4223 = vsyncpa %s4222, 1
    %4224 = vsyncpa [#allocation13], 1
    %s4225 = scalar_lea.sflag [#allocation13], 1
    %4226 = vsyncpa %s4225, 1
    %4227 = vsyncpa [#allocation16], 1
    %4228 = vsyncpa [#allocation5], 1
    %s4229 = scalar_lea.sflag [#allocation5], 1
    %4230 = vsyncpa %s4229, 1

</llo_original>
